<compile_context>
chip_gen: v7x
topology: tpu7x:2x2x1
jax: 0.10.0
libtpu: 0.0.40
codegen_flags: <defaults>
</compile_context>

<pallas_src>
import jax
import jax.numpy as jnp
from jax.experimental import pallas as pl
from jax.experimental.pallas import tpu as pltpu

F_IN = 20
N_NODES = 484


def _round_up(x, m):
    return ((x + m - 1) // m) * m


def emr_encoder_kernel(x_ref, w_ref, b_ref, o_ref):
    # x_ref: (TB, F_IN)      float32
    # w_ref: (F_IN, N_OUT)   float32   fused weight, N_OUT = 484*E
    # b_ref: (1, N_OUT)      float32   fused bias
    # o_ref: (TB, N_OUT)     float32   lane-dense final layout
    o_ref[...] = (
        jnp.dot(x_ref[...], w_ref[...], preferred_element_type=jnp.float32)
        + b_ref[...]
    )


def make_fused_params(weight, bias, embeddings):
    """Fold the embedding broadcast into the Linear parameters (done once).

    weight:     (484, 20)  nn.Linear.weight
    bias:       (484,)     nn.Linear.bias
    embeddings: (484, E)

    Returns w_big (20, 484*E), b_big (1, 484*E) with
      w_big[k, n*E+e] = weight[n, k] * embeddings[n, e]
      b_big[0, n*E+e] = bias[n]      * embeddings[n, e]
    """
    E = embeddings.shape[1]
    w3 = weight.astype(jnp.float32)[:, :, None] * embeddings.astype(jnp.float32)[:, None, :]
    w_big = jnp.transpose(w3, (1, 0, 2)).reshape(F_IN, N_NODES * E)
    b_big = (bias.astype(jnp.float32).reshape(N_NODES, 1)
             * embeddings.astype(jnp.float32)).reshape(1, N_NODES * E)
    return w_big, b_big


def emr_encoder(x, w_big, b_big):
    """x: (B, 20); w_big/b_big from make_fused_params. Returns (B, 484, E)."""
    B = x.shape[0]
    n_out = w_big.shape[1]
    E = n_out // N_NODES

    # Batch tile: multiple of 8 (sublanes), capped so the double-buffered
    # output tile stays <= ~8 MiB (v7x-safe); aim for >= 2 grid steps.
    TB = min(64, max(8, _round_up((B + 1) // 2, 8)))
    B_pad = _round_up(B, TB)
    if B_pad // TB < 2:
        B_pad = 2 * TB  # guarantee >= 2 grid steps so both v7x TCs get work

    x_p = x.astype(jnp.float32)
    if B_pad != B:
        x_p = jnp.zeros((B_pad, F_IN), jnp.float32).at[:B].set(x_p)

    grid = (B_pad // TB,)
    out_bytes = B_pad * n_out * 4
    in_bytes = (B_pad * F_IN + F_IN * n_out + n_out) * 4

    out = pl.pallas_call(
        emr_encoder_kernel,
        out_shape=jax.ShapeDtypeStruct((B_pad, n_out), jnp.float32),
        grid=grid,
        in_specs=[
            pl.BlockSpec((TB, F_IN), lambda i: (i, 0)),     # x tile per step
            pl.BlockSpec((F_IN, n_out), lambda i: (0, 0)),  # fused W, resident
            pl.BlockSpec((1, n_out), lambda i: (0, 0)),     # fused bias, resident
        ],
        out_specs=pl.BlockSpec((TB, n_out), lambda i: (i, 0)),
        compiler_params=pltpu.CompilerParams(
            dimension_semantics=("parallel",)),
        cost_estimate=pl.CostEstimate(
            flops=2 * B_pad * F_IN * n_out,
            transcendentals=0,
            bytes_accessed=out_bytes + in_bytes),
    )(x_p, w_big, b_big)

    # Final layout: drop batch padding (no-op when B == B_pad) + free reshape.
    return out[:B].reshape(B, N_NODES, E)


def reference(x, weight, bias, embeddings):
    y = x @ weight.T + bias.reshape(1, -1)            # (B, 484)
    return embeddings[None, :, :] * y[:, :, None]     # (B, 484, E)


if __name__ == "__main__":
    key = jax.random.PRNGKey(0)
    k_x, k_emb, k_w, k_b = jax.random.split(key, 4)

    B = 2
    embedding_size = 32

    # Deterministic synthetic parameters (shapes from the module's __init__).
    embeddings = jax.random.normal(k_emb, (N_NODES, embedding_size), jnp.float32)
    bound = 1.0 / jnp.sqrt(F_IN)
    weight = jax.random.uniform(k_w, (N_NODES, F_IN), jnp.float32, -bound, bound)
    bias = jax.random.uniform(k_b, (N_NODES,), jnp.float32, -bound, bound)

    # Fused parameters are built once (hoisted out of the per-call path).
    w_big, b_big = make_fused_params(weight, bias, embeddings)
    w_big = jax.block_until_ready(w_big)
    b_big = jax.block_until_ready(b_big)

    x = jax.random.normal(k_x, (B, F_IN), jnp.float32)

    out = emr_encoder(x, w_big, b_big)
    out = jax.block_until_ready(out)

    ref = reference(x, weight, bias, embeddings)
    assert out.shape == (B, N_NODES, embedding_size)
    assert jnp.allclose(out, ref, atol=1e-4, rtol=1e-4)

    print("KERNEL_OK")
</pallas_src>

<mosaic_0001>
module attributes {stable_mosaic.version = 11 : i64} {
  func.func @emr_encoder_kernel(%arg0: i32, %arg1: memref<8x20xf32, #tpu.memory_space<vmem>>, %arg2: memref<20x15488xf32, #tpu.memory_space<vmem>>, %arg3: memref<1x15488xf32, #tpu.memory_space<vmem>>, %arg4: memref<8x15488xf32, #tpu.memory_space<vmem>>) attributes {dimension_semantics = [#tpu.dimension_semantics<parallel>], iteration_bounds = array<i64: 2>, scalar_prefetch = 0 : i64, scratch_operands = 0 : i64, tpu.core_type = #tpu.core_type<tc>, window_params = [{transform_indices = @transform_0, window_bounds = array<i64: 8, 20>}, {pipeline_mode = #tpu.pipeline_mode<synchronous>, transform_indices = @transform_1, window_bounds = array<i64: 20, 15488>}, {pipeline_mode = #tpu.pipeline_mode<synchronous>, transform_indices = @transform_2, window_bounds = array<i64: 1, 15488>}, {transform_indices = @transform_3, window_bounds = array<i64: 8, 15488>}]} {
    %c0 = arith.constant 0 : index
    %c0_0 = arith.constant 0 : index
    %0 = vector.load %arg1[%c0, %c0_0] : memref<8x20xf32, #tpu.memory_space<vmem>>, vector<8x20xf32>
    %c0_1 = arith.constant 0 : index
    %c0_2 = arith.constant 0 : index
    %1 = vector.load %arg2[%c0_1, %c0_2] : memref<20x15488xf32, #tpu.memory_space<vmem>>, vector<20x15488xf32>
    %cst = arith.constant dense<0.000000e+00> : vector<8x15488xf32>
    %2 = tpu.matmul %0, %1, %cst {dimension_numbers = #tpu.dot_dimension_numbers<[1], [0], [0], [1], [0, 0, 1, 1], [], []>} : vector<8x20xf32>, vector<20x15488xf32>, vector<8x15488xf32> -> vector<8x15488xf32>
    %c0_3 = arith.constant 0 : index
    %c0_4 = arith.constant 0 : index
    %3 = vector.load %arg3[%c0_3, %c0_4] : memref<1x15488xf32, #tpu.memory_space<vmem>>, vector<1x15488xf32>
    %4 = vector.broadcast %3 : vector<1x15488xf32> to vector<8x15488xf32>
    %5 = arith.addf %2, %4 : vector<8x15488xf32>
    %c0_5 = arith.constant 0 : index
    %c0_6 = arith.constant 0 : index
    %6 = vector.load %arg4[%c0_5, %c0_6] : memref<8x15488xf32, #tpu.memory_space<vmem>>, vector<8x15488xf32>
    tpu.vector_store %arg4[%c0_5, %c0_6], %5 {strides = array<i32>} : memref<8x15488xf32, #tpu.memory_space<vmem>>, vector<8x15488xf32>,
    return
  }
  func.func @transform_0(%arg0: i32) -> (i32, i32) {
    %c0_i32 = arith.constant 0 : i32
    %c0_i32_0 = arith.constant 0 : i32
    return %arg0, %c0_i32 : i32, i32
  }
  func.func @transform_1(%arg0: i32) -> (i32, i32) {
    %c0_i32 = arith.constant 0 : i32
    %c0_i32_0 = arith.constant 0 : i32
    %c0_i32_1 = arith.constant 0 : i32
    return %c0_i32, %c0_i32_0 : i32, i32
  }
  func.func @transform_2(%arg0: i32) -> (i32, i32) {
    %c0_i32 = arith.constant 0 : i32
    %c0_i32_0 = arith.constant 0 : i32
    %c0_i32_1 = arith.constant 0 : i32
    return %c0_i32, %c0_i32_0 : i32, i32
  }
  func.func @transform_3(%arg0: i32) -> (i32, i32) {
    %c0_i32 = arith.constant 0 : i32
    %c0_i32_0 = arith.constant 0 : i32
    return %arg0, %c0_i32 : i32, i32
  }
}

</mosaic_0001>

<llo_original>
// kernel: tpu_custom_call.1
$region0: #{tpu_custom_call.1}
  #allocation0 [shape = 'u32[]', space=smem, size = 0x4, offset = 0x4, fixed_abs, tag = 'smem constant byte address 0x4 - core index']
  #allocation1 [shape = 'u32[144,128]{1,0:T(1,128)}', space=vmem, size = 0x12000, scoped, tag = 'internal scratch']
  %s0 = inlined_call_operand.hbm [shape: f32[16,20], index: 0, kind: input, shape index: {}]
  %s1 = inlined_call_operand.hbm [shape: f32[20,15488], index: 1, kind: input, shape index: {}]
  %s2 = inlined_call_operand.hbm [shape: f32[1,15488], index: 2, kind: input, shape index: {}]
  %s3 = inlined_call_operand.hbm [shape: f32[16,15488], index: 3, kind: output, shape index: {}]
  %s4 = sld [smem:[#allocation0]]
  $region57: #{tpu_custom_call.1} parent=0
    _
  %s6 = ssub.s32 1, %s4
  %s7 = scalar_select 0, %s6, %s4
  $region1: #{tpu_custom_call.1} parent=0
    #allocation2 [shape = 'u8[8192]{0}', space=vmem, size = 0x2000, scoped, tag = 'input window, operand 0']
    #allocation3 [shape = 's32[2]{0}', space=sflag, size = 0x8, scoped, tag = 'scoped memory for tpu_custom_call.1']
    #allocation4 [shape = 's32[2]{0}', space=sflag, size = 0x8, scoped, tag = 'scoped memory for tpu_custom_call.1']
    #allocation5 [shape = 'u8[1486848]{0}', space=vmem, size = 0x16b000, scoped, tag = 'input window, operand 1, single buffered']
    #allocation6 [shape = 's32[1]{0}', space=sflag, size = 0x4, scoped, tag = 'scoped memory for tpu_custom_call.1']
    #allocation7 [shape = 'u8[61952]{0}', space=vmem, size = 0xf400, scoped, tag = 'input window, operand 2, single buffered']
    #allocation8 [shape = 'u8[991232]{0}', space=vmem, size = 0xf2000, scoped, tag = 'output window, operand 0']
    %8 = vsyncpa [#allocation3], 0
    %s9 = scalar_lea.sflag [#allocation3], 1
    %10 = vsyncpa %s9, 0
    %11 = vsyncpa [#allocation6], 0
    %12 = vsyncpa [#allocation4], 0
    %s13 = scalar_lea.sflag [#allocation4], 1
    %14 = vsyncpa %s13, 0
    loop: start=0, step=1, limit=4
    $region2: #{tpu_custom_call.1} parent=1 // loop_pre_header
      _
    $region3: #{tpu_custom_call.1} parent=1 // loop_header
      %s16 = sphi 0, %s20
      %p17 = scmp.ge.s32.totalorder %s16, 4
      %s26 = sphi 0, %s28
      %s29 = sphi 0, %s26
      %s30 = sphi 0, %s29
      %s46 = sphi 0, %s30
      %s50 = sphi 0, %s50
      %s52 = sphi 0, %s50
      %s53 = sphi 0, %s52
      %s67 = sphi 0, %s53
      %s71 = sphi 0, %s71
      %s73 = sphi 0, %s71
      %s74 = sphi 0, %s73
      %s88 = sphi 0, %s74
      %s94 = sphi 0, %s96
      %s97 = sphi 0, %s94
      %s98 = sphi 0, %s97
      %s114 = sphi 0, %s98
    $region4: #{tpu_custom_call.1} parent=1 // loop_header_branch
      %19 = sbr.rel (%p17) target = $region8
    $region5: #{tpu_custom_call.1} parent=1 // loop_body
      %s21 = ssub.s32 %s16, 1
      %s22 = ssub.s32 %s16, 2
      %s23 = sadd.s32 %s16, 1
      %s24 = ssub.s32 %s16, %s23
      %p25 = scmp.eq.s32.totalorder %s24, 0
      %s27 = sadd.s32 %s26, 1
      %s28 = scalar_select %p25, %s26, %s27
      %p31 = pneg %p25
      %p32 = scmp.eq.s32.totalorder %s16, 1
      %p33 = por %p31, %p32
      %p34 = scmp.ne.s32.totalorder %s26, %s29
      %p35 = scmp.eq.s32.totalorder %s16, 0
      %p36 = por %p34, %p35
      %p37 = scmp.ne.s32.totalorder %s26, %s29
      %p38 = scmp.eq.s32.totalorder %s21, 1
      %p39 = por %p37, %p38
      %p40 = scmp.ne.s32.totalorder %s29, %s30
      %p41 = scmp.eq.s32.totalorder %s21, 0
      %p42 = por %p40, %p41
      %p43 = scmp.ne.s32.totalorder %s29, %s30
      %p44 = scmp.eq.s32.totalorder %s22, 1
      %p45 = por %p43, %p44
      %p47 = scmp.ne.s32.totalorder %s30, %s46
      %p48 = scmp.eq.s32.totalorder %s22, 0
      %p49 = por %p47, %p48
      %s51 = sadd.s32 %s50, 1
      %p54 = scmp.eq.s32.totalorder %s16, 1
      %p55 = scmp.ne.s32.totalorder %s50, %s52
      %p56 = scmp.eq.s32.totalorder %s16, 0
      %p57 = por %p55, %p56
      %p58 = scmp.ne.s32.totalorder %s50, %s52
      %p59 = scmp.eq.s32.totalorder %s21, 1
      %p60 = por %p58, %p59
      %p61 = scmp.ne.s32.totalorder %s52, %s53
      %p62 = scmp.eq.s32.totalorder %s21, 0
      %p63 = por %p61, %p62
      %p64 = scmp.ne.s32.totalorder %s52, %s53
      %p65 = scmp.eq.s32.totalorder %s22, 1
      %p66 = por %p64, %p65
      %p68 = scmp.ne.s32.totalorder %s53, %s67
      %p69 = scmp.eq.s32.totalorder %s22, 0
      %p70 = por %p68, %p69
      %s72 = sadd.s32 %s71, 1
      %p75 = scmp.eq.s32.totalorder %s16, 1
      %p76 = scmp.ne.s32.totalorder %s71, %s73
      %p77 = scmp.eq.s32.totalorder %s16, 0
      %p78 = por %p76, %p77
      %p79 = scmp.ne.s32.totalorder %s71, %s73
      %p80 = scmp.eq.s32.totalorder %s21, 1
      %p81 = por %p79, %p80
      %p82 = scmp.ne.s32.totalorder %s73, %s74
      %p83 = scmp.eq.s32.totalorder %s21, 0
      %p84 = por %p82, %p83
      %p85 = scmp.ne.s32.totalorder %s73, %s74
      %p86 = scmp.eq.s32.totalorder %s22, 1
      %p87 = por %p85, %p86
      %p89 = scmp.ne.s32.totalorder %s74, %s88
      %p90 = scmp.eq.s32.totalorder %s22, 0
      %p91 = por %p89, %p90
      %s92 = ssub.s32 %s16, %s23
      %p93 = scmp.eq.s32.totalorder %s92, 0
      %s95 = sadd.s32 %s94, 1
      %s96 = scalar_select %p93, %s94, %s95
      %p99 = pneg %p93
      %p100 = scmp.eq.s32.totalorder %s16, 1
      %p101 = por %p99, %p100
      %p102 = scmp.ne.s32.totalorder %s94, %s97
      %p103 = scmp.eq.s32.totalorder %s16, 0
      %p104 = por %p102, %p103
      %p105 = scmp.ne.s32.totalorder %s94, %s97
      %p106 = scmp.eq.s32.totalorder %s21, 1
      %p107 = por %p105, %p106
      %p108 = scmp.ne.s32.totalorder %s97, %s98
      %p109 = scmp.eq.s32.totalorder %s21, 0
      %p110 = por %p108, %p109
      %p111 = scmp.ne.s32.totalorder %s97, %s98
      %p112 = scmp.eq.s32.totalorder %s22, 1
      %p113 = por %p111, %p112
      %p115 = scmp.ne.s32.totalorder %s98, %s114
      %p116 = scmp.eq.s32.totalorder %s22, 0
      %p117 = por %p115, %p116
      %p118 = scmp.le.s32.totalorder 1, %s16
      %p119 = scmp.lt.s32.totalorder %s16, 3
      %p120 = pnand %p118, %p119
      %p121 = pneg %p120
      // Predicated region
      $region9: #{tpu_custom_call.1} parent=5 // pred_check
        _
      $region10: #{tpu_custom_call.1} parent=5 // pred_check_branch
        %123 = sbr.rel (%p120) target = $region12
      $region11: #{tpu_custom_call.1} parent=5 // pred_region
        %s124 = ssub.s32 %s16, 1
        // Predicated region
        $region13: #{tpu_custom_call.1} parent=11 // pred_check
          %p125 = pneg %p63
        $region14: #{tpu_custom_call.1} parent=11 // pred_check_branch
          %127 = sbr.rel (%p125) target = $region16
        $region15: #{tpu_custom_call.1} parent=11 // pred_region
          %s129 = ssub.s32 46464, 46464
          %130 = vsyncadd [#allocation6], %s129
          %s131 = sshll.u32 [#allocation5], 4
          %s132 = int_to_ptr.vmem [resolvable:$true] %s131
          %137 = dma.hbm_to_vmem [thread:$0]  %s1, 46464, %s132, [#allocation6], 15488, 15488, 968
        $region16: #{tpu_custom_call.1} parent=11 // pred_fallthru
          _
        // Predicated region
        $region17: #{tpu_custom_call.1} parent=11 // pred_check
          %p138 = pneg %p84
        $region18: #{tpu_custom_call.1} parent=11 // pred_check_branch
          %140 = sbr.rel (%p138) target = $region20
        $region19: #{tpu_custom_call.1} parent=11 // pred_region
          %s142 = ssub.s32 1936, 1936
          %143 = vsyncadd [#allocation6], %s142
          %s145 = sshll.u32 [#allocation7], 4
          %s146 = int_to_ptr.vmem [resolvable:$true] %s145
          %148 = dma.hbm_to_vmem [thread:$0]  %s2, 1936, %s146, [#allocation6]
        $region20: #{tpu_custom_call.1} parent=11 // pred_fallthru
          _
      $region12: #{tpu_custom_call.1} parent=5 // pred_fallthru
        _
      %p149 = scmp.lt.s32.totalorder %s16, 2
      // Predicated region
      $region21: #{tpu_custom_call.1} parent=5 // pred_check
        %p150 = pneg %p149
      $region22: #{tpu_custom_call.1} parent=5 // pred_check_branch
        %152 = sbr.rel (%p150) target = $region24
      $region23: #{tpu_custom_call.1} parent=5 // pred_region
        // Predicated region
        $region25: #{tpu_custom_call.1} parent=23 // pred_check
          %p153 = pneg %p36
        $region26: #{tpu_custom_call.1} parent=23 // pred_check_branch
          %155 = sbr.rel (%p153) target = $region28
        $region27: #{tpu_custom_call.1} parent=23 // pred_region
          %s156 = sand.u32 %s26, 1
          %s157 = scalar_lea.sflag [#allocation3], %s156
          %s158 = sand.u32 %s26, 1
          %s159 = smul.addr %s158, 8
          %s160 = scalar_lea.vmem [#allocation2], %s159
          %s162 = ssub.s32 128, 128
          %163 = vsyncadd %s157, %s162
          %s164 = smul.addr %s16, 128
          %s165 = scalar_lea.hbm %s0, %s164
          %s167 = sshll.u32 %s160, 4
          %s168 = int_to_ptr.vmem [resolvable:$true] %s167
          %170 = dma.hbm_to_vmem [thread:$0]  %s165, 128, %s168, %s157
        $region28: #{tpu_custom_call.1} parent=23 // pred_fallthru
          _
      $region24: #{tpu_custom_call.1} parent=5 // pred_fallthru
        _
      %p171 = scmp.le.s32.totalorder 1, %s16
      %p172 = scmp.lt.s32.totalorder %s16, 3
      %p173 = pnand %p171, %p172
      %p174 = pneg %p173
      // Predicated region
      $region29: #{tpu_custom_call.1} parent=5 // pred_check
        _
      $region30: #{tpu_custom_call.1} parent=5 // pred_check_branch
        %176 = sbr.rel (%p173) target = $region32
      $region31: #{tpu_custom_call.1} parent=5 // pred_region
        %s177 = ssub.s32 %s16, 1
        %s178 = sand.u32 %s29, 1
        %s179 = scalar_lea.sflag [#allocation3], %s178
        %s180 = sand.u32 %s29, 1
        %s181 = smul.addr %s180, 8
        %s182 = scalar_lea.vmem [#allocation2], %s181
        // Predicated region
        $region33: #{tpu_custom_call.1} parent=31 // pred_check
          %p183 = pneg %p42
        $region34: #{tpu_custom_call.1} parent=31 // pred_check_branch
          %185 = sbr.rel (%p183) target = $region36
        $region35: #{tpu_custom_call.1} parent=31 // pred_region
          %186 = dma.done %s179, 128
        $region36: #{tpu_custom_call.1} parent=31 // pred_fallthru
          _
        // Predicated region
        $region37: #{tpu_custom_call.1} parent=31 // pred_check
          %p187 = pneg %p63
        $region38: #{tpu_custom_call.1} parent=31 // pred_check_branch
          %189 = sbr.rel (%p187) target = $region40
        $region39: #{tpu_custom_call.1} parent=31 // pred_region
          %190 = dma.done [#allocation6], 46464
        $region40: #{tpu_custom_call.1} parent=31 // pred_fallthru
          _
        // Predicated region
        $region41: #{tpu_custom_call.1} parent=31 // pred_check
          %p191 = pneg %p84
        $region42: #{tpu_custom_call.1} parent=31 // pred_check_branch
          %193 = sbr.rel (%p191) target = $region44
        $region43: #{tpu_custom_call.1} parent=31 // pred_region
          %194 = dma.done [#allocation6], 1936
        $region44: #{tpu_custom_call.1} parent=31 // pred_fallthru
          _
        %s195 = sand.u32 %s29, 1
        %s196 = scalar_lea.sflag [#allocation3], %s195
        %s197 = sand.u32 %s29, 1
        %s198 = smul.addr %s197, 8
        %s199 = scalar_lea.vmem [#allocation2], %s198
        %p200 = pneg %p42
        %p201 = pneg %p39
        %p202 = pneg %p63
        %p203 = pneg %p60
        %p204 = pneg %p84
        %p205 = pneg %p81
        %p206 = pneg %p110
        %p207 = pneg %p107
        %s208 = sand.u32 %s97, 1
        %s209 = scalar_lea.sflag [#allocation4], %s208
        %s210 = sand.u32 %s97, 1
        %s211 = smul.addr %s210, 968
        %s212 = scalar_lea.vmem [#allocation8], %s211
        %v213 = vld [vmem:[%s182] sm:$0xff]
        %v214 = vld [vmem:[#allocation5] sm:$0xff]
        %v215 = vld [vmem:[#allocation5 + $0x8] sm:$0xff]
        %v216 = vld [vmem:[#allocation5 + $0x10] sm:$0xff]
        %v217 = vld [vmem:[#allocation5 + $0x18] sm:$0xff]
        %v218 = vld [vmem:[#allocation5 + $0x20] sm:$0xff]
        %v219 = vld [vmem:[#allocation5 + $0x28] sm:$0xff]
        %v220 = vld [vmem:[#allocation5 + $0x30] sm:$0xff]
        %v221 = vld [vmem:[#allocation5 + $0x38] sm:$0xff]
        %v222 = vld [vmem:[#allocation5 + $0x40] sm:$0xff]
        %v223 = vld [vmem:[#allocation5 + $0x48] sm:$0xff]
        %v224 = vld [vmem:[#allocation5 + $0x50] sm:$0xff]
        %v225 = vld [vmem:[#allocation5 + $0x58] sm:$0xff]
        %v226 = vld [vmem:[#allocation5 + $0x60] sm:$0xff]
        %v227 = vld [vmem:[#allocation5 + $0x68] sm:$0xff]
        %v228 = vld [vmem:[#allocation5 + $0x70] sm:$0xff]
        %v229 = vld [vmem:[#allocation5 + $0x78] sm:$0xff]
        %v230 = vld [vmem:[#allocation5 + $0x80] sm:$0xff]
        %v231 = vld [vmem:[#allocation5 + $0x88] sm:$0xff]
        %v232 = vld [vmem:[#allocation5 + $0x90] sm:$0xff]
        %v233 = vld [vmem:[#allocation5 + $0x98] sm:$0xff]
        %v234 = vld [vmem:[#allocation5 + $0xa0] sm:$0xff]
        %v235 = vld [vmem:[#allocation5 + $0xa8] sm:$0xff]
        %v236 = vld [vmem:[#allocation5 + $0xb0] sm:$0xff]
        %v237 = vld [vmem:[#allocation5 + $0xb8] sm:$0xff]
        %v238 = vld [vmem:[#allocation5 + $0xc0] sm:$0xff]
        %v239 = vld [vmem:[#allocation5 + $0xc8] sm:$0xff]
        %v240 = vld [vmem:[#allocation5 + $0xd0] sm:$0xff]
        %v241 = vld [vmem:[#allocation5 + $0xd8] sm:$0xff]
        %v242 = vld [vmem:[#allocation5 + $0xe0] sm:$0xff]
        %v243 = vld [vmem:[#allocation5 + $0xe8] sm:$0xff]
        %v244 = vld [vmem:[#allocation5 + $0xf0] sm:$0xff]
        %v245 = vld [vmem:[#allocation5 + $0xf8] sm:$0xff]
        %v246 = vld [vmem:[#allocation5 + $0x100] sm:$0xff]
        %v247 = vld [vmem:[#allocation5 + $0x108] sm:$0xff]
        %v248 = vld [vmem:[#allocation5 + $0x110] sm:$0xff]
        %v249 = vld [vmem:[#allocation5 + $0x118] sm:$0xff]
        %v250 = vld [vmem:[#allocation5 + $0x120] sm:$0xff]
        %v251 = vld [vmem:[#allocation5 + $0x128] sm:$0xff]
        %v252 = vld [vmem:[#allocation5 + $0x130] sm:$0xff]
        %v253 = vld [vmem:[#allocation5 + $0x138] sm:$0xff]
        %v254 = vld [vmem:[#allocation5 + $0x140] sm:$0xff]
        %v255 = vld [vmem:[#allocation5 + $0x148] sm:$0xff]
        %v256 = vld [vmem:[#allocation5 + $0x150] sm:$0xff]
        %v257 = vld [vmem:[#allocation5 + $0x158] sm:$0xff]
        %v258 = vld [vmem:[#allocation5 + $0x160] sm:$0xff]
        %v259 = vld [vmem:[#allocation5 + $0x168] sm:$0xff]
        %v260 = vld [vmem:[#allocation5 + $0x170] sm:$0xff]
        %v261 = vld [vmem:[#allocation5 + $0x178] sm:$0xff]
        %v262 = vld [vmem:[#allocation5 + $0x180] sm:$0xff]
        %v263 = vld [vmem:[#allocation5 + $0x188] sm:$0xff]
        %v264 = vld [vmem:[#allocation5 + $0x190] sm:$0xff]
        %v265 = vld [vmem:[#allocation5 + $0x198] sm:$0xff]
        %v266 = vld [vmem:[#allocation5 + $0x1a0] sm:$0xff]
        %v267 = vld [vmem:[#allocation5 + $0x1a8] sm:$0xff]
        %v268 = vld [vmem:[#allocation5 + $0x1b0] sm:$0xff]
        %v269 = vld [vmem:[#allocation5 + $0x1b8] sm:$0xff]
        %v270 = vld [vmem:[#allocation5 + $0x1c0] sm:$0xff]
        %v271 = vld [vmem:[#allocation5 + $0x1c8] sm:$0xff]
        %v272 = vld [vmem:[#allocation5 + $0x1d0] sm:$0xff]
        %v273 = vld [vmem:[#allocation5 + $0x1d8] sm:$0xff]
        %v274 = vld [vmem:[#allocation5 + $0x1e0] sm:$0xff]
        %v275 = vld [vmem:[#allocation5 + $0x1e8] sm:$0xff]
        %v276 = vld [vmem:[#allocation5 + $0x1f0] sm:$0xff]
        %v277 = vld [vmem:[#allocation5 + $0x1f8] sm:$0xff]
        %v278 = vld [vmem:[#allocation5 + $0x200] sm:$0xff]
        %v279 = vld [vmem:[#allocation5 + $0x208] sm:$0xff]
        %v280 = vld [vmem:[#allocation5 + $0x210] sm:$0xff]
        %v281 = vld [vmem:[#allocation5 + $0x218] sm:$0xff]
        %v282 = vld [vmem:[#allocation5 + $0x220] sm:$0xff]
        %v283 = vld [vmem:[#allocation5 + $0x228] sm:$0xff]
        %v284 = vld [vmem:[#allocation5 + $0x230] sm:$0xff]
        %v285 = vld [vmem:[#allocation5 + $0x238] sm:$0xff]
        %v286 = vld [vmem:[#allocation5 + $0x240] sm:$0xff]
        %v287 = vld [vmem:[#allocation5 + $0x248] sm:$0xff]
        %v288 = vld [vmem:[#allocation5 + $0x250] sm:$0xff]
        %v289 = vld [vmem:[#allocation5 + $0x258] sm:$0xff]
        %v290 = vld [vmem:[#allocation5 + $0x260] sm:$0xff]
        %v291 = vld [vmem:[#allocation5 + $0x268] sm:$0xff]
        %v292 = vld [vmem:[#allocation5 + $0x270] sm:$0xff]
        %v293 = vld [vmem:[#allocation5 + $0x278] sm:$0xff]
        %v294 = vld [vmem:[#allocation5 + $0x280] sm:$0xff]
        %v295 = vld [vmem:[#allocation5 + $0x288] sm:$0xff]
        %v296 = vld [vmem:[#allocation5 + $0x290] sm:$0xff]
        %v297 = vld [vmem:[#allocation5 + $0x298] sm:$0xff]
        %v298 = vld [vmem:[#allocation5 + $0x2a0] sm:$0xff]
        %v299 = vld [vmem:[#allocation5 + $0x2a8] sm:$0xff]
        %v300 = vld [vmem:[#allocation5 + $0x2b0] sm:$0xff]
        %v301 = vld [vmem:[#allocation5 + $0x2b8] sm:$0xff]
        %v302 = vld [vmem:[#allocation5 + $0x2c0] sm:$0xff]
        %v303 = vld [vmem:[#allocation5 + $0x2c8] sm:$0xff]
        %v304 = vld [vmem:[#allocation5 + $0x2d0] sm:$0xff]
        %v305 = vld [vmem:[#allocation5 + $0x2d8] sm:$0xff]
        %v306 = vld [vmem:[#allocation5 + $0x2e0] sm:$0xff]
        %v307 = vld [vmem:[#allocation5 + $0x2e8] sm:$0xff]
        %v308 = vld [vmem:[#allocation5 + $0x2f0] sm:$0xff]
        %v309 = vld [vmem:[#allocation5 + $0x2f8] sm:$0xff]
        %v310 = vld [vmem:[#allocation5 + $0x300] sm:$0xff]
        %v311 = vld [vmem:[#allocation5 + $0x308] sm:$0xff]
        %v312 = vld [vmem:[#allocation5 + $0x310] sm:$0xff]
        %v313 = vld [vmem:[#allocation5 + $0x318] sm:$0xff]
        %v314 = vld [vmem:[#allocation5 + $0x320] sm:$0xff]
        %v315 = vld [vmem:[#allocation5 + $0x328] sm:$0xff]
        %v316 = vld [vmem:[#allocation5 + $0x330] sm:$0xff]
        %v317 = vld [vmem:[#allocation5 + $0x338] sm:$0xff]
        %v318 = vld [vmem:[#allocation5 + $0x340] sm:$0xff]
        %v319 = vld [vmem:[#allocation5 + $0x348] sm:$0xff]
        %v320 = vld [vmem:[#allocation5 + $0x350] sm:$0xff]
        %v321 = vld [vmem:[#allocation5 + $0x358] sm:$0xff]
        %v322 = vld [vmem:[#allocation5 + $0x360] sm:$0xff]
        %v323 = vld [vmem:[#allocation5 + $0x368] sm:$0xff]
        %v324 = vld [vmem:[#allocation5 + $0x370] sm:$0xff]
        %v325 = vld [vmem:[#allocation5 + $0x378] sm:$0xff]
        %v326 = vld [vmem:[#allocation5 + $0x380] sm:$0xff]
        %v327 = vld [vmem:[#allocation5 + $0x388] sm:$0xff]
        %v328 = vld [vmem:[#allocation5 + $0x390] sm:$0xff]
        %v329 = vld [vmem:[#allocation5 + $0x398] sm:$0xff]
        %v330 = vld [vmem:[#allocation5 + $0x3a0] sm:$0xff]
        %v331 = vld [vmem:[#allocation5 + $0x3a8] sm:$0xff]
        %v332 = vld [vmem:[#allocation5 + $0x3b0] sm:$0xff]
        %v333 = vld [vmem:[#allocation5 + $0x3b8] sm:$0xff]
        %v334 = vld [vmem:[#allocation5 + $0x3c0] sm:$0xff]
        %v335 = vld [vmem:[#allocation5 + $0x3c8] sm:$0xff]
        %v336 = vld [vmem:[#allocation5 + $0x3d0] sm:$0xff]
        %v337 = vld [vmem:[#allocation5 + $0x3d8] sm:$0xff]
        %v338 = vld [vmem:[#allocation5 + $0x3e0] sm:$0xff]
        %v339 = vld [vmem:[#allocation5 + $0x3e8] sm:$0xff]
        %v340 = vld [vmem:[#allocation5 + $0x3f0] sm:$0xff]
        %v341 = vld [vmem:[#allocation5 + $0x3f8] sm:$0xff]
        %v342 = vld [vmem:[#allocation5 + $0x400] sm:$0xff]
        %v343 = vld [vmem:[#allocation5 + $0x408] sm:$0xff]
        %v344 = vld [vmem:[#allocation5 + $0x410] sm:$0xff]
        %v345 = vld [vmem:[#allocation5 + $0x418] sm:$0xff]
        %v346 = vld [vmem:[#allocation5 + $0x420] sm:$0xff]
        %v347 = vld [vmem:[#allocation5 + $0x428] sm:$0xff]
        %v348 = vld [vmem:[#allocation5 + $0x430] sm:$0xff]
        %v349 = vld [vmem:[#allocation5 + $0x438] sm:$0xff]
        %v350 = vld [vmem:[#allocation5 + $0x440] sm:$0xff]
        %v351 = vld [vmem:[#allocation5 + $0x448] sm:$0xff]
        %v352 = vld [vmem:[#allocation5 + $0x450] sm:$0xff]
        %v353 = vld [vmem:[#allocation5 + $0x458] sm:$0xff]
        %v354 = vld [vmem:[#allocation5 + $0x460] sm:$0xff]
        %v355 = vld [vmem:[#allocation5 + $0x468] sm:$0xff]
        %v356 = vld [vmem:[#allocation5 + $0x470] sm:$0xff]
        %v357 = vld [vmem:[#allocation5 + $0x478] sm:$0xff]
        %v358 = vld [vmem:[#allocation5 + $0x480] sm:$0xff]
        %v359 = vld [vmem:[#allocation5 + $0x488] sm:$0xff]
        %v360 = vld [vmem:[#allocation5 + $0x490] sm:$0xff]
        %v361 = vld [vmem:[#allocation5 + $0x498] sm:$0xff]
        %v362 = vld [vmem:[#allocation5 + $0x4a0] sm:$0xff]
        %v363 = vld [vmem:[#allocation5 + $0x4a8] sm:$0xff]
        %v364 = vld [vmem:[#allocation5 + $0x4b0] sm:$0xff]
        %v365 = vld [vmem:[#allocation5 + $0x4b8] sm:$0xff]
        %v366 = vld [vmem:[#allocation5 + $0x4c0] sm:$0xff]
        %v367 = vld [vmem:[#allocation5 + $0x4c8] sm:$0xff]
        %v368 = vld [vmem:[#allocation5 + $0x4d0] sm:$0xff]
        %v369 = vld [vmem:[#allocation5 + $0x4d8] sm:$0xff]
        %v370 = vld [vmem:[#allocation5 + $0x4e0] sm:$0xff]
        %v371 = vld [vmem:[#allocation5 + $0x4e8] sm:$0xff]
        %v372 = vld [vmem:[#allocation5 + $0x4f0] sm:$0xff]
        %v373 = vld [vmem:[#allocation5 + $0x4f8] sm:$0xff]
        %v374 = vld [vmem:[#allocation5 + $0x500] sm:$0xff]
        %v375 = vld [vmem:[#allocation5 + $0x508] sm:$0xff]
        %v376 = vld [vmem:[#allocation5 + $0x510] sm:$0xff]
        %v377 = vld [vmem:[#allocation5 + $0x518] sm:$0xff]
        %v378 = vld [vmem:[#allocation5 + $0x520] sm:$0xff]
        %v379 = vld [vmem:[#allocation5 + $0x528] sm:$0xff]
        %v380 = vld [vmem:[#allocation5 + $0x530] sm:$0xff]
        %v381 = vld [vmem:[#allocation5 + $0x538] sm:$0xff]
        %v382 = vld [vmem:[#allocation5 + $0x540] sm:$0xff]
        %v383 = vld [vmem:[#allocation5 + $0x548] sm:$0xff]
        %v384 = vld [vmem:[#allocation5 + $0x550] sm:$0xff]
        %v385 = vld [vmem:[#allocation5 + $0x558] sm:$0xff]
        %v386 = vld [vmem:[#allocation5 + $0x560] sm:$0xff]
        %v387 = vld [vmem:[#allocation5 + $0x568] sm:$0xff]
        %v388 = vld [vmem:[#allocation5 + $0x570] sm:$0xff]
        %v389 = vld [vmem:[#allocation5 + $0x578] sm:$0xff]
        %v390 = vld [vmem:[#allocation5 + $0x580] sm:$0xff]
        %v391 = vld [vmem:[#allocation5 + $0x588] sm:$0xff]
        %v392 = vld [vmem:[#allocation5 + $0x590] sm:$0xff]
        %v393 = vld [vmem:[#allocation5 + $0x598] sm:$0xff]
        %v394 = vld [vmem:[#allocation5 + $0x5a0] sm:$0xff]
        %v395 = vld [vmem:[#allocation5 + $0x5a8] sm:$0xff]
        %v396 = vld [vmem:[#allocation5 + $0x5b0] sm:$0xff]
        %v397 = vld [vmem:[#allocation5 + $0x5b8] sm:$0xff]
        %v398 = vld [vmem:[#allocation5 + $0x5c0] sm:$0xff]
        %v399 = vld [vmem:[#allocation5 + $0x5c8] sm:$0xff]
        %v400 = vld [vmem:[#allocation5 + $0x5d0] sm:$0xff]
        %v401 = vld [vmem:[#allocation5 + $0x5d8] sm:$0xff]
        %v402 = vld [vmem:[#allocation5 + $0x5e0] sm:$0xff]
        %v403 = vld [vmem:[#allocation5 + $0x5e8] sm:$0xff]
        %v404 = vld [vmem:[#allocation5 + $0x5f0] sm:$0xff]
        %v405 = vld [vmem:[#allocation5 + $0x5f8] sm:$0xff]
        %v406 = vld [vmem:[#allocation5 + $0x600] sm:$0xff]
        %v407 = vld [vmem:[#allocation5 + $0x608] sm:$0xff]
        %v408 = vld [vmem:[#allocation5 + $0x610] sm:$0xff]
        %v409 = vld [vmem:[#allocation5 + $0x618] sm:$0xff]
        %v410 = vld [vmem:[#allocation5 + $0x620] sm:$0xff]
        %v411 = vld [vmem:[#allocation5 + $0x628] sm:$0xff]
        %v412 = vld [vmem:[#allocation5 + $0x630] sm:$0xff]
        %v413 = vld [vmem:[#allocation5 + $0x638] sm:$0xff]
        %v414 = vld [vmem:[#allocation5 + $0x640] sm:$0xff]
        %v415 = vld [vmem:[#allocation5 + $0x648] sm:$0xff]
        %v416 = vld [vmem:[#allocation5 + $0x650] sm:$0xff]
        %v417 = vld [vmem:[#allocation5 + $0x658] sm:$0xff]
        %v418 = vld [vmem:[#allocation5 + $0x660] sm:$0xff]
        %v419 = vld [vmem:[#allocation5 + $0x668] sm:$0xff]
        %v420 = vld [vmem:[#allocation5 + $0x670] sm:$0xff]
        %v421 = vld [vmem:[#allocation5 + $0x678] sm:$0xff]
        %v422 = vld [vmem:[#allocation5 + $0x680] sm:$0xff]
        %v423 = vld [vmem:[#allocation5 + $0x688] sm:$0xff]
        %v424 = vld [vmem:[#allocation5 + $0x690] sm:$0xff]
        %v425 = vld [vmem:[#allocation5 + $0x698] sm:$0xff]
        %v426 = vld [vmem:[#allocation5 + $0x6a0] sm:$0xff]
        %v427 = vld [vmem:[#allocation5 + $0x6a8] sm:$0xff]
        %v428 = vld [vmem:[#allocation5 + $0x6b0] sm:$0xff]
        %v429 = vld [vmem:[#allocation5 + $0x6b8] sm:$0xff]
        %v430 = vld [vmem:[#allocation5 + $0x6c0] sm:$0xff]
        %v431 = vld [vmem:[#allocation5 + $0x6c8] sm:$0xff]
        %v432 = vld [vmem:[#allocation5 + $0x6d0] sm:$0xff]
        %v433 = vld [vmem:[#allocation5 + $0x6d8] sm:$0xff]
        %v434 = vld [vmem:[#allocation5 + $0x6e0] sm:$0xff]
        %v435 = vld [vmem:[#allocation5 + $0x6e8] sm:$0xff]
        %v436 = vld [vmem:[#allocation5 + $0x6f0] sm:$0xff]
        %v437 = vld [vmem:[#allocation5 + $0x6f8] sm:$0xff]
        %v438 = vld [vmem:[#allocation5 + $0x700] sm:$0xff]
        %v439 = vld [vmem:[#allocation5 + $0x708] sm:$0xff]
        %v440 = vld [vmem:[#allocation5 + $0x710] sm:$0xff]
        %v441 = vld [vmem:[#allocation5 + $0x718] sm:$0xff]
        %v442 = vld [vmem:[#allocation5 + $0x720] sm:$0xff]
        %v443 = vld [vmem:[#allocation5 + $0x728] sm:$0xff]
        %v444 = vld [vmem:[#allocation5 + $0x730] sm:$0xff]
        %v445 = vld [vmem:[#allocation5 + $0x738] sm:$0xff]
        %v446 = vld [vmem:[#allocation5 + $0x740] sm:$0xff]
        %v447 = vld [vmem:[#allocation5 + $0x748] sm:$0xff]
        %v448 = vld [vmem:[#allocation5 + $0x750] sm:$0xff]
        %v449 = vld [vmem:[#allocation5 + $0x758] sm:$0xff]
        %v450 = vld [vmem:[#allocation5 + $0x760] sm:$0xff]
        %v451 = vld [vmem:[#allocation5 + $0x768] sm:$0xff]
        %v452 = vld [vmem:[#allocation5 + $0x770] sm:$0xff]
        %v453 = vld [vmem:[#allocation5 + $0x778] sm:$0xff]
        %v454 = vld [vmem:[#allocation5 + $0x780] sm:$0xff]
        %v455 = vld [vmem:[#allocation5 + $0x788] sm:$0xff]
        %v456 = vld [vmem:[#allocation5 + $0x790] sm:$0xf]
        %v457 = vld [vmem:[#allocation5 + $0x798] sm:$0xf]
        %v458 = vld [vmem:[#allocation5 + $0x7a0] sm:$0xf]
        %v459 = vld [vmem:[#allocation5 + $0x7a8] sm:$0xf]
        %v460 = vld [vmem:[#allocation5 + $0x7b0] sm:$0xf]
        %v461 = vld [vmem:[#allocation5 + $0x7b8] sm:$0xf]
        %v462 = vld [vmem:[#allocation5 + $0x7c0] sm:$0xf]
        %v463 = vld [vmem:[#allocation5 + $0x7c8] sm:$0xf]
        %v464 = vld [vmem:[#allocation5 + $0x7d0] sm:$0xf]
        %v465 = vld [vmem:[#allocation5 + $0x7d8] sm:$0xf]
        %v466 = vld [vmem:[#allocation5 + $0x7e0] sm:$0xf]
        %v467 = vld [vmem:[#allocation5 + $0x7e8] sm:$0xf]
        %v468 = vld [vmem:[#allocation5 + $0x7f0] sm:$0xf]
        %v469 = vld [vmem:[#allocation5 + $0x7f8] sm:$0xf]
        %v470 = vld [vmem:[#allocation5 + $0x800] sm:$0xf]
        %v471 = vld [vmem:[#allocation5 + $0x808] sm:$0xf]
        %v472 = vld [vmem:[#allocation5 + $0x810] sm:$0xf]
        %v473 = vld [vmem:[#allocation5 + $0x818] sm:$0xf]
        %v474 = vld [vmem:[#allocation5 + $0x820] sm:$0xf]
        %v475 = vld [vmem:[#allocation5 + $0x828] sm:$0xf]
        %v476 = vld [vmem:[#allocation5 + $0x830] sm:$0xf]
        %v477 = vld [vmem:[#allocation5 + $0x838] sm:$0xf]
        %v478 = vld [vmem:[#allocation5 + $0x840] sm:$0xf]
        %v479 = vld [vmem:[#allocation5 + $0x848] sm:$0xf]
        %v480 = vld [vmem:[#allocation5 + $0x850] sm:$0xf]
        %v481 = vld [vmem:[#allocation5 + $0x858] sm:$0xf]
        %v482 = vld [vmem:[#allocation5 + $0x860] sm:$0xf]
        %v483 = vld [vmem:[#allocation5 + $0x868] sm:$0xf]
        %v484 = vld [vmem:[#allocation5 + $0x870] sm:$0xf]
        %v485 = vld [vmem:[#allocation5 + $0x878] sm:$0xf]
        %v486 = vld [vmem:[#allocation5 + $0x880] sm:$0xf]
        %v487 = vld [vmem:[#allocation5 + $0x888] sm:$0xf]
        %v488 = vld [vmem:[#allocation5 + $0x890] sm:$0xf]
        %v489 = vld [vmem:[#allocation5 + $0x898] sm:$0xf]
        %v490 = vld [vmem:[#allocation5 + $0x8a0] sm:$0xf]
        %v491 = vld [vmem:[#allocation5 + $0x8a8] sm:$0xf]
        %v492 = vld [vmem:[#allocation5 + $0x8b0] sm:$0xf]
        %v493 = vld [vmem:[#allocation5 + $0x8b8] sm:$0xf]
        %v494 = vld [vmem:[#allocation5 + $0x8c0] sm:$0xf]
        %v495 = vld [vmem:[#allocation5 + $0x8c8] sm:$0xf]
        %v496 = vld [vmem:[#allocation5 + $0x8d0] sm:$0xf]
        %v497 = vld [vmem:[#allocation5 + $0x8d8] sm:$0xf]
        %v498 = vld [vmem:[#allocation5 + $0x8e0] sm:$0xf]
        %v499 = vld [vmem:[#allocation5 + $0x8e8] sm:$0xf]
        %v500 = vld [vmem:[#allocation5 + $0x8f0] sm:$0xf]
        %v501 = vld [vmem:[#allocation5 + $0x8f8] sm:$0xf]
        %v502 = vld [vmem:[#allocation5 + $0x900] sm:$0xf]
        %v503 = vld [vmem:[#allocation5 + $0x908] sm:$0xf]
        %v504 = vld [vmem:[#allocation5 + $0x910] sm:$0xf]
        %v505 = vld [vmem:[#allocation5 + $0x918] sm:$0xf]
        %v506 = vld [vmem:[#allocation5 + $0x920] sm:$0xf]
        %v507 = vld [vmem:[#allocation5 + $0x928] sm:$0xf]
        %v508 = vld [vmem:[#allocation5 + $0x930] sm:$0xf]
        %v509 = vld [vmem:[#allocation5 + $0x938] sm:$0xf]
        %v510 = vld [vmem:[#allocation5 + $0x940] sm:$0xf]
        %v511 = vld [vmem:[#allocation5 + $0x948] sm:$0xf]
        %v512 = vld [vmem:[#allocation5 + $0x950] sm:$0xf]
        %v513 = vld [vmem:[#allocation5 + $0x958] sm:$0xf]
        %v514 = vld [vmem:[#allocation5 + $0x960] sm:$0xf]
        %v515 = vld [vmem:[#allocation5 + $0x968] sm:$0xf]
        %v516 = vld [vmem:[#allocation5 + $0x970] sm:$0xf]
        %v517 = vld [vmem:[#allocation5 + $0x978] sm:$0xf]
        %v518 = vld [vmem:[#allocation5 + $0x980] sm:$0xf]
        %v519 = vld [vmem:[#allocation5 + $0x988] sm:$0xf]
        %v520 = vld [vmem:[#allocation5 + $0x990] sm:$0xf]
        %v521 = vld [vmem:[#allocation5 + $0x998] sm:$0xf]
        %v522 = vld [vmem:[#allocation5 + $0x9a0] sm:$0xf]
        %v523 = vld [vmem:[#allocation5 + $0x9a8] sm:$0xf]
        %v524 = vld [vmem:[#allocation5 + $0x9b0] sm:$0xf]
        %v525 = vld [vmem:[#allocation5 + $0x9b8] sm:$0xf]
        %v526 = vld [vmem:[#allocation5 + $0x9c0] sm:$0xf]
        %v527 = vld [vmem:[#allocation5 + $0x9c8] sm:$0xf]
        %v528 = vld [vmem:[#allocation5 + $0x9d0] sm:$0xf]
        %v529 = vld [vmem:[#allocation5 + $0x9d8] sm:$0xf]
        %v530 = vld [vmem:[#allocation5 + $0x9e0] sm:$0xf]
        %v531 = vld [vmem:[#allocation5 + $0x9e8] sm:$0xf]
        %v532 = vld [vmem:[#allocation5 + $0x9f0] sm:$0xf]
        %v533 = vld [vmem:[#allocation5 + $0x9f8] sm:$0xf]
        %v534 = vld [vmem:[#allocation5 + $0xa00] sm:$0xf]
        %v535 = vld [vmem:[#allocation5 + $0xa08] sm:$0xf]
        %v536 = vld [vmem:[#allocation5 + $0xa10] sm:$0xf]
        %v537 = vld [vmem:[#allocation5 + $0xa18] sm:$0xf]
        %v538 = vld [vmem:[#allocation5 + $0xa20] sm:$0xf]
        %v539 = vld [vmem:[#allocation5 + $0xa28] sm:$0xf]
        %v540 = vld [vmem:[#allocation5 + $0xa30] sm:$0xf]
        %v541 = vld [vmem:[#allocation5 + $0xa38] sm:$0xf]
        %v542 = vld [vmem:[#allocation5 + $0xa40] sm:$0xf]
        %v543 = vld [vmem:[#allocation5 + $0xa48] sm:$0xf]
        %v544 = vld [vmem:[#allocation5 + $0xa50] sm:$0xf]
        %v545 = vld [vmem:[#allocation5 + $0xa58] sm:$0xf]
        %v546 = vld [vmem:[#allocation5 + $0xa60] sm:$0xf]
        %v547 = vld [vmem:[#allocation5 + $0xa68] sm:$0xf]
        %v548 = vld [vmem:[#allocation5 + $0xa70] sm:$0xf]
        %v549 = vld [vmem:[#allocation5 + $0xa78] sm:$0xf]
        %v550 = vld [vmem:[#allocation5 + $0xa80] sm:$0xf]
        %v551 = vld [vmem:[#allocation5 + $0xa88] sm:$0xf]
        %v552 = vld [vmem:[#allocation5 + $0xa90] sm:$0xf]
        %v553 = vld [vmem:[#allocation5 + $0xa98] sm:$0xf]
        %v554 = vld [vmem:[#allocation5 + $0xaa0] sm:$0xf]
        %v555 = vld [vmem:[#allocation5 + $0xaa8] sm:$0xf]
        %v556 = vld [vmem:[#allocation5 + $0xab0] sm:$0xf]
        %v557 = vld [vmem:[#allocation5 + $0xab8] sm:$0xf]
        %v558 = vld [vmem:[#allocation5 + $0xac0] sm:$0xf]
        %v559 = vld [vmem:[#allocation5 + $0xac8] sm:$0xf]
        %v560 = vld [vmem:[#allocation5 + $0xad0] sm:$0xf]
        %v561 = vld [vmem:[#allocation5 + $0xad8] sm:$0xf]
        %v562 = vld [vmem:[#allocation5 + $0xae0] sm:$0xf]
        %v563 = vld [vmem:[#allocation5 + $0xae8] sm:$0xf]
        %v564 = vld [vmem:[#allocation5 + $0xaf0] sm:$0xf]
        %v565 = vld [vmem:[#allocation5 + $0xaf8] sm:$0xf]
        %v566 = vld [vmem:[#allocation5 + $0xb00] sm:$0xf]
        %v567 = vld [vmem:[#allocation5 + $0xb08] sm:$0xf]
        %v568 = vld [vmem:[#allocation5 + $0xb10] sm:$0xf]
        %v569 = vld [vmem:[#allocation5 + $0xb18] sm:$0xf]
        %v570 = vld [vmem:[#allocation5 + $0xb20] sm:$0xf]
        %v571 = vld [vmem:[#allocation5 + $0xb28] sm:$0xf]
        %v572 = vld [vmem:[#allocation5 + $0xb30] sm:$0xf]
        %v573 = vld [vmem:[#allocation5 + $0xb38] sm:$0xf]
        %v574 = vld [vmem:[#allocation5 + $0xb40] sm:$0xf]
        %v575 = vld [vmem:[#allocation5 + $0xb48] sm:$0xf]
        %v576 = vld [vmem:[#allocation5 + $0xb50] sm:$0xf]
        %v577 = vld [vmem:[#allocation7] sm:$0xff]
        %v578 = vld [vmem:[#allocation7 + $0x8] sm:$0xff]
        %v579 = vld [vmem:[#allocation7 + $0x10] sm:$0xff]
        %v580 = vld [vmem:[#allocation7 + $0x18] sm:$0xff]
        %v581 = vld [vmem:[#allocation7 + $0x20] sm:$0xff]
        %v582 = vld [vmem:[#allocation7 + $0x28] sm:$0xff]
        %v583 = vld [vmem:[#allocation7 + $0x30] sm:$0xff]
        %v584 = vld [vmem:[#allocation7 + $0x38] sm:$0xff]
        %v585 = vld [vmem:[#allocation7 + $0x40] sm:$0xff]
        %v586 = vld [vmem:[#allocation7 + $0x48] sm:$0xff]
        %v587 = vld [vmem:[#allocation7 + $0x50] sm:$0xff]
        %v588 = vld [vmem:[#allocation7 + $0x58] sm:$0xff]
        %v589 = vld [vmem:[#allocation7 + $0x60] sm:$0xff]
        %v590 = vld [vmem:[#allocation7 + $0x68] sm:$0xff]
        %v591 = vld [vmem:[#allocation7 + $0x70] sm:$0xff]
        %v592 = vld [vmem:[#allocation7 + $0x78] sm:$0x1]
        %v609 = vlaneseq
        %v610 = vshrl.u32 %v609, 7
        %v611 = vsub.s32 0, %v610
        %v612 = vrot.slane %v577, %v611
        %v613 = vlaneseq
        %v614 = vshrl.u32 %v613, 7
        %v615 = vsub.s32 1, %v614
        %v616 = vrot.slane %v577, %v615
        %v617 = vlaneseq
        %v618 = vshrl.u32 %v617, 7
        %v619 = vsub.s32 2, %v618
        %v620 = vrot.slane %v577, %v619
        %v621 = vlaneseq
        %v622 = vshrl.u32 %v621, 7
        %v623 = vsub.s32 3, %v622
        %v624 = vrot.slane %v577, %v623
        %v625 = vlaneseq
        %v626 = vshrl.u32 %v625, 7
        %v627 = vsub.s32 4, %v626
        %v628 = vrot.slane %v577, %v627
        %v629 = vlaneseq
        %v630 = vshrl.u32 %v629, 7
        %v631 = vsub.s32 5, %v630
        %v632 = vrot.slane %v577, %v631
        %v633 = vlaneseq
        %v634 = vshrl.u32 %v633, 7
        %v635 = vsub.s32 6, %v634
        %v636 = vrot.slane %v577, %v635
        %v637 = vlaneseq
        %v638 = vshrl.u32 %v637, 7
        %v639 = vsub.s32 7, %v638
        %v640 = vrot.slane %v577, %v639
        %v641 = vlaneseq
        %v642 = vshrl.u32 %v641, 7
        %v643 = vsub.s32 0, %v642
        %v644 = vrot.slane %v578, %v643
        %v645 = vlaneseq
        %v646 = vshrl.u32 %v645, 7
        %v647 = vsub.s32 1, %v646
        %v648 = vrot.slane %v578, %v647
        %v649 = vlaneseq
        %v650 = vshrl.u32 %v649, 7
        %v651 = vsub.s32 2, %v650
        %v652 = vrot.slane %v578, %v651
        %v653 = vlaneseq
        %v654 = vshrl.u32 %v653, 7
        %v655 = vsub.s32 3, %v654
        %v656 = vrot.slane %v578, %v655
        %v657 = vlaneseq
        %v658 = vshrl.u32 %v657, 7
        %v659 = vsub.s32 4, %v658
        %v660 = vrot.slane %v578, %v659
        %v661 = vlaneseq
        %v662 = vshrl.u32 %v661, 7
        %v663 = vsub.s32 5, %v662
        %v664 = vrot.slane %v578, %v663
        %v665 = vlaneseq
        %v666 = vshrl.u32 %v665, 7
        %v667 = vsub.s32 6, %v666
        %v668 = vrot.slane %v578, %v667
        %v669 = vlaneseq
        %v670 = vshrl.u32 %v669, 7
        %v671 = vsub.s32 7, %v670
        %v672 = vrot.slane %v578, %v671
        %v673 = vlaneseq
        %v674 = vshrl.u32 %v673, 7
        %v675 = vsub.s32 0, %v674
        %v676 = vrot.slane %v579, %v675
        %v677 = vlaneseq
        %v678 = vshrl.u32 %v677, 7
        %v679 = vsub.s32 1, %v678
        %v680 = vrot.slane %v579, %v679
        %v681 = vlaneseq
        %v682 = vshrl.u32 %v681, 7
        %v683 = vsub.s32 2, %v682
        %v684 = vrot.slane %v579, %v683
        %v685 = vlaneseq
        %v686 = vshrl.u32 %v685, 7
        %v687 = vsub.s32 3, %v686
        %v688 = vrot.slane %v579, %v687
        %v689 = vlaneseq
        %v690 = vshrl.u32 %v689, 7
        %v691 = vsub.s32 4, %v690
        %v692 = vrot.slane %v579, %v691
        %v693 = vlaneseq
        %v694 = vshrl.u32 %v693, 7
        %v695 = vsub.s32 5, %v694
        %v696 = vrot.slane %v579, %v695
        %v697 = vlaneseq
        %v698 = vshrl.u32 %v697, 7
        %v699 = vsub.s32 6, %v698
        %v700 = vrot.slane %v579, %v699
        %v701 = vlaneseq
        %v702 = vshrl.u32 %v701, 7
        %v703 = vsub.s32 7, %v702
        %v704 = vrot.slane %v579, %v703
        %v705 = vlaneseq
        %v706 = vshrl.u32 %v705, 7
        %v707 = vsub.s32 0, %v706
        %v708 = vrot.slane %v580, %v707
        %v709 = vlaneseq
        %v710 = vshrl.u32 %v709, 7
        %v711 = vsub.s32 1, %v710
        %v712 = vrot.slane %v580, %v711
        %v713 = vlaneseq
        %v714 = vshrl.u32 %v713, 7
        %v715 = vsub.s32 2, %v714
        %v716 = vrot.slane %v580, %v715
        %v717 = vlaneseq
        %v718 = vshrl.u32 %v717, 7
        %v719 = vsub.s32 3, %v718
        %v720 = vrot.slane %v580, %v719
        %v721 = vlaneseq
        %v722 = vshrl.u32 %v721, 7
        %v723 = vsub.s32 4, %v722
        %v724 = vrot.slane %v580, %v723
        %v725 = vlaneseq
        %v726 = vshrl.u32 %v725, 7
        %v727 = vsub.s32 5, %v726
        %v728 = vrot.slane %v580, %v727
        %v729 = vlaneseq
        %v730 = vshrl.u32 %v729, 7
        %v731 = vsub.s32 6, %v730
        %v732 = vrot.slane %v580, %v731
        %v733 = vlaneseq
        %v734 = vshrl.u32 %v733, 7
        %v735 = vsub.s32 7, %v734
        %v736 = vrot.slane %v580, %v735
        %v737 = vlaneseq
        %v738 = vshrl.u32 %v737, 7
        %v739 = vsub.s32 0, %v738
        %v740 = vrot.slane %v581, %v739
        %v741 = vlaneseq
        %v742 = vshrl.u32 %v741, 7
        %v743 = vsub.s32 1, %v742
        %v744 = vrot.slane %v581, %v743
        %v745 = vlaneseq
        %v746 = vshrl.u32 %v745, 7
        %v747 = vsub.s32 2, %v746
        %v748 = vrot.slane %v581, %v747
        %v749 = vlaneseq
        %v750 = vshrl.u32 %v749, 7
        %v751 = vsub.s32 3, %v750
        %v752 = vrot.slane %v581, %v751
        %v753 = vlaneseq
        %v754 = vshrl.u32 %v753, 7
        %v755 = vsub.s32 4, %v754
        %v756 = vrot.slane %v581, %v755
        %v757 = vlaneseq
        %v758 = vshrl.u32 %v757, 7
        %v759 = vsub.s32 5, %v758
        %v760 = vrot.slane %v581, %v759
        %v761 = vlaneseq
        %v762 = vshrl.u32 %v761, 7
        %v763 = vsub.s32 6, %v762
        %v764 = vrot.slane %v581, %v763
        %v765 = vlaneseq
        %v766 = vshrl.u32 %v765, 7
        %v767 = vsub.s32 7, %v766
        %v768 = vrot.slane %v581, %v767
        %v769 = vlaneseq
        %v770 = vshrl.u32 %v769, 7
        %v771 = vsub.s32 0, %v770
        %v772 = vrot.slane %v582, %v771
        %v773 = vlaneseq
        %v774 = vshrl.u32 %v773, 7
        %v775 = vsub.s32 1, %v774
        %v776 = vrot.slane %v582, %v775
        %v777 = vlaneseq
        %v778 = vshrl.u32 %v777, 7
        %v779 = vsub.s32 2, %v778
        %v780 = vrot.slane %v582, %v779
        %v781 = vlaneseq
        %v782 = vshrl.u32 %v781, 7
        %v783 = vsub.s32 3, %v782
        %v784 = vrot.slane %v582, %v783
        %v785 = vlaneseq
        %v786 = vshrl.u32 %v785, 7
        %v787 = vsub.s32 4, %v786
        %v788 = vrot.slane %v582, %v787
        %v789 = vlaneseq
        %v790 = vshrl.u32 %v789, 7
        %v791 = vsub.s32 5, %v790
        %v792 = vrot.slane %v582, %v791
        %v793 = vlaneseq
        %v794 = vshrl.u32 %v793, 7
        %v795 = vsub.s32 6, %v794
        %v796 = vrot.slane %v582, %v795
        %v797 = vlaneseq
        %v798 = vshrl.u32 %v797, 7
        %v799 = vsub.s32 7, %v798
        %v800 = vrot.slane %v582, %v799
        %v801 = vlaneseq
        %v802 = vshrl.u32 %v801, 7
        %v803 = vsub.s32 0, %v802
        %v804 = vrot.slane %v583, %v803
        %v805 = vlaneseq
        %v806 = vshrl.u32 %v805, 7
        %v807 = vsub.s32 1, %v806
        %v808 = vrot.slane %v583, %v807
        %v809 = vlaneseq
        %v810 = vshrl.u32 %v809, 7
        %v811 = vsub.s32 2, %v810
        %v812 = vrot.slane %v583, %v811
        %v813 = vlaneseq
        %v814 = vshrl.u32 %v813, 7
        %v815 = vsub.s32 3, %v814
        %v816 = vrot.slane %v583, %v815
        %v817 = vlaneseq
        %v818 = vshrl.u32 %v817, 7
        %v819 = vsub.s32 4, %v818
        %v820 = vrot.slane %v583, %v819
        %v821 = vlaneseq
        %v822 = vshrl.u32 %v821, 7
        %v823 = vsub.s32 5, %v822
        %v824 = vrot.slane %v583, %v823
        %v825 = vlaneseq
        %v826 = vshrl.u32 %v825, 7
        %v827 = vsub.s32 6, %v826
        %v828 = vrot.slane %v583, %v827
        %v829 = vlaneseq
        %v830 = vshrl.u32 %v829, 7
        %v831 = vsub.s32 7, %v830
        %v832 = vrot.slane %v583, %v831
        %v833 = vlaneseq
        %v834 = vshrl.u32 %v833, 7
        %v835 = vsub.s32 0, %v834
        %v836 = vrot.slane %v584, %v835
        %v837 = vlaneseq
        %v838 = vshrl.u32 %v837, 7
        %v839 = vsub.s32 1, %v838
        %v840 = vrot.slane %v584, %v839
        %v841 = vlaneseq
        %v842 = vshrl.u32 %v841, 7
        %v843 = vsub.s32 2, %v842
        %v844 = vrot.slane %v584, %v843
        %v845 = vlaneseq
        %v846 = vshrl.u32 %v845, 7
        %v847 = vsub.s32 3, %v846
        %v848 = vrot.slane %v584, %v847
        %v849 = vlaneseq
        %v850 = vshrl.u32 %v849, 7
        %v851 = vsub.s32 4, %v850
        %v852 = vrot.slane %v584, %v851
        %v853 = vlaneseq
        %v854 = vshrl.u32 %v853, 7
        %v855 = vsub.s32 5, %v854
        %v856 = vrot.slane %v584, %v855
        %v857 = vlaneseq
        %v858 = vshrl.u32 %v857, 7
        %v859 = vsub.s32 6, %v858
        %v860 = vrot.slane %v584, %v859
        %v861 = vlaneseq
        %v862 = vshrl.u32 %v861, 7
        %v863 = vsub.s32 7, %v862
        %v864 = vrot.slane %v584, %v863
        %v865 = vlaneseq
        %v866 = vshrl.u32 %v865, 7
        %v867 = vsub.s32 0, %v866
        %v868 = vrot.slane %v585, %v867
        %v869 = vlaneseq
        %v870 = vshrl.u32 %v869, 7
        %v871 = vsub.s32 1, %v870
        %v872 = vrot.slane %v585, %v871
        %v873 = vlaneseq
        %v874 = vshrl.u32 %v873, 7
        %v875 = vsub.s32 2, %v874
        %v876 = vrot.slane %v585, %v875
        %v877 = vlaneseq
        %v878 = vshrl.u32 %v877, 7
        %v879 = vsub.s32 3, %v878
        %v880 = vrot.slane %v585, %v879
        %v881 = vlaneseq
        %v882 = vshrl.u32 %v881, 7
        %v883 = vsub.s32 4, %v882
        %v884 = vrot.slane %v585, %v883
        %v885 = vlaneseq
        %v886 = vshrl.u32 %v885, 7
        %v887 = vsub.s32 5, %v886
        %v888 = vrot.slane %v585, %v887
        %v889 = vlaneseq
        %v890 = vshrl.u32 %v889, 7
        %v891 = vsub.s32 6, %v890
        %v892 = vrot.slane %v585, %v891
        %v893 = vlaneseq
        %v894 = vshrl.u32 %v893, 7
        %v895 = vsub.s32 7, %v894
        %v896 = vrot.slane %v585, %v895
        %v897 = vlaneseq
        %v898 = vshrl.u32 %v897, 7
        %v899 = vsub.s32 0, %v898
        %v900 = vrot.slane %v586, %v899
        %v901 = vlaneseq
        %v902 = vshrl.u32 %v901, 7
        %v903 = vsub.s32 1, %v902
        %v904 = vrot.slane %v586, %v903
        %v905 = vlaneseq
        %v906 = vshrl.u32 %v905, 7
        %v907 = vsub.s32 2, %v906
        %v908 = vrot.slane %v586, %v907
        %v909 = vlaneseq
        %v910 = vshrl.u32 %v909, 7
        %v911 = vsub.s32 3, %v910
        %v912 = vrot.slane %v586, %v911
        %v913 = vlaneseq
        %v914 = vshrl.u32 %v913, 7
        %v915 = vsub.s32 4, %v914
        %v916 = vrot.slane %v586, %v915
        %v917 = vlaneseq
        %v918 = vshrl.u32 %v917, 7
        %v919 = vsub.s32 5, %v918
        %v920 = vrot.slane %v586, %v919
        %v921 = vlaneseq
        %v922 = vshrl.u32 %v921, 7
        %v923 = vsub.s32 6, %v922
        %v924 = vrot.slane %v586, %v923
        %v925 = vlaneseq
        %v926 = vshrl.u32 %v925, 7
        %v927 = vsub.s32 7, %v926
        %v928 = vrot.slane %v586, %v927
        %v929 = vlaneseq
        %v930 = vshrl.u32 %v929, 7
        %v931 = vsub.s32 0, %v930
        %v932 = vrot.slane %v587, %v931
        %v933 = vlaneseq
        %v934 = vshrl.u32 %v933, 7
        %v935 = vsub.s32 1, %v934
        %v936 = vrot.slane %v587, %v935
        %v937 = vlaneseq
        %v938 = vshrl.u32 %v937, 7
        %v939 = vsub.s32 2, %v938
        %v940 = vrot.slane %v587, %v939
        %v941 = vlaneseq
        %v942 = vshrl.u32 %v941, 7
        %v943 = vsub.s32 3, %v942
        %v944 = vrot.slane %v587, %v943
        %v945 = vlaneseq
        %v946 = vshrl.u32 %v945, 7
        %v947 = vsub.s32 4, %v946
        %v948 = vrot.slane %v587, %v947
        %v949 = vlaneseq
        %v950 = vshrl.u32 %v949, 7
        %v951 = vsub.s32 5, %v950
        %v952 = vrot.slane %v587, %v951
        %v953 = vlaneseq
        %v954 = vshrl.u32 %v953, 7
        %v955 = vsub.s32 6, %v954
        %v956 = vrot.slane %v587, %v955
        %v957 = vlaneseq
        %v958 = vshrl.u32 %v957, 7
        %v959 = vsub.s32 7, %v958
        %v960 = vrot.slane %v587, %v959
        %v961 = vlaneseq
        %v962 = vshrl.u32 %v961, 7
        %v963 = vsub.s32 0, %v962
        %v964 = vrot.slane %v588, %v963
        %v965 = vlaneseq
        %v966 = vshrl.u32 %v965, 7
        %v967 = vsub.s32 1, %v966
        %v968 = vrot.slane %v588, %v967
        %v969 = vlaneseq
        %v970 = vshrl.u32 %v969, 7
        %v971 = vsub.s32 2, %v970
        %v972 = vrot.slane %v588, %v971
        %v973 = vlaneseq
        %v974 = vshrl.u32 %v973, 7
        %v975 = vsub.s32 3, %v974
        %v976 = vrot.slane %v588, %v975
        %v977 = vlaneseq
        %v978 = vshrl.u32 %v977, 7
        %v979 = vsub.s32 4, %v978
        %v980 = vrot.slane %v588, %v979
        %v981 = vlaneseq
        %v982 = vshrl.u32 %v981, 7
        %v983 = vsub.s32 5, %v982
        %v984 = vrot.slane %v588, %v983
        %v985 = vlaneseq
        %v986 = vshrl.u32 %v985, 7
        %v987 = vsub.s32 6, %v986
        %v988 = vrot.slane %v588, %v987
        %v989 = vlaneseq
        %v990 = vshrl.u32 %v989, 7
        %v991 = vsub.s32 7, %v990
        %v992 = vrot.slane %v588, %v991
        %v993 = vlaneseq
        %v994 = vshrl.u32 %v993, 7
        %v995 = vsub.s32 0, %v994
        %v996 = vrot.slane %v589, %v995
        %v997 = vlaneseq
        %v998 = vshrl.u32 %v997, 7
        %v999 = vsub.s32 1, %v998
        %v1000 = vrot.slane %v589, %v999
        %v1001 = vlaneseq
        %v1002 = vshrl.u32 %v1001, 7
        %v1003 = vsub.s32 2, %v1002
        %v1004 = vrot.slane %v589, %v1003
        %v1005 = vlaneseq
        %v1006 = vshrl.u32 %v1005, 7
        %v1007 = vsub.s32 3, %v1006
        %v1008 = vrot.slane %v589, %v1007
        %v1009 = vlaneseq
        %v1010 = vshrl.u32 %v1009, 7
        %v1011 = vsub.s32 4, %v1010
        %v1012 = vrot.slane %v589, %v1011
        %v1013 = vlaneseq
        %v1014 = vshrl.u32 %v1013, 7
        %v1015 = vsub.s32 5, %v1014
        %v1016 = vrot.slane %v589, %v1015
        %v1017 = vlaneseq
        %v1018 = vshrl.u32 %v1017, 7
        %v1019 = vsub.s32 6, %v1018
        %v1020 = vrot.slane %v589, %v1019
        %v1021 = vlaneseq
        %v1022 = vshrl.u32 %v1021, 7
        %v1023 = vsub.s32 7, %v1022
        %v1024 = vrot.slane %v589, %v1023
        %v1025 = vlaneseq
        %v1026 = vshrl.u32 %v1025, 7
        %v1027 = vsub.s32 0, %v1026
        %v1028 = vrot.slane %v590, %v1027
        %v1029 = vlaneseq
        %v1030 = vshrl.u32 %v1029, 7
        %v1031 = vsub.s32 1, %v1030
        %v1032 = vrot.slane %v590, %v1031
        %v1033 = vlaneseq
        %v1034 = vshrl.u32 %v1033, 7
        %v1035 = vsub.s32 2, %v1034
        %v1036 = vrot.slane %v590, %v1035
        %v1037 = vlaneseq
        %v1038 = vshrl.u32 %v1037, 7
        %v1039 = vsub.s32 3, %v1038
        %v1040 = vrot.slane %v590, %v1039
        %v1041 = vlaneseq
        %v1042 = vshrl.u32 %v1041, 7
        %v1043 = vsub.s32 4, %v1042
        %v1044 = vrot.slane %v590, %v1043
        %v1045 = vlaneseq
        %v1046 = vshrl.u32 %v1045, 7
        %v1047 = vsub.s32 5, %v1046
        %v1048 = vrot.slane %v590, %v1047
        %v1049 = vlaneseq
        %v1050 = vshrl.u32 %v1049, 7
        %v1051 = vsub.s32 6, %v1050
        %v1052 = vrot.slane %v590, %v1051
        %v1053 = vlaneseq
        %v1054 = vshrl.u32 %v1053, 7
        %v1055 = vsub.s32 7, %v1054
        %v1056 = vrot.slane %v590, %v1055
        %v1057 = vlaneseq
        %v1058 = vshrl.u32 %v1057, 7
        %v1059 = vsub.s32 0, %v1058
        %v1060 = vrot.slane %v591, %v1059
        %v1061 = vlaneseq
        %v1062 = vshrl.u32 %v1061, 7
        %v1063 = vsub.s32 1, %v1062
        %v1064 = vrot.slane %v591, %v1063
        %v1065 = vlaneseq
        %v1066 = vshrl.u32 %v1065, 7
        %v1067 = vsub.s32 2, %v1066
        %v1068 = vrot.slane %v591, %v1067
        %v1069 = vlaneseq
        %v1070 = vshrl.u32 %v1069, 7
        %v1071 = vsub.s32 3, %v1070
        %v1072 = vrot.slane %v591, %v1071
        %v1073 = vlaneseq
        %v1074 = vshrl.u32 %v1073, 7
        %v1075 = vsub.s32 4, %v1074
        %v1076 = vrot.slane %v591, %v1075
        %v1077 = vlaneseq
        %v1078 = vshrl.u32 %v1077, 7
        %v1079 = vsub.s32 5, %v1078
        %v1080 = vrot.slane %v591, %v1079
        %v1081 = vlaneseq
        %v1082 = vshrl.u32 %v1081, 7
        %v1083 = vsub.s32 6, %v1082
        %v1084 = vrot.slane %v591, %v1083
        %v1085 = vlaneseq
        %v1086 = vshrl.u32 %v1085, 7
        %v1087 = vsub.s32 7, %v1086
        %v1088 = vrot.slane %v591, %v1087
        %v1089 = vlaneseq
        %v1090 = vshrl.u32 %v1089, 7
        %v1091 = vsub.s32 0, %v1090
        %v1092 = vrot.slane %v592, %v1091
        %vm1214 = vcmask 162816
        %v1216 = vsel %vm1214, %v213, 0
        %vm1218 = vcmask 1043456
        %v1220 = vsel %vm1218, %v456, 0
        %v1223 = vsel %vm1218, %v457, 0
        %v1226 = vsel %vm1218, %v458, 0
        %v1229 = vsel %vm1218, %v459, 0
        %v1232 = vsel %vm1218, %v460, 0
        %v1235 = vsel %vm1218, %v461, 0
        %v1238 = vsel %vm1218, %v462, 0
        %v1241 = vsel %vm1218, %v463, 0
        %v1244 = vsel %vm1218, %v464, 0
        %v1247 = vsel %vm1218, %v465, 0
        %v1250 = vsel %vm1218, %v466, 0
        %v1253 = vsel %vm1218, %v467, 0
        %v1256 = vsel %vm1218, %v468, 0
        %v1259 = vsel %vm1218, %v469, 0
        %v1262 = vsel %vm1218, %v470, 0
        %v1265 = vsel %vm1218, %v471, 0
        %v1268 = vsel %vm1218, %v472, 0
        %v1271 = vsel %vm1218, %v473, 0
        %v1274 = vsel %vm1218, %v474, 0
        %v1277 = vsel %vm1218, %v475, 0
        %v1280 = vsel %vm1218, %v476, 0
        %v1283 = vsel %vm1218, %v477, 0
        %v1286 = vsel %vm1218, %v478, 0
        %v1289 = vsel %vm1218, %v479, 0
        %v1292 = vsel %vm1218, %v480, 0
        %v1295 = vsel %vm1218, %v481, 0
        %v1298 = vsel %vm1218, %v482, 0
        %v1301 = vsel %vm1218, %v483, 0
        %v1304 = vsel %vm1218, %v484, 0
        %v1307 = vsel %vm1218, %v485, 0
        %v1310 = vsel %vm1218, %v486, 0
        %v1313 = vsel %vm1218, %v487, 0
        %v1316 = vsel %vm1218, %v488, 0
        %v1319 = vsel %vm1218, %v489, 0
        %v1322 = vsel %vm1218, %v490, 0
        %v1325 = vsel %vm1218, %v491, 0
        %v1328 = vsel %vm1218, %v492, 0
        %v1331 = vsel %vm1218, %v493, 0
        %v1334 = vsel %vm1218, %v494, 0
        %v1337 = vsel %vm1218, %v495, 0
        %v1340 = vsel %vm1218, %v496, 0
        %v1343 = vsel %vm1218, %v497, 0
        %v1346 = vsel %vm1218, %v498, 0
        %v1349 = vsel %vm1218, %v499, 0
        %v1352 = vsel %vm1218, %v500, 0
        %v1355 = vsel %vm1218, %v501, 0
        %v1358 = vsel %vm1218, %v502, 0
        %v1361 = vsel %vm1218, %v503, 0
        %v1364 = vsel %vm1218, %v504, 0
        %v1367 = vsel %vm1218, %v505, 0
        %v1370 = vsel %vm1218, %v506, 0
        %v1373 = vsel %vm1218, %v507, 0
        %v1376 = vsel %vm1218, %v508, 0
        %v1379 = vsel %vm1218, %v509, 0
        %v1382 = vsel %vm1218, %v510, 0
        %v1385 = vsel %vm1218, %v511, 0
        %v1388 = vsel %vm1218, %v512, 0
        %v1391 = vsel %vm1218, %v513, 0
        %v1394 = vsel %vm1218, %v514, 0
        %v1397 = vsel %vm1218, %v515, 0
        %v1400 = vsel %vm1218, %v516, 0
        %v1403 = vsel %vm1218, %v517, 0
        %v1406 = vsel %vm1218, %v518, 0
        %v1409 = vsel %vm1218, %v519, 0
        %v1412 = vsel %vm1218, %v520, 0
        %v1415 = vsel %vm1218, %v521, 0
        %v1418 = vsel %vm1218, %v522, 0
        %v1421 = vsel %vm1218, %v523, 0
        %v1424 = vsel %vm1218, %v524, 0
        %v1427 = vsel %vm1218, %v525, 0
        %v1430 = vsel %vm1218, %v526, 0
        %v1433 = vsel %vm1218, %v527, 0
        %v1436 = vsel %vm1218, %v528, 0
        %v1439 = vsel %vm1218, %v529, 0
        %v1442 = vsel %vm1218, %v530, 0
        %v1445 = vsel %vm1218, %v531, 0
        %v1448 = vsel %vm1218, %v532, 0
        %v1451 = vsel %vm1218, %v533, 0
        %v1454 = vsel %vm1218, %v534, 0
        %v1457 = vsel %vm1218, %v535, 0
        %v1460 = vsel %vm1218, %v536, 0
        %v1463 = vsel %vm1218, %v537, 0
        %v1466 = vsel %vm1218, %v538, 0
        %v1469 = vsel %vm1218, %v539, 0
        %v1472 = vsel %vm1218, %v540, 0
        %v1475 = vsel %vm1218, %v541, 0
        %v1478 = vsel %vm1218, %v542, 0
        %v1481 = vsel %vm1218, %v543, 0
        %v1484 = vsel %vm1218, %v544, 0
        %v1487 = vsel %vm1218, %v545, 0
        %v1490 = vsel %vm1218, %v546, 0
        %v1493 = vsel %vm1218, %v547, 0
        %v1496 = vsel %vm1218, %v548, 0
        %v1499 = vsel %vm1218, %v549, 0
        %v1502 = vsel %vm1218, %v550, 0
        %v1505 = vsel %vm1218, %v551, 0
        %v1508 = vsel %vm1218, %v552, 0
        %v1511 = vsel %vm1218, %v553, 0
        %v1514 = vsel %vm1218, %v554, 0
        %v1517 = vsel %vm1218, %v555, 0
        %v1520 = vsel %vm1218, %v556, 0
        %v1523 = vsel %vm1218, %v557, 0
        %v1526 = vsel %vm1218, %v558, 0
        %v1529 = vsel %vm1218, %v559, 0
        %v1532 = vsel %vm1218, %v560, 0
        %v1535 = vsel %vm1218, %v561, 0
        %v1538 = vsel %vm1218, %v562, 0
        %v1541 = vsel %vm1218, %v563, 0
        %v1544 = vsel %vm1218, %v564, 0
        %v1547 = vsel %vm1218, %v565, 0
        %v1550 = vsel %vm1218, %v566, 0
        %v1553 = vsel %vm1218, %v567, 0
        %v1556 = vsel %vm1218, %v568, 0
        %v1559 = vsel %vm1218, %v569, 0
        %v1562 = vsel %vm1218, %v570, 0
        %v1565 = vsel %vm1218, %v571, 0
        %v1568 = vsel %vm1218, %v572, 0
        %v1571 = vsel %vm1218, %v573, 0
        %v1574 = vsel %vm1218, %v574, 0
        %v1577 = vsel %vm1218, %v575, 0
        %v1580 = vsel %vm1218, %v576, 0
        %1582 = vmatprep.subr.mxu0 %v215
        %1583 = vmatpush1.msra.mxu0 %v214
        %1584 = vmatprep.subr.mxu0 %v336
        %1585 = vmatpush1.msra.mxu0 %v335
        %1586 = vmatprep.subr.mxu0 %v1223
        %1587 = vmatpush1.msra.mxu0 %v1220
        %1588 = vmatprep.subr.mxu0 0.0
        %1589 = vmatpush1.msra.mxu0 0.0
        %1590 = vmatprep.subr.mxu0 0.0
        %1591 = vmatpush1.msra.mxu0 0.0
        %1592 = vmatprep.subr.mxu0 0.0
        %1593 = vmatpush1.msra.mxu0 0.0
        %1594 = vmatprep.subr.mxu0 0.0
        %1595 = vmatpush1.msra.mxu0 0.0
        %1596 = vmatprep.subr.mxu0 0.0
        %1597 = vmatpush1.msra.mxu0 0.0
        %1598 = vmatprep.subr.mxu0 0.0
        %1599 = vmatpush1.msra.mxu0 0.0
        %1600 = vmatprep.subr.mxu0 0.0
        %1601 = vmatpush1.msra.mxu0 0.0
        %1602 = vmatprep.subr.mxu0 0.0
        %1603 = vmatpush1.msra.mxu0 0.0
        %1604 = vmatprep.subr.mxu0 0.0
        %1605 = vmatpush1.msra.mxu0 0.0
        %1606 = vmatprep.subr.mxu0 0.0
        %1607 = vmatpush1.msra.mxu0 0.0
        %1608 = vmatprep.subr.mxu0 0.0
        %1609 = vmatpush1.msra.mxu0 0.0
        %1610 = vmatprep.subr.mxu0 0.0
        %1611 = vmatpush1.msra.mxu0 0.0
        %1612 = vmatprep.subr.mxu0 0.0
        %1613 = vmatpush1.msra.mxu0 0.0
        %1614 = vmatprep.subr.mxu0 0.0
        %1615 = vmatpush1.msra.mxu0 0.0
        %1616 = vmatprep.subr.mxu0 0.0
        %1617 = vmatpush1.msra.mxu0 0.0
        %1618 = vmatprep.subr.mxu0 0.0
        %1619 = vmatpush1.msra.mxu0 0.0
        %1620 = vmatprep.subr.mxu0 0.0
        %1621 = vmatpush1.msra.mxu0 0.0
        %1622 = vmatprep.subr.mxu0 0.0
        %1623 = vmatpush1.msra.mxu0 0.0
        %1624 = vmatprep.subr.mxu0 0.0
        %1625 = vmatpush1.msra.mxu0 0.0
        %1626 = vmatprep.subr.mxu0 0.0
        %1627 = vmatpush1.msra.mxu0 0.0
        %1628 = vmatprep.subr.mxu0 0.0
        %1629 = vmatpush1.msra.mxu0 0.0
        %1630 = vmatprep.subr.mxu0 0.0
        %1631 = vmatpush1.msra.mxu0 0.0
        %1632 = vmatprep.subr.mxu0 0.0
        %1633 = vmatpush1.msra.mxu0 0.0
        %1634 = vmatprep.subr.mxu0 0.0
        %1635 = vmatpush1.msra.mxu0 0.0
        %1636 = vmatprep.subr.mxu0 0.0
        %1637 = vmatpush1.msra.mxu0 0.0
        %1638 = vmatprep.subr.mxu0 0.0
        %1639 = vmatpush1.msra.mxu0 0.0
        %1640 = vmatprep.subr.mxu0 0.0
        %1641 = vmatpush1.msra.mxu0 0.0
        %1642 = vmatprep.subr.mxu0 0.0
        %1643 = vmatpush1.msra.mxu0 0.0
        %1644 = vmatprep.subr.mxu0 0.0
        %1645 = vmatpush1.msra.mxu0 0.0
        %1646 = vmatprep.mubr.f32.mxu0 0.0
        %1647 = vmatmul.mubr.f32.gmra.mrb[0].mxu0 %v1216
        %v1648 = vpop.f32.mrb[0].mxu0
        %v1649 = vadd.f32 %v612, %v1648
        %v1650 = vpop.f32.mrb[0].mxu0
        %v1651 = vadd.f32 %v616, %v1650
        %1652 = vdwg.mxu0
        %1653 = vmatprep.subr.mxu0 %v217
        %1654 = vmatpush1.msra.mxu0 %v216
        %1655 = vmatprep.subr.mxu0 %v338
        %1656 = vmatpush1.msra.mxu0 %v337
        %1657 = vmatprep.subr.mxu0 %v1229
        %1658 = vmatpush1.msra.mxu0 %v1226
        %1659 = vmatprep.subr.mxu0 0.0
        %1660 = vmatpush1.msra.mxu0 0.0
        %1661 = vmatprep.subr.mxu0 0.0
        %1662 = vmatpush1.msra.mxu0 0.0
        %1663 = vmatprep.subr.mxu0 0.0
        %1664 = vmatpush1.msra.mxu0 0.0
        %1665 = vmatprep.subr.mxu0 0.0
        %1666 = vmatpush1.msra.mxu0 0.0
        %1667 = vmatprep.subr.mxu0 0.0
        %1668 = vmatpush1.msra.mxu0 0.0
        %1669 = vmatprep.subr.mxu0 0.0
        %1670 = vmatpush1.msra.mxu0 0.0
        %1671 = vmatprep.subr.mxu0 0.0
        %1672 = vmatpush1.msra.mxu0 0.0
        %1673 = vmatprep.subr.mxu0 0.0
        %1674 = vmatpush1.msra.mxu0 0.0
        %1675 = vmatprep.subr.mxu0 0.0
        %1676 = vmatpush1.msra.mxu0 0.0
        %1677 = vmatprep.subr.mxu0 0.0
        %1678 = vmatpush1.msra.mxu0 0.0
        %1679 = vmatprep.subr.mxu0 0.0
        %1680 = vmatpush1.msra.mxu0 0.0
        %1681 = vmatprep.subr.mxu0 0.0
        %1682 = vmatpush1.msra.mxu0 0.0
        %1683 = vmatprep.subr.mxu0 0.0
        %1684 = vmatpush1.msra.mxu0 0.0
        %1685 = vmatprep.subr.mxu0 0.0
        %1686 = vmatpush1.msra.mxu0 0.0
        %1687 = vmatprep.subr.mxu0 0.0
        %1688 = vmatpush1.msra.mxu0 0.0
        %1689 = vmatprep.subr.mxu0 0.0
        %1690 = vmatpush1.msra.mxu0 0.0
        %1691 = vmatprep.subr.mxu0 0.0
        %1692 = vmatpush1.msra.mxu0 0.0
        %1693 = vmatprep.subr.mxu0 0.0
        %1694 = vmatpush1.msra.mxu0 0.0
        %1695 = vmatprep.subr.mxu0 0.0
        %1696 = vmatpush1.msra.mxu0 0.0
        %1697 = vmatprep.subr.mxu0 0.0
        %1698 = vmatpush1.msra.mxu0 0.0
        %1699 = vmatprep.subr.mxu0 0.0
        %1700 = vmatpush1.msra.mxu0 0.0
        %1701 = vmatprep.subr.mxu0 0.0
        %1702 = vmatpush1.msra.mxu0 0.0
        %1703 = vmatprep.subr.mxu0 0.0
        %1704 = vmatpush1.msra.mxu0 0.0
        %1705 = vmatprep.subr.mxu0 0.0
        %1706 = vmatpush1.msra.mxu0 0.0
        %1707 = vmatprep.subr.mxu0 0.0
        %1708 = vmatpush1.msra.mxu0 0.0
        %1709 = vmatprep.subr.mxu0 0.0
        %1710 = vmatpush1.msra.mxu0 0.0
        %1711 = vmatprep.subr.mxu0 0.0
        %1712 = vmatpush1.msra.mxu0 0.0
        %1713 = vmatprep.subr.mxu0 0.0
        %1714 = vmatpush1.msra.mxu0 0.0
        %1715 = vmatprep.subr.mxu0 0.0
        %1716 = vmatpush1.msra.mxu0 0.0
        %1717 = vmatprep.mubr.f32.mxu0 0.0
        %1718 = vmatmul.mubr.f32.gmra.mrb[0].mxu0 %v1216
        %v1719 = vpop.f32.mrb[0].mxu0
        %v1720 = vadd.f32 %v620, %v1719
        %v1721 = vpop.f32.mrb[0].mxu0
        %v1722 = vadd.f32 %v624, %v1721
        %1723 = vdwg.mxu0
        %1724 = vmatprep.subr.mxu0 %v219
        %1725 = vmatpush1.msra.mxu0 %v218
        %1726 = vmatprep.subr.mxu0 %v340
        %1727 = vmatpush1.msra.mxu0 %v339
        %1728 = vmatprep.subr.mxu0 %v1235
        %1729 = vmatpush1.msra.mxu0 %v1232
        %1730 = vmatprep.subr.mxu0 0.0
        %1731 = vmatpush1.msra.mxu0 0.0
        %1732 = vmatprep.subr.mxu0 0.0
        %1733 = vmatpush1.msra.mxu0 0.0
        %1734 = vmatprep.subr.mxu0 0.0
        %1735 = vmatpush1.msra.mxu0 0.0
        %1736 = vmatprep.subr.mxu0 0.0
        %1737 = vmatpush1.msra.mxu0 0.0
        %1738 = vmatprep.subr.mxu0 0.0
        %1739 = vmatpush1.msra.mxu0 0.0
        %1740 = vmatprep.subr.mxu0 0.0
        %1741 = vmatpush1.msra.mxu0 0.0
        %1742 = vmatprep.subr.mxu0 0.0
        %1743 = vmatpush1.msra.mxu0 0.0
        %1744 = vmatprep.subr.mxu0 0.0
        %1745 = vmatpush1.msra.mxu0 0.0
        %1746 = vmatprep.subr.mxu0 0.0
        %1747 = vmatpush1.msra.mxu0 0.0
        %1748 = vmatprep.subr.mxu0 0.0
        %1749 = vmatpush1.msra.mxu0 0.0
        %1750 = vmatprep.subr.mxu0 0.0
        %1751 = vmatpush1.msra.mxu0 0.0
        %1752 = vmatprep.subr.mxu0 0.0
        %1753 = vmatpush1.msra.mxu0 0.0
        %1754 = vmatprep.subr.mxu0 0.0
        %1755 = vmatpush1.msra.mxu0 0.0
        %1756 = vmatprep.subr.mxu0 0.0
        %1757 = vmatpush1.msra.mxu0 0.0
        %1758 = vmatprep.subr.mxu0 0.0
        %1759 = vmatpush1.msra.mxu0 0.0
        %1760 = vmatprep.subr.mxu0 0.0
        %1761 = vmatpush1.msra.mxu0 0.0
        %1762 = vmatprep.subr.mxu0 0.0
        %1763 = vmatpush1.msra.mxu0 0.0
        %1764 = vmatprep.subr.mxu0 0.0
        %1765 = vmatpush1.msra.mxu0 0.0
        %1766 = vmatprep.subr.mxu0 0.0
        %1767 = vmatpush1.msra.mxu0 0.0
        %1768 = vmatprep.subr.mxu0 0.0
        %1769 = vmatpush1.msra.mxu0 0.0
        %1770 = vmatprep.subr.mxu0 0.0
        %1771 = vmatpush1.msra.mxu0 0.0
        %1772 = vmatprep.subr.mxu0 0.0
        %1773 = vmatpush1.msra.mxu0 0.0
        %1774 = vmatprep.subr.mxu0 0.0
        %1775 = vmatpush1.msra.mxu0 0.0
        %1776 = vmatprep.subr.mxu0 0.0
        %1777 = vmatpush1.msra.mxu0 0.0
        %1778 = vmatprep.subr.mxu0 0.0
        %1779 = vmatpush1.msra.mxu0 0.0
        %1780 = vmatprep.subr.mxu0 0.0
        %1781 = vmatpush1.msra.mxu0 0.0
        %1782 = vmatprep.subr.mxu0 0.0
        %1783 = vmatpush1.msra.mxu0 0.0
        %1784 = vmatprep.subr.mxu0 0.0
        %1785 = vmatpush1.msra.mxu0 0.0
        %1786 = vmatprep.subr.mxu0 0.0
        %1787 = vmatpush1.msra.mxu0 0.0
        %1788 = vmatprep.mubr.f32.mxu0 0.0
        %1789 = vmatmul.mubr.f32.gmra.mrb[0].mxu0 %v1216
        %v1790 = vpop.f32.mrb[0].mxu0
        %v1791 = vadd.f32 %v628, %v1790
        %v1792 = vpop.f32.mrb[0].mxu0
        %v1793 = vadd.f32 %v632, %v1792
        %1794 = vdwg.mxu0
        %1795 = vmatprep.subr.mxu0 %v221
        %1796 = vmatpush1.msra.mxu0 %v220
        %1797 = vmatprep.subr.mxu0 %v342
        %1798 = vmatpush1.msra.mxu0 %v341
        %1799 = vmatprep.subr.mxu0 %v1241
        %1800 = vmatpush1.msra.mxu0 %v1238
        %1801 = vmatprep.subr.mxu0 0.0
        %1802 = vmatpush1.msra.mxu0 0.0
        %1803 = vmatprep.subr.mxu0 0.0
        %1804 = vmatpush1.msra.mxu0 0.0
        %1805 = vmatprep.subr.mxu0 0.0
        %1806 = vmatpush1.msra.mxu0 0.0
        %1807 = vmatprep.subr.mxu0 0.0
        %1808 = vmatpush1.msra.mxu0 0.0
        %1809 = vmatprep.subr.mxu0 0.0
        %1810 = vmatpush1.msra.mxu0 0.0
        %1811 = vmatprep.subr.mxu0 0.0
        %1812 = vmatpush1.msra.mxu0 0.0
        %1813 = vmatprep.subr.mxu0 0.0
        %1814 = vmatpush1.msra.mxu0 0.0
        %1815 = vmatprep.subr.mxu0 0.0
        %1816 = vmatpush1.msra.mxu0 0.0
        %1817 = vmatprep.subr.mxu0 0.0
        %1818 = vmatpush1.msra.mxu0 0.0
        %1819 = vmatprep.subr.mxu0 0.0
        %1820 = vmatpush1.msra.mxu0 0.0
        %1821 = vmatprep.subr.mxu0 0.0
        %1822 = vmatpush1.msra.mxu0 0.0
        %1823 = vmatprep.subr.mxu0 0.0
        %1824 = vmatpush1.msra.mxu0 0.0
        %1825 = vmatprep.subr.mxu0 0.0
        %1826 = vmatpush1.msra.mxu0 0.0
        %1827 = vmatprep.subr.mxu0 0.0
        %1828 = vmatpush1.msra.mxu0 0.0
        %1829 = vmatprep.subr.mxu0 0.0
        %1830 = vmatpush1.msra.mxu0 0.0
        %1831 = vmatprep.subr.mxu0 0.0
        %1832 = vmatpush1.msra.mxu0 0.0
        %1833 = vmatprep.subr.mxu0 0.0
        %1834 = vmatpush1.msra.mxu0 0.0
        %1835 = vmatprep.subr.mxu0 0.0
        %1836 = vmatpush1.msra.mxu0 0.0
        %1837 = vmatprep.subr.mxu0 0.0
        %1838 = vmatpush1.msra.mxu0 0.0
        %1839 = vmatprep.subr.mxu0 0.0
        %1840 = vmatpush1.msra.mxu0 0.0
        %1841 = vmatprep.subr.mxu0 0.0
        %1842 = vmatpush1.msra.mxu0 0.0
        %1843 = vmatprep.subr.mxu0 0.0
        %1844 = vmatpush1.msra.mxu0 0.0
        %1845 = vmatprep.subr.mxu0 0.0
        %1846 = vmatpush1.msra.mxu0 0.0
        %1847 = vmatprep.subr.mxu0 0.0
        %1848 = vmatpush1.msra.mxu0 0.0
        %1849 = vmatprep.subr.mxu0 0.0
        %1850 = vmatpush1.msra.mxu0 0.0
        %1851 = vmatprep.subr.mxu0 0.0
        %1852 = vmatpush1.msra.mxu0 0.0
        %1853 = vmatprep.subr.mxu0 0.0
        %1854 = vmatpush1.msra.mxu0 0.0
        %1855 = vmatprep.subr.mxu0 0.0
        %1856 = vmatpush1.msra.mxu0 0.0
        %1857 = vmatprep.subr.mxu0 0.0
        %1858 = vmatpush1.msra.mxu0 0.0
        %1859 = vmatprep.mubr.f32.mxu0 0.0
        %1860 = vmatmul.mubr.f32.gmra.mrb[0].mxu0 %v1216
        %v1861 = vpop.f32.mrb[0].mxu0
        %v1862 = vadd.f32 %v636, %v1861
        %v1863 = vpop.f32.mrb[0].mxu0
        %v1864 = vadd.f32 %v640, %v1863
        %1865 = vdwg.mxu0
        %1866 = vmatprep.subr.mxu0 %v223
        %1867 = vmatpush1.msra.mxu0 %v222
        %1868 = vmatprep.subr.mxu0 %v344
        %1869 = vmatpush1.msra.mxu0 %v343
        %1870 = vmatprep.subr.mxu0 %v1247
        %1871 = vmatpush1.msra.mxu0 %v1244
        %1872 = vmatprep.subr.mxu0 0.0
        %1873 = vmatpush1.msra.mxu0 0.0
        %1874 = vmatprep.subr.mxu0 0.0
        %1875 = vmatpush1.msra.mxu0 0.0
        %1876 = vmatprep.subr.mxu0 0.0
        %1877 = vmatpush1.msra.mxu0 0.0
        %1878 = vmatprep.subr.mxu0 0.0
        %1879 = vmatpush1.msra.mxu0 0.0
        %1880 = vmatprep.subr.mxu0 0.0
        %1881 = vmatpush1.msra.mxu0 0.0
        %1882 = vmatprep.subr.mxu0 0.0
        %1883 = vmatpush1.msra.mxu0 0.0
        %1884 = vmatprep.subr.mxu0 0.0
        %1885 = vmatpush1.msra.mxu0 0.0
        %1886 = vmatprep.subr.mxu0 0.0
        %1887 = vmatpush1.msra.mxu0 0.0
        %1888 = vmatprep.subr.mxu0 0.0
        %1889 = vmatpush1.msra.mxu0 0.0
        %1890 = vmatprep.subr.mxu0 0.0
        %1891 = vmatpush1.msra.mxu0 0.0
        %1892 = vmatprep.subr.mxu0 0.0
        %1893 = vmatpush1.msra.mxu0 0.0
        %1894 = vmatprep.subr.mxu0 0.0
        %1895 = vmatpush1.msra.mxu0 0.0
        %1896 = vmatprep.subr.mxu0 0.0
        %1897 = vmatpush1.msra.mxu0 0.0
        %1898 = vmatprep.subr.mxu0 0.0
        %1899 = vmatpush1.msra.mxu0 0.0
        %1900 = vmatprep.subr.mxu0 0.0
        %1901 = vmatpush1.msra.mxu0 0.0
        %1902 = vmatprep.subr.mxu0 0.0
        %1903 = vmatpush1.msra.mxu0 0.0
        %1904 = vmatprep.subr.mxu0 0.0
        %1905 = vmatpush1.msra.mxu0 0.0
        %1906 = vmatprep.subr.mxu0 0.0
        %1907 = vmatpush1.msra.mxu0 0.0
        %1908 = vmatprep.subr.mxu0 0.0
        %1909 = vmatpush1.msra.mxu0 0.0
        %1910 = vmatprep.subr.mxu0 0.0
        %1911 = vmatpush1.msra.mxu0 0.0
        %1912 = vmatprep.subr.mxu0 0.0
        %1913 = vmatpush1.msra.mxu0 0.0
        %1914 = vmatprep.subr.mxu0 0.0
        %1915 = vmatpush1.msra.mxu0 0.0
        %1916 = vmatprep.subr.mxu0 0.0
        %1917 = vmatpush1.msra.mxu0 0.0
        %1918 = vmatprep.subr.mxu0 0.0
        %1919 = vmatpush1.msra.mxu0 0.0
        %1920 = vmatprep.subr.mxu0 0.0
        %1921 = vmatpush1.msra.mxu0 0.0
        %1922 = vmatprep.subr.mxu0 0.0
        %1923 = vmatpush1.msra.mxu0 0.0
        %1924 = vmatprep.subr.mxu0 0.0
        %1925 = vmatpush1.msra.mxu0 0.0
        %1926 = vmatprep.subr.mxu0 0.0
        %1927 = vmatpush1.msra.mxu0 0.0
        %1928 = vmatprep.subr.mxu0 0.0
        %1929 = vmatpush1.msra.mxu0 0.0
        %1930 = vmatprep.mubr.f32.mxu0 0.0
        %1931 = vmatmul.mubr.f32.gmra.mrb[0].mxu0 %v1216
        %v1932 = vpop.f32.mrb[0].mxu0
        %v1933 = vadd.f32 %v644, %v1932
        %v1934 = vpop.f32.mrb[0].mxu0
        %v1935 = vadd.f32 %v648, %v1934
        %1936 = vdwg.mxu0
        %1937 = vmatprep.subr.mxu0 %v225
        %1938 = vmatpush1.msra.mxu0 %v224
        %1939 = vmatprep.subr.mxu0 %v346
        %1940 = vmatpush1.msra.mxu0 %v345
        %1941 = vmatprep.subr.mxu0 %v1253
        %1942 = vmatpush1.msra.mxu0 %v1250
        %1943 = vmatprep.subr.mxu0 0.0
        %1944 = vmatpush1.msra.mxu0 0.0
        %1945 = vmatprep.subr.mxu0 0.0
        %1946 = vmatpush1.msra.mxu0 0.0
        %1947 = vmatprep.subr.mxu0 0.0
        %1948 = vmatpush1.msra.mxu0 0.0
        %1949 = vmatprep.subr.mxu0 0.0
        %1950 = vmatpush1.msra.mxu0 0.0
        %1951 = vmatprep.subr.mxu0 0.0
        %1952 = vmatpush1.msra.mxu0 0.0
        %1953 = vmatprep.subr.mxu0 0.0
        %1954 = vmatpush1.msra.mxu0 0.0
        %1955 = vmatprep.subr.mxu0 0.0
        %1956 = vmatpush1.msra.mxu0 0.0
        %1957 = vmatprep.subr.mxu0 0.0
        %1958 = vmatpush1.msra.mxu0 0.0
        %1959 = vmatprep.subr.mxu0 0.0
        %1960 = vmatpush1.msra.mxu0 0.0
        %1961 = vmatprep.subr.mxu0 0.0
        %1962 = vmatpush1.msra.mxu0 0.0
        %1963 = vmatprep.subr.mxu0 0.0
        %1964 = vmatpush1.msra.mxu0 0.0
        %1965 = vmatprep.subr.mxu0 0.0
        %1966 = vmatpush1.msra.mxu0 0.0
        %1967 = vmatprep.subr.mxu0 0.0
        %1968 = vmatpush1.msra.mxu0 0.0
        %1969 = vmatprep.subr.mxu0 0.0
        %1970 = vmatpush1.msra.mxu0 0.0
        %1971 = vmatprep.subr.mxu0 0.0
        %1972 = vmatpush1.msra.mxu0 0.0
        %1973 = vmatprep.subr.mxu0 0.0
        %1974 = vmatpush1.msra.mxu0 0.0
        %1975 = vmatprep.subr.mxu0 0.0
        %1976 = vmatpush1.msra.mxu0 0.0
        %1977 = vmatprep.subr.mxu0 0.0
        %1978 = vmatpush1.msra.mxu0 0.0
        %1979 = vmatprep.subr.mxu0 0.0
        %1980 = vmatpush1.msra.mxu0 0.0
        %1981 = vmatprep.subr.mxu0 0.0
        %1982 = vmatpush1.msra.mxu0 0.0
        %1983 = vmatprep.subr.mxu0 0.0
        %1984 = vmatpush1.msra.mxu0 0.0
        %1985 = vmatprep.subr.mxu0 0.0
        %1986 = vmatpush1.msra.mxu0 0.0
        %1987 = vmatprep.subr.mxu0 0.0
        %1988 = vmatpush1.msra.mxu0 0.0
        %1989 = vmatprep.subr.mxu0 0.0
        %1990 = vmatpush1.msra.mxu0 0.0
        %1991 = vmatprep.subr.mxu0 0.0
        %1992 = vmatpush1.msra.mxu0 0.0
        %1993 = vmatprep.subr.mxu0 0.0
        %1994 = vmatpush1.msra.mxu0 0.0
        %1995 = vmatprep.subr.mxu0 0.0
        %1996 = vmatpush1.msra.mxu0 0.0
        %1997 = vmatprep.subr.mxu0 0.0
        %1998 = vmatpush1.msra.mxu0 0.0
        %1999 = vmatprep.subr.mxu0 0.0
        %2000 = vmatpush1.msra.mxu0 0.0
        %2001 = vmatprep.mubr.f32.mxu0 0.0
        %2002 = vmatmul.mubr.f32.gmra.mrb[0].mxu0 %v1216
        %v2003 = vpop.f32.mrb[0].mxu0
        %v2004 = vadd.f32 %v652, %v2003
        %v2005 = vpop.f32.mrb[0].mxu0
        %v2006 = vadd.f32 %v656, %v2005
        %2007 = vdwg.mxu0
        %2008 = vmatprep.subr.mxu0 %v227
        %2009 = vmatpush1.msra.mxu0 %v226
        %2010 = vmatprep.subr.mxu0 %v348
        %2011 = vmatpush1.msra.mxu0 %v347
        %2012 = vmatprep.subr.mxu0 %v1259
        %2013 = vmatpush1.msra.mxu0 %v1256
        %2014 = vmatprep.subr.mxu0 0.0
        %2015 = vmatpush1.msra.mxu0 0.0
        %2016 = vmatprep.subr.mxu0 0.0
        %2017 = vmatpush1.msra.mxu0 0.0
        %2018 = vmatprep.subr.mxu0 0.0
        %2019 = vmatpush1.msra.mxu0 0.0
        %2020 = vmatprep.subr.mxu0 0.0
        %2021 = vmatpush1.msra.mxu0 0.0
        %2022 = vmatprep.subr.mxu0 0.0
        %2023 = vmatpush1.msra.mxu0 0.0
        %2024 = vmatprep.subr.mxu0 0.0
        %2025 = vmatpush1.msra.mxu0 0.0
        %2026 = vmatprep.subr.mxu0 0.0
        %2027 = vmatpush1.msra.mxu0 0.0
        %2028 = vmatprep.subr.mxu0 0.0
        %2029 = vmatpush1.msra.mxu0 0.0
        %2030 = vmatprep.subr.mxu0 0.0
        %2031 = vmatpush1.msra.mxu0 0.0
        %2032 = vmatprep.subr.mxu0 0.0
        %2033 = vmatpush1.msra.mxu0 0.0
        %2034 = vmatprep.subr.mxu0 0.0
        %2035 = vmatpush1.msra.mxu0 0.0
        %2036 = vmatprep.subr.mxu0 0.0
        %2037 = vmatpush1.msra.mxu0 0.0
        %2038 = vmatprep.subr.mxu0 0.0
        %2039 = vmatpush1.msra.mxu0 0.0
        %2040 = vmatprep.subr.mxu0 0.0
        %2041 = vmatpush1.msra.mxu0 0.0
        %2042 = vmatprep.subr.mxu0 0.0
        %2043 = vmatpush1.msra.mxu0 0.0
        %2044 = vmatprep.subr.mxu0 0.0
        %2045 = vmatpush1.msra.mxu0 0.0
        %2046 = vmatprep.subr.mxu0 0.0
        %2047 = vmatpush1.msra.mxu0 0.0
        %2048 = vmatprep.subr.mxu0 0.0
        %2049 = vmatpush1.msra.mxu0 0.0
        %2050 = vmatprep.subr.mxu0 0.0
        %2051 = vmatpush1.msra.mxu0 0.0
        %2052 = vmatprep.subr.mxu0 0.0
        %2053 = vmatpush1.msra.mxu0 0.0
        %2054 = vmatprep.subr.mxu0 0.0
        %2055 = vmatpush1.msra.mxu0 0.0
        %2056 = vmatprep.subr.mxu0 0.0
        %2057 = vmatpush1.msra.mxu0 0.0
        %2058 = vmatprep.subr.mxu0 0.0
        %2059 = vmatpush1.msra.mxu0 0.0
        %2060 = vmatprep.subr.mxu0 0.0
        %2061 = vmatpush1.msra.mxu0 0.0
        %2062 = vmatprep.subr.mxu0 0.0
        %2063 = vmatpush1.msra.mxu0 0.0
        %2064 = vmatprep.subr.mxu0 0.0
        %2065 = vmatpush1.msra.mxu0 0.0
        %2066 = vmatprep.subr.mxu0 0.0
        %2067 = vmatpush1.msra.mxu0 0.0
        %2068 = vmatprep.subr.mxu0 0.0
        %2069 = vmatpush1.msra.mxu0 0.0
        %2070 = vmatprep.subr.mxu0 0.0
        %2071 = vmatpush1.msra.mxu0 0.0
        %2072 = vmatprep.mubr.f32.mxu0 0.0
        %2073 = vmatmul.mubr.f32.gmra.mrb[0].mxu0 %v1216
        %v2074 = vpop.f32.mrb[0].mxu0
        %v2075 = vadd.f32 %v660, %v2074
        %v2076 = vpop.f32.mrb[0].mxu0
        %v2077 = vadd.f32 %v664, %v2076
        %2078 = vdwg.mxu0
        %2079 = vmatprep.subr.mxu0 %v229
        %2080 = vmatpush1.msra.mxu0 %v228
        %2081 = vmatprep.subr.mxu0 %v350
        %2082 = vmatpush1.msra.mxu0 %v349
        %2083 = vmatprep.subr.mxu0 %v1265
        %2084 = vmatpush1.msra.mxu0 %v1262
        %2085 = vmatprep.subr.mxu0 0.0
        %2086 = vmatpush1.msra.mxu0 0.0
        %2087 = vmatprep.subr.mxu0 0.0
        %2088 = vmatpush1.msra.mxu0 0.0
        %2089 = vmatprep.subr.mxu0 0.0
        %2090 = vmatpush1.msra.mxu0 0.0
        %2091 = vmatprep.subr.mxu0 0.0
        %2092 = vmatpush1.msra.mxu0 0.0
        %2093 = vmatprep.subr.mxu0 0.0
        %2094 = vmatpush1.msra.mxu0 0.0
        %2095 = vmatprep.subr.mxu0 0.0
        %2096 = vmatpush1.msra.mxu0 0.0
        %2097 = vmatprep.subr.mxu0 0.0
        %2098 = vmatpush1.msra.mxu0 0.0
        %2099 = vmatprep.subr.mxu0 0.0
        %2100 = vmatpush1.msra.mxu0 0.0
        %2101 = vmatprep.subr.mxu0 0.0
        %2102 = vmatpush1.msra.mxu0 0.0
        %2103 = vmatprep.subr.mxu0 0.0
        %2104 = vmatpush1.msra.mxu0 0.0
        %2105 = vmatprep.subr.mxu0 0.0
        %2106 = vmatpush1.msra.mxu0 0.0
        %2107 = vmatprep.subr.mxu0 0.0
        %2108 = vmatpush1.msra.mxu0 0.0
        %2109 = vmatprep.subr.mxu0 0.0
        %2110 = vmatpush1.msra.mxu0 0.0
        %2111 = vmatprep.subr.mxu0 0.0
        %2112 = vmatpush1.msra.mxu0 0.0
        %2113 = vmatprep.subr.mxu0 0.0
        %2114 = vmatpush1.msra.mxu0 0.0
        %2115 = vmatprep.subr.mxu0 0.0
        %2116 = vmatpush1.msra.mxu0 0.0
        %2117 = vmatprep.subr.mxu0 0.0
        %2118 = vmatpush1.msra.mxu0 0.0
        %2119 = vmatprep.subr.mxu0 0.0
        %2120 = vmatpush1.msra.mxu0 0.0
        %2121 = vmatprep.subr.mxu0 0.0
        %2122 = vmatpush1.msra.mxu0 0.0
        %2123 = vmatprep.subr.mxu0 0.0
        %2124 = vmatpush1.msra.mxu0 0.0
        %2125 = vmatprep.subr.mxu0 0.0
        %2126 = vmatpush1.msra.mxu0 0.0
        %2127 = vmatprep.subr.mxu0 0.0
        %2128 = vmatpush1.msra.mxu0 0.0
        %2129 = vmatprep.subr.mxu0 0.0
        %2130 = vmatpush1.msra.mxu0 0.0
        %2131 = vmatprep.subr.mxu0 0.0
        %2132 = vmatpush1.msra.mxu0 0.0
        %2133 = vmatprep.subr.mxu0 0.0
        %2134 = vmatpush1.msra.mxu0 0.0
        %2135 = vmatprep.subr.mxu0 0.0
        %2136 = vmatpush1.msra.mxu0 0.0
        %2137 = vmatprep.subr.mxu0 0.0
        %2138 = vmatpush1.msra.mxu0 0.0
        %2139 = vmatprep.subr.mxu0 0.0
        %2140 = vmatpush1.msra.mxu0 0.0
        %2141 = vmatprep.subr.mxu0 0.0
        %2142 = vmatpush1.msra.mxu0 0.0
        %2143 = vmatprep.mubr.f32.mxu0 0.0
        %2144 = vmatmul.mubr.f32.gmra.mrb[0].mxu0 %v1216
        %v2145 = vpop.f32.mrb[0].mxu0
        %v2146 = vadd.f32 %v668, %v2145
        %v2147 = vpop.f32.mrb[0].mxu0
        %v2148 = vadd.f32 %v672, %v2147
        %2149 = vdwg.mxu0
        %2150 = vmatprep.subr.mxu0 %v231
        %2151 = vmatpush1.msra.mxu0 %v230
        %2152 = vmatprep.subr.mxu0 %v352
        %2153 = vmatpush1.msra.mxu0 %v351
        %2154 = vmatprep.subr.mxu0 %v1271
        %2155 = vmatpush1.msra.mxu0 %v1268
        %2156 = vmatprep.subr.mxu0 0.0
        %2157 = vmatpush1.msra.mxu0 0.0
        %2158 = vmatprep.subr.mxu0 0.0
        %2159 = vmatpush1.msra.mxu0 0.0
        %2160 = vmatprep.subr.mxu0 0.0
        %2161 = vmatpush1.msra.mxu0 0.0
        %2162 = vmatprep.subr.mxu0 0.0
        %2163 = vmatpush1.msra.mxu0 0.0
        %2164 = vmatprep.subr.mxu0 0.0
        %2165 = vmatpush1.msra.mxu0 0.0
        %2166 = vmatprep.subr.mxu0 0.0
        %2167 = vmatpush1.msra.mxu0 0.0
        %2168 = vmatprep.subr.mxu0 0.0
        %2169 = vmatpush1.msra.mxu0 0.0
        %2170 = vmatprep.subr.mxu0 0.0
        %2171 = vmatpush1.msra.mxu0 0.0
        %2172 = vmatprep.subr.mxu0 0.0
        %2173 = vmatpush1.msra.mxu0 0.0
        %2174 = vmatprep.subr.mxu0 0.0
        %2175 = vmatpush1.msra.mxu0 0.0
        %2176 = vmatprep.subr.mxu0 0.0
        %2177 = vmatpush1.msra.mxu0 0.0
        %2178 = vmatprep.subr.mxu0 0.0
        %2179 = vmatpush1.msra.mxu0 0.0
        %2180 = vmatprep.subr.mxu0 0.0
        %2181 = vmatpush1.msra.mxu0 0.0
        %2182 = vmatprep.subr.mxu0 0.0
        %2183 = vmatpush1.msra.mxu0 0.0
        %2184 = vmatprep.subr.mxu0 0.0
        %2185 = vmatpush1.msra.mxu0 0.0
        %2186 = vmatprep.subr.mxu0 0.0
        %2187 = vmatpush1.msra.mxu0 0.0
        %2188 = vmatprep.subr.mxu0 0.0
        %2189 = vmatpush1.msra.mxu0 0.0
        %2190 = vmatprep.subr.mxu0 0.0
        %2191 = vmatpush1.msra.mxu0 0.0
        %2192 = vmatprep.subr.mxu0 0.0
        %2193 = vmatpush1.msra.mxu0 0.0
        %2194 = vmatprep.subr.mxu0 0.0
        %2195 = vmatpush1.msra.mxu0 0.0
        %2196 = vmatprep.subr.mxu0 0.0
        %2197 = vmatpush1.msra.mxu0 0.0
        %2198 = vmatprep.subr.mxu0 0.0
        %2199 = vmatpush1.msra.mxu0 0.0
        %2200 = vmatprep.subr.mxu0 0.0
        %2201 = vmatpush1.msra.mxu0 0.0
        %2202 = vmatprep.subr.mxu0 0.0
        %2203 = vmatpush1.msra.mxu0 0.0
        %2204 = vmatprep.subr.mxu0 0.0
        %2205 = vmatpush1.msra.mxu0 0.0
        %2206 = vmatprep.subr.mxu0 0.0
        %2207 = vmatpush1.msra.mxu0 0.0
        %2208 = vmatprep.subr.mxu0 0.0
        %2209 = vmatpush1.msra.mxu0 0.0
        %2210 = vmatprep.subr.mxu0 0.0
        %2211 = vmatpush1.msra.mxu0 0.0
        %2212 = vmatprep.subr.mxu0 0.0
        %2213 = vmatpush1.msra.mxu0 0.0
        %2214 = vmatprep.mubr.f32.mxu0 0.0
        %2215 = vmatmul.mubr.f32.gmra.mrb[0].mxu0 %v1216
        %v2216 = vpop.f32.mrb[0].mxu0
        %v2217 = vadd.f32 %v676, %v2216
        %v2218 = vpop.f32.mrb[0].mxu0
        %v2219 = vadd.f32 %v680, %v2218
        %2220 = vdwg.mxu0
        %2221 = vmatprep.subr.mxu0 %v233
        %2222 = vmatpush1.msra.mxu0 %v232
        %2223 = vmatprep.subr.mxu0 %v354
        %2224 = vmatpush1.msra.mxu0 %v353
        %2225 = vmatprep.subr.mxu0 %v1277
        %2226 = vmatpush1.msra.mxu0 %v1274
        %2227 = vmatprep.subr.mxu0 0.0
        %2228 = vmatpush1.msra.mxu0 0.0
        %2229 = vmatprep.subr.mxu0 0.0
        %2230 = vmatpush1.msra.mxu0 0.0
        %2231 = vmatprep.subr.mxu0 0.0
        %2232 = vmatpush1.msra.mxu0 0.0
        %2233 = vmatprep.subr.mxu0 0.0
        %2234 = vmatpush1.msra.mxu0 0.0
        %2235 = vmatprep.subr.mxu0 0.0
        %2236 = vmatpush1.msra.mxu0 0.0
        %2237 = vmatprep.subr.mxu0 0.0
        %2238 = vmatpush1.msra.mxu0 0.0
        %2239 = vmatprep.subr.mxu0 0.0
        %2240 = vmatpush1.msra.mxu0 0.0
        %2241 = vmatprep.subr.mxu0 0.0
        %2242 = vmatpush1.msra.mxu0 0.0
        %2243 = vmatprep.subr.mxu0 0.0
        %2244 = vmatpush1.msra.mxu0 0.0
        %2245 = vmatprep.subr.mxu0 0.0
        %2246 = vmatpush1.msra.mxu0 0.0
        %2247 = vmatprep.subr.mxu0 0.0
        %2248 = vmatpush1.msra.mxu0 0.0
        %2249 = vmatprep.subr.mxu0 0.0
        %2250 = vmatpush1.msra.mxu0 0.0
        %2251 = vmatprep.subr.mxu0 0.0
        %2252 = vmatpush1.msra.mxu0 0.0
        %2253 = vmatprep.subr.mxu0 0.0
        %2254 = vmatpush1.msra.mxu0 0.0
        %2255 = vmatprep.subr.mxu0 0.0
        %2256 = vmatpush1.msra.mxu0 0.0
        %2257 = vmatprep.subr.mxu0 0.0
        %2258 = vmatpush1.msra.mxu0 0.0
        %2259 = vmatprep.subr.mxu0 0.0
        %2260 = vmatpush1.msra.mxu0 0.0
        %2261 = vmatprep.subr.mxu0 0.0
        %2262 = vmatpush1.msra.mxu0 0.0
        %2263 = vmatprep.subr.mxu0 0.0
        %2264 = vmatpush1.msra.mxu0 0.0
        %2265 = vmatprep.subr.mxu0 0.0
        %2266 = vmatpush1.msra.mxu0 0.0
        %2267 = vmatprep.subr.mxu0 0.0
        %2268 = vmatpush1.msra.mxu0 0.0
        %2269 = vmatprep.subr.mxu0 0.0
        %2270 = vmatpush1.msra.mxu0 0.0
        %2271 = vmatprep.subr.mxu0 0.0
        %2272 = vmatpush1.msra.mxu0 0.0
        %2273 = vmatprep.subr.mxu0 0.0
        %2274 = vmatpush1.msra.mxu0 0.0
        %2275 = vmatprep.subr.mxu0 0.0
        %2276 = vmatpush1.msra.mxu0 0.0
        %2277 = vmatprep.subr.mxu0 0.0
        %2278 = vmatpush1.msra.mxu0 0.0
        %2279 = vmatprep.subr.mxu0 0.0
        %2280 = vmatpush1.msra.mxu0 0.0
        %2281 = vmatprep.subr.mxu0 0.0
        %2282 = vmatpush1.msra.mxu0 0.0
        %2283 = vmatprep.subr.mxu0 0.0
        %2284 = vmatpush1.msra.mxu0 0.0
        %2285 = vmatprep.mubr.f32.mxu0 0.0
        %2286 = vmatmul.mubr.f32.gmra.mrb[0].mxu0 %v1216
        %v2287 = vpop.f32.mrb[0].mxu0
        %v2288 = vadd.f32 %v684, %v2287
        %v2289 = vpop.f32.mrb[0].mxu0
        %v2290 = vadd.f32 %v688, %v2289
        %2291 = vdwg.mxu0
        %2292 = vmatprep.subr.mxu0 %v235
        %2293 = vmatpush1.msra.mxu0 %v234
        %2294 = vmatprep.subr.mxu0 %v356
        %2295 = vmatpush1.msra.mxu0 %v355
        %2296 = vmatprep.subr.mxu0 %v1283
        %2297 = vmatpush1.msra.mxu0 %v1280
        %2298 = vmatprep.subr.mxu0 0.0
        %2299 = vmatpush1.msra.mxu0 0.0
        %2300 = vmatprep.subr.mxu0 0.0
        %2301 = vmatpush1.msra.mxu0 0.0
        %2302 = vmatprep.subr.mxu0 0.0
        %2303 = vmatpush1.msra.mxu0 0.0
        %2304 = vmatprep.subr.mxu0 0.0
        %2305 = vmatpush1.msra.mxu0 0.0
        %2306 = vmatprep.subr.mxu0 0.0
        %2307 = vmatpush1.msra.mxu0 0.0
        %2308 = vmatprep.subr.mxu0 0.0
        %2309 = vmatpush1.msra.mxu0 0.0
        %2310 = vmatprep.subr.mxu0 0.0
        %2311 = vmatpush1.msra.mxu0 0.0
        %2312 = vmatprep.subr.mxu0 0.0
        %2313 = vmatpush1.msra.mxu0 0.0
        %2314 = vmatprep.subr.mxu0 0.0
        %2315 = vmatpush1.msra.mxu0 0.0
        %2316 = vmatprep.subr.mxu0 0.0
        %2317 = vmatpush1.msra.mxu0 0.0
        %2318 = vmatprep.subr.mxu0 0.0
        %2319 = vmatpush1.msra.mxu0 0.0
        %2320 = vmatprep.subr.mxu0 0.0
        %2321 = vmatpush1.msra.mxu0 0.0
        %2322 = vmatprep.subr.mxu0 0.0
        %2323 = vmatpush1.msra.mxu0 0.0
        %2324 = vmatprep.subr.mxu0 0.0
        %2325 = vmatpush1.msra.mxu0 0.0
        %2326 = vmatprep.subr.mxu0 0.0
        %2327 = vmatpush1.msra.mxu0 0.0
        %2328 = vmatprep.subr.mxu0 0.0
        %2329 = vmatpush1.msra.mxu0 0.0
        %2330 = vmatprep.subr.mxu0 0.0
        %2331 = vmatpush1.msra.mxu0 0.0
        %2332 = vmatprep.subr.mxu0 0.0
        %2333 = vmatpush1.msra.mxu0 0.0
        %2334 = vmatprep.subr.mxu0 0.0
        %2335 = vmatpush1.msra.mxu0 0.0
        %2336 = vmatprep.subr.mxu0 0.0
        %2337 = vmatpush1.msra.mxu0 0.0
        %2338 = vmatprep.subr.mxu0 0.0
        %2339 = vmatpush1.msra.mxu0 0.0
        %2340 = vmatprep.subr.mxu0 0.0
        %2341 = vmatpush1.msra.mxu0 0.0
        %2342 = vmatprep.subr.mxu0 0.0
        %2343 = vmatpush1.msra.mxu0 0.0
        %2344 = vmatprep.subr.mxu0 0.0
        %2345 = vmatpush1.msra.mxu0 0.0
        %2346 = vmatprep.subr.mxu0 0.0
        %2347 = vmatpush1.msra.mxu0 0.0
        %2348 = vmatprep.subr.mxu0 0.0
        %2349 = vmatpush1.msra.mxu0 0.0
        %2350 = vmatprep.subr.mxu0 0.0
        %2351 = vmatpush1.msra.mxu0 0.0
        %2352 = vmatprep.subr.mxu0 0.0
        %2353 = vmatpush1.msra.mxu0 0.0
        %2354 = vmatprep.subr.mxu0 0.0
        %2355 = vmatpush1.msra.mxu0 0.0
        %2356 = vmatprep.mubr.f32.mxu0 0.0
        %2357 = vmatmul.mubr.f32.gmra.mrb[0].mxu0 %v1216
        %v2358 = vpop.f32.mrb[0].mxu0
        %v2359 = vadd.f32 %v692, %v2358
        %v2360 = vpop.f32.mrb[0].mxu0
        %v2361 = vadd.f32 %v696, %v2360
        %2362 = vdwg.mxu0
        %2363 = vmatprep.subr.mxu0 %v237
        %2364 = vmatpush1.msra.mxu0 %v236
        %2365 = vmatprep.subr.mxu0 %v358
        %2366 = vmatpush1.msra.mxu0 %v357
        %2367 = vmatprep.subr.mxu0 %v1289
        %2368 = vmatpush1.msra.mxu0 %v1286
        %2369 = vmatprep.subr.mxu0 0.0
        %2370 = vmatpush1.msra.mxu0 0.0
        %2371 = vmatprep.subr.mxu0 0.0
        %2372 = vmatpush1.msra.mxu0 0.0
        %2373 = vmatprep.subr.mxu0 0.0
        %2374 = vmatpush1.msra.mxu0 0.0
        %2375 = vmatprep.subr.mxu0 0.0
        %2376 = vmatpush1.msra.mxu0 0.0
        %2377 = vmatprep.subr.mxu0 0.0
        %2378 = vmatpush1.msra.mxu0 0.0
        %2379 = vmatprep.subr.mxu0 0.0
        %2380 = vmatpush1.msra.mxu0 0.0
        %2381 = vmatprep.subr.mxu0 0.0
        %2382 = vmatpush1.msra.mxu0 0.0
        %2383 = vmatprep.subr.mxu0 0.0
        %2384 = vmatpush1.msra.mxu0 0.0
        %2385 = vmatprep.subr.mxu0 0.0
        %2386 = vmatpush1.msra.mxu0 0.0
        %2387 = vmatprep.subr.mxu0 0.0
        %2388 = vmatpush1.msra.mxu0 0.0
        %2389 = vmatprep.subr.mxu0 0.0
        %2390 = vmatpush1.msra.mxu0 0.0
        %2391 = vmatprep.subr.mxu0 0.0
        %2392 = vmatpush1.msra.mxu0 0.0
        %2393 = vmatprep.subr.mxu0 0.0
        %2394 = vmatpush1.msra.mxu0 0.0
        %2395 = vmatprep.subr.mxu0 0.0
        %2396 = vmatpush1.msra.mxu0 0.0
        %2397 = vmatprep.subr.mxu0 0.0
        %2398 = vmatpush1.msra.mxu0 0.0
        %2399 = vmatprep.subr.mxu0 0.0
        %2400 = vmatpush1.msra.mxu0 0.0
        %2401 = vmatprep.subr.mxu0 0.0
        %2402 = vmatpush1.msra.mxu0 0.0
        %2403 = vmatprep.subr.mxu0 0.0
        %2404 = vmatpush1.msra.mxu0 0.0
        %2405 = vmatprep.subr.mxu0 0.0
        %2406 = vmatpush1.msra.mxu0 0.0
        %2407 = vmatprep.subr.mxu0 0.0
        %2408 = vmatpush1.msra.mxu0 0.0
        %2409 = vmatprep.subr.mxu0 0.0
        %2410 = vmatpush1.msra.mxu0 0.0
        %2411 = vmatprep.subr.mxu0 0.0
        %2412 = vmatpush1.msra.mxu0 0.0
        %2413 = vmatprep.subr.mxu0 0.0
        %2414 = vmatpush1.msra.mxu0 0.0
        %2415 = vmatprep.subr.mxu0 0.0
        %2416 = vmatpush1.msra.mxu0 0.0
        %2417 = vmatprep.subr.mxu0 0.0
        %2418 = vmatpush1.msra.mxu0 0.0
        %2419 = vmatprep.subr.mxu0 0.0
        %2420 = vmatpush1.msra.mxu0 0.0
        %2421 = vmatprep.subr.mxu0 0.0
        %2422 = vmatpush1.msra.mxu0 0.0
        %2423 = vmatprep.subr.mxu0 0.0
        %2424 = vmatpush1.msra.mxu0 0.0
        %2425 = vmatprep.subr.mxu0 0.0
        %2426 = vmatpush1.msra.mxu0 0.0
        %2427 = vmatprep.mubr.f32.mxu0 0.0
        %2428 = vmatmul.mubr.f32.gmra.mrb[0].mxu0 %v1216
        %v2429 = vpop.f32.mrb[0].mxu0
        %v2430 = vadd.f32 %v700, %v2429
        %v2431 = vpop.f32.mrb[0].mxu0
        %v2432 = vadd.f32 %v704, %v2431
        %2433 = vdwg.mxu0
        %2434 = vmatprep.subr.mxu0 %v239
        %2435 = vmatpush1.msra.mxu0 %v238
        %2436 = vmatprep.subr.mxu0 %v360
        %2437 = vmatpush1.msra.mxu0 %v359
        %2438 = vmatprep.subr.mxu0 %v1295
        %2439 = vmatpush1.msra.mxu0 %v1292
        %2440 = vmatprep.subr.mxu0 0.0
        %2441 = vmatpush1.msra.mxu0 0.0
        %2442 = vmatprep.subr.mxu0 0.0
        %2443 = vmatpush1.msra.mxu0 0.0
        %2444 = vmatprep.subr.mxu0 0.0
        %2445 = vmatpush1.msra.mxu0 0.0
        %2446 = vmatprep.subr.mxu0 0.0
        %2447 = vmatpush1.msra.mxu0 0.0
        %2448 = vmatprep.subr.mxu0 0.0
        %2449 = vmatpush1.msra.mxu0 0.0
        %2450 = vmatprep.subr.mxu0 0.0
        %2451 = vmatpush1.msra.mxu0 0.0
        %2452 = vmatprep.subr.mxu0 0.0
        %2453 = vmatpush1.msra.mxu0 0.0
        %2454 = vmatprep.subr.mxu0 0.0
        %2455 = vmatpush1.msra.mxu0 0.0
        %2456 = vmatprep.subr.mxu0 0.0
        %2457 = vmatpush1.msra.mxu0 0.0
        %2458 = vmatprep.subr.mxu0 0.0
        %2459 = vmatpush1.msra.mxu0 0.0
        %2460 = vmatprep.subr.mxu0 0.0
        %2461 = vmatpush1.msra.mxu0 0.0
        %2462 = vmatprep.subr.mxu0 0.0
        %2463 = vmatpush1.msra.mxu0 0.0
        %2464 = vmatprep.subr.mxu0 0.0
        %2465 = vmatpush1.msra.mxu0 0.0
        %2466 = vmatprep.subr.mxu0 0.0
        %2467 = vmatpush1.msra.mxu0 0.0
        %2468 = vmatprep.subr.mxu0 0.0
        %2469 = vmatpush1.msra.mxu0 0.0
        %2470 = vmatprep.subr.mxu0 0.0
        %2471 = vmatpush1.msra.mxu0 0.0
        %2472 = vmatprep.subr.mxu0 0.0
        %2473 = vmatpush1.msra.mxu0 0.0
        %2474 = vmatprep.subr.mxu0 0.0
        %2475 = vmatpush1.msra.mxu0 0.0
        %2476 = vmatprep.subr.mxu0 0.0
        %2477 = vmatpush1.msra.mxu0 0.0
        %2478 = vmatprep.subr.mxu0 0.0
        %2479 = vmatpush1.msra.mxu0 0.0
        %2480 = vmatprep.subr.mxu0 0.0
        %2481 = vmatpush1.msra.mxu0 0.0
        %2482 = vmatprep.subr.mxu0 0.0
        %2483 = vmatpush1.msra.mxu0 0.0
        %2484 = vmatprep.subr.mxu0 0.0
        %2485 = vmatpush1.msra.mxu0 0.0
        %2486 = vmatprep.subr.mxu0 0.0
        %2487 = vmatpush1.msra.mxu0 0.0
        %2488 = vmatprep.subr.mxu0 0.0
        %2489 = vmatpush1.msra.mxu0 0.0
        %2490 = vmatprep.subr.mxu0 0.0
        %2491 = vmatpush1.msra.mxu0 0.0
        %2492 = vmatprep.subr.mxu0 0.0
        %2493 = vmatpush1.msra.mxu0 0.0
        %2494 = vmatprep.subr.mxu0 0.0
        %2495 = vmatpush1.msra.mxu0 0.0
        %2496 = vmatprep.subr.mxu0 0.0
        %2497 = vmatpush1.msra.mxu0 0.0
        %2498 = vmatprep.mubr.f32.mxu0 0.0
        %2499 = vmatmul.mubr.f32.gmra.mrb[0].mxu0 %v1216
        %v2500 = vpop.f32.mrb[0].mxu0
        %v2501 = vadd.f32 %v708, %v2500
        %v2502 = vpop.f32.mrb[0].mxu0
        %v2503 = vadd.f32 %v712, %v2502
        %2504 = vdwg.mxu0
        %2505 = vmatprep.subr.mxu0 %v241
        %2506 = vmatpush1.msra.mxu0 %v240
        %2507 = vmatprep.subr.mxu0 %v362
        %2508 = vmatpush1.msra.mxu0 %v361
        %2509 = vmatprep.subr.mxu0 %v1301
        %2510 = vmatpush1.msra.mxu0 %v1298
        %2511 = vmatprep.subr.mxu0 0.0
        %2512 = vmatpush1.msra.mxu0 0.0
        %2513 = vmatprep.subr.mxu0 0.0
        %2514 = vmatpush1.msra.mxu0 0.0
        %2515 = vmatprep.subr.mxu0 0.0
        %2516 = vmatpush1.msra.mxu0 0.0
        %2517 = vmatprep.subr.mxu0 0.0
        %2518 = vmatpush1.msra.mxu0 0.0
        %2519 = vmatprep.subr.mxu0 0.0
        %2520 = vmatpush1.msra.mxu0 0.0
        %2521 = vmatprep.subr.mxu0 0.0
        %2522 = vmatpush1.msra.mxu0 0.0
        %2523 = vmatprep.subr.mxu0 0.0
        %2524 = vmatpush1.msra.mxu0 0.0
        %2525 = vmatprep.subr.mxu0 0.0
        %2526 = vmatpush1.msra.mxu0 0.0
        %2527 = vmatprep.subr.mxu0 0.0
        %2528 = vmatpush1.msra.mxu0 0.0
        %2529 = vmatprep.subr.mxu0 0.0
        %2530 = vmatpush1.msra.mxu0 0.0
        %2531 = vmatprep.subr.mxu0 0.0
        %2532 = vmatpush1.msra.mxu0 0.0
        %2533 = vmatprep.subr.mxu0 0.0
        %2534 = vmatpush1.msra.mxu0 0.0
        %2535 = vmatprep.subr.mxu0 0.0
        %2536 = vmatpush1.msra.mxu0 0.0
        %2537 = vmatprep.subr.mxu0 0.0
        %2538 = vmatpush1.msra.mxu0 0.0
        %2539 = vmatprep.subr.mxu0 0.0
        %2540 = vmatpush1.msra.mxu0 0.0
        %2541 = vmatprep.subr.mxu0 0.0
        %2542 = vmatpush1.msra.mxu0 0.0
        %2543 = vmatprep.subr.mxu0 0.0
        %2544 = vmatpush1.msra.mxu0 0.0
        %2545 = vmatprep.subr.mxu0 0.0
        %2546 = vmatpush1.msra.mxu0 0.0
        %2547 = vmatprep.subr.mxu0 0.0
        %2548 = vmatpush1.msra.mxu0 0.0
        %2549 = vmatprep.subr.mxu0 0.0
        %2550 = vmatpush1.msra.mxu0 0.0
        %2551 = vmatprep.subr.mxu0 0.0
        %2552 = vmatpush1.msra.mxu0 0.0
        %2553 = vmatprep.subr.mxu0 0.0
        %2554 = vmatpush1.msra.mxu0 0.0
        %2555 = vmatprep.subr.mxu0 0.0
        %2556 = vmatpush1.msra.mxu0 0.0
        %2557 = vmatprep.subr.mxu0 0.0
        %2558 = vmatpush1.msra.mxu0 0.0
        %2559 = vmatprep.subr.mxu0 0.0
        %2560 = vmatpush1.msra.mxu0 0.0
        %2561 = vmatprep.subr.mxu0 0.0
        %2562 = vmatpush1.msra.mxu0 0.0
        %2563 = vmatprep.subr.mxu0 0.0
        %2564 = vmatpush1.msra.mxu0 0.0
        %2565 = vmatprep.subr.mxu0 0.0
        %2566 = vmatpush1.msra.mxu0 0.0
        %2567 = vmatprep.subr.mxu0 0.0
        %2568 = vmatpush1.msra.mxu0 0.0
        %2569 = vmatprep.mubr.f32.mxu0 0.0
        %2570 = vmatmul.mubr.f32.gmra.mrb[0].mxu0 %v1216
        %v2571 = vpop.f32.mrb[0].mxu0
        %v2572 = vadd.f32 %v716, %v2571
        %v2573 = vpop.f32.mrb[0].mxu0
        %v2574 = vadd.f32 %v720, %v2573
        %2575 = vdwg.mxu0
        %2576 = vmatprep.subr.mxu0 %v243
        %2577 = vmatpush1.msra.mxu0 %v242
        %2578 = vmatprep.subr.mxu0 %v364
        %2579 = vmatpush1.msra.mxu0 %v363
        %2580 = vmatprep.subr.mxu0 %v1307
        %2581 = vmatpush1.msra.mxu0 %v1304
        %2582 = vmatprep.subr.mxu0 0.0
        %2583 = vmatpush1.msra.mxu0 0.0
        %2584 = vmatprep.subr.mxu0 0.0
        %2585 = vmatpush1.msra.mxu0 0.0
        %2586 = vmatprep.subr.mxu0 0.0
        %2587 = vmatpush1.msra.mxu0 0.0
        %2588 = vmatprep.subr.mxu0 0.0
        %2589 = vmatpush1.msra.mxu0 0.0
        %2590 = vmatprep.subr.mxu0 0.0
        %2591 = vmatpush1.msra.mxu0 0.0
        %2592 = vmatprep.subr.mxu0 0.0
        %2593 = vmatpush1.msra.mxu0 0.0
        %2594 = vmatprep.subr.mxu0 0.0
        %2595 = vmatpush1.msra.mxu0 0.0
        %2596 = vmatprep.subr.mxu0 0.0
        %2597 = vmatpush1.msra.mxu0 0.0
        %2598 = vmatprep.subr.mxu0 0.0
        %2599 = vmatpush1.msra.mxu0 0.0
        %2600 = vmatprep.subr.mxu0 0.0
        %2601 = vmatpush1.msra.mxu0 0.0
        %2602 = vmatprep.subr.mxu0 0.0
        %2603 = vmatpush1.msra.mxu0 0.0
        %2604 = vmatprep.subr.mxu0 0.0
        %2605 = vmatpush1.msra.mxu0 0.0
        %2606 = vmatprep.subr.mxu0 0.0
        %2607 = vmatpush1.msra.mxu0 0.0
        %2608 = vmatprep.subr.mxu0 0.0
        %2609 = vmatpush1.msra.mxu0 0.0
        %2610 = vmatprep.subr.mxu0 0.0
        %2611 = vmatpush1.msra.mxu0 0.0
        %2612 = vmatprep.subr.mxu0 0.0
        %2613 = vmatpush1.msra.mxu0 0.0
        %2614 = vmatprep.subr.mxu0 0.0
        %2615 = vmatpush1.msra.mxu0 0.0
        %2616 = vmatprep.subr.mxu0 0.0
        %2617 = vmatpush1.msra.mxu0 0.0
        %2618 = vmatprep.subr.mxu0 0.0
        %2619 = vmatpush1.msra.mxu0 0.0
        %2620 = vmatprep.subr.mxu0 0.0
        %2621 = vmatpush1.msra.mxu0 0.0
        %2622 = vmatprep.subr.mxu0 0.0
        %2623 = vmatpush1.msra.mxu0 0.0
        %2624 = vmatprep.subr.mxu0 0.0
        %2625 = vmatpush1.msra.mxu0 0.0
        %2626 = vmatprep.subr.mxu0 0.0
        %2627 = vmatpush1.msra.mxu0 0.0
        %2628 = vmatprep.subr.mxu0 0.0
        %2629 = vmatpush1.msra.mxu0 0.0
        %2630 = vmatprep.subr.mxu0 0.0
        %2631 = vmatpush1.msra.mxu0 0.0
        %2632 = vmatprep.subr.mxu0 0.0
        %2633 = vmatpush1.msra.mxu0 0.0
        %2634 = vmatprep.subr.mxu0 0.0
        %2635 = vmatpush1.msra.mxu0 0.0
        %2636 = vmatprep.subr.mxu0 0.0
        %2637 = vmatpush1.msra.mxu0 0.0
        %2638 = vmatprep.subr.mxu0 0.0
        %2639 = vmatpush1.msra.mxu0 0.0
        %2640 = vmatprep.mubr.f32.mxu0 0.0
        %2641 = vmatmul.mubr.f32.gmra.mrb[0].mxu0 %v1216
        %v2642 = vpop.f32.mrb[0].mxu0
        %v2643 = vadd.f32 %v724, %v2642
        %v2644 = vpop.f32.mrb[0].mxu0
        %v2645 = vadd.f32 %v728, %v2644
        %2646 = vdwg.mxu0
        %2647 = vmatprep.subr.mxu0 %v245
        %2648 = vmatpush1.msra.mxu0 %v244
        %2649 = vmatprep.subr.mxu0 %v366
        %2650 = vmatpush1.msra.mxu0 %v365
        %2651 = vmatprep.subr.mxu0 %v1313
        %2652 = vmatpush1.msra.mxu0 %v1310
        %2653 = vmatprep.subr.mxu0 0.0
        %2654 = vmatpush1.msra.mxu0 0.0
        %2655 = vmatprep.subr.mxu0 0.0
        %2656 = vmatpush1.msra.mxu0 0.0
        %2657 = vmatprep.subr.mxu0 0.0
        %2658 = vmatpush1.msra.mxu0 0.0
        %2659 = vmatprep.subr.mxu0 0.0
        %2660 = vmatpush1.msra.mxu0 0.0
        %2661 = vmatprep.subr.mxu0 0.0
        %2662 = vmatpush1.msra.mxu0 0.0
        %2663 = vmatprep.subr.mxu0 0.0
        %2664 = vmatpush1.msra.mxu0 0.0
        %2665 = vmatprep.subr.mxu0 0.0
        %2666 = vmatpush1.msra.mxu0 0.0
        %2667 = vmatprep.subr.mxu0 0.0
        %2668 = vmatpush1.msra.mxu0 0.0
        %2669 = vmatprep.subr.mxu0 0.0
        %2670 = vmatpush1.msra.mxu0 0.0
        %2671 = vmatprep.subr.mxu0 0.0
        %2672 = vmatpush1.msra.mxu0 0.0
        %2673 = vmatprep.subr.mxu0 0.0
        %2674 = vmatpush1.msra.mxu0 0.0
        %2675 = vmatprep.subr.mxu0 0.0
        %2676 = vmatpush1.msra.mxu0 0.0
        %2677 = vmatprep.subr.mxu0 0.0
        %2678 = vmatpush1.msra.mxu0 0.0
        %2679 = vmatprep.subr.mxu0 0.0
        %2680 = vmatpush1.msra.mxu0 0.0
        %2681 = vmatprep.subr.mxu0 0.0
        %2682 = vmatpush1.msra.mxu0 0.0
        %2683 = vmatprep.subr.mxu0 0.0
        %2684 = vmatpush1.msra.mxu0 0.0
        %2685 = vmatprep.subr.mxu0 0.0
        %2686 = vmatpush1.msra.mxu0 0.0
        %2687 = vmatprep.subr.mxu0 0.0
        %2688 = vmatpush1.msra.mxu0 0.0
        %2689 = vmatprep.subr.mxu0 0.0
        %2690 = vmatpush1.msra.mxu0 0.0
        %2691 = vmatprep.subr.mxu0 0.0
        %2692 = vmatpush1.msra.mxu0 0.0
        %2693 = vmatprep.subr.mxu0 0.0
        %2694 = vmatpush1.msra.mxu0 0.0
        %2695 = vmatprep.subr.mxu0 0.0
        %2696 = vmatpush1.msra.mxu0 0.0
        %2697 = vmatprep.subr.mxu0 0.0
        %2698 = vmatpush1.msra.mxu0 0.0
        %2699 = vmatprep.subr.mxu0 0.0
        %2700 = vmatpush1.msra.mxu0 0.0
        %2701 = vmatprep.subr.mxu0 0.0
        %2702 = vmatpush1.msra.mxu0 0.0
        %2703 = vmatprep.subr.mxu0 0.0
        %2704 = vmatpush1.msra.mxu0 0.0
        %2705 = vmatprep.subr.mxu0 0.0
        %2706 = vmatpush1.msra.mxu0 0.0
        %2707 = vmatprep.subr.mxu0 0.0
        %2708 = vmatpush1.msra.mxu0 0.0
        %2709 = vmatprep.subr.mxu0 0.0
        %2710 = vmatpush1.msra.mxu0 0.0
        %2711 = vmatprep.mubr.f32.mxu0 0.0
        %2712 = vmatmul.mubr.f32.gmra.mrb[0].mxu0 %v1216
        %v2713 = vpop.f32.mrb[0].mxu0
        %v2714 = vadd.f32 %v732, %v2713
        %v2715 = vpop.f32.mrb[0].mxu0
        %v2716 = vadd.f32 %v736, %v2715
        %2717 = vdwg.mxu0
        %2718 = vmatprep.subr.mxu0 %v247
        %2719 = vmatpush1.msra.mxu0 %v246
        %2720 = vmatprep.subr.mxu0 %v368
        %2721 = vmatpush1.msra.mxu0 %v367
        %2722 = vmatprep.subr.mxu0 %v1319
        %2723 = vmatpush1.msra.mxu0 %v1316
        %2724 = vmatprep.subr.mxu0 0.0
        %2725 = vmatpush1.msra.mxu0 0.0
        %2726 = vmatprep.subr.mxu0 0.0
        %2727 = vmatpush1.msra.mxu0 0.0
        %2728 = vmatprep.subr.mxu0 0.0
        %2729 = vmatpush1.msra.mxu0 0.0
        %2730 = vmatprep.subr.mxu0 0.0
        %2731 = vmatpush1.msra.mxu0 0.0
        %2732 = vmatprep.subr.mxu0 0.0
        %2733 = vmatpush1.msra.mxu0 0.0
        %2734 = vmatprep.subr.mxu0 0.0
        %2735 = vmatpush1.msra.mxu0 0.0
        %2736 = vmatprep.subr.mxu0 0.0
        %2737 = vmatpush1.msra.mxu0 0.0
        %2738 = vmatprep.subr.mxu0 0.0
        %2739 = vmatpush1.msra.mxu0 0.0
        %2740 = vmatprep.subr.mxu0 0.0
        %2741 = vmatpush1.msra.mxu0 0.0
        %2742 = vmatprep.subr.mxu0 0.0
        %2743 = vmatpush1.msra.mxu0 0.0
        %2744 = vmatprep.subr.mxu0 0.0
        %2745 = vmatpush1.msra.mxu0 0.0
        %2746 = vmatprep.subr.mxu0 0.0
        %2747 = vmatpush1.msra.mxu0 0.0
        %2748 = vmatprep.subr.mxu0 0.0
        %2749 = vmatpush1.msra.mxu0 0.0
        %2750 = vmatprep.subr.mxu0 0.0
        %2751 = vmatpush1.msra.mxu0 0.0
        %2752 = vmatprep.subr.mxu0 0.0
        %2753 = vmatpush1.msra.mxu0 0.0
        %2754 = vmatprep.subr.mxu0 0.0
        %2755 = vmatpush1.msra.mxu0 0.0
        %2756 = vmatprep.subr.mxu0 0.0
        %2757 = vmatpush1.msra.mxu0 0.0
        %2758 = vmatprep.subr.mxu0 0.0
        %2759 = vmatpush1.msra.mxu0 0.0
        %2760 = vmatprep.subr.mxu0 0.0
        %2761 = vmatpush1.msra.mxu0 0.0
        %2762 = vmatprep.subr.mxu0 0.0
        %2763 = vmatpush1.msra.mxu0 0.0
        %2764 = vmatprep.subr.mxu0 0.0
        %2765 = vmatpush1.msra.mxu0 0.0
        %2766 = vmatprep.subr.mxu0 0.0
        %2767 = vmatpush1.msra.mxu0 0.0
        %2768 = vmatprep.subr.mxu0 0.0
        %2769 = vmatpush1.msra.mxu0 0.0
        %2770 = vmatprep.subr.mxu0 0.0
        %2771 = vmatpush1.msra.mxu0 0.0
        %2772 = vmatprep.subr.mxu0 0.0
        %2773 = vmatpush1.msra.mxu0 0.0
        %2774 = vmatprep.subr.mxu0 0.0
        %2775 = vmatpush1.msra.mxu0 0.0
        %2776 = vmatprep.subr.mxu0 0.0
        %2777 = vmatpush1.msra.mxu0 0.0
        %2778 = vmatprep.subr.mxu0 0.0
        %2779 = vmatpush1.msra.mxu0 0.0
        %2780 = vmatprep.subr.mxu0 0.0
        %2781 = vmatpush1.msra.mxu0 0.0
        %2782 = vmatprep.mubr.f32.mxu0 0.0
        %2783 = vmatmul.mubr.f32.gmra.mrb[0].mxu0 %v1216
        %v2784 = vpop.f32.mrb[0].mxu0
        %v2785 = vadd.f32 %v740, %v2784
        %v2786 = vpop.f32.mrb[0].mxu0
        %v2787 = vadd.f32 %v744, %v2786
        %2788 = vdwg.mxu0
        %2789 = vmatprep.subr.mxu0 %v249
        %2790 = vmatpush1.msra.mxu0 %v248
        %2791 = vmatprep.subr.mxu0 %v370
        %2792 = vmatpush1.msra.mxu0 %v369
        %2793 = vmatprep.subr.mxu0 %v1325
        %2794 = vmatpush1.msra.mxu0 %v1322
        %2795 = vmatprep.subr.mxu0 0.0
        %2796 = vmatpush1.msra.mxu0 0.0
        %2797 = vmatprep.subr.mxu0 0.0
        %2798 = vmatpush1.msra.mxu0 0.0
        %2799 = vmatprep.subr.mxu0 0.0
        %2800 = vmatpush1.msra.mxu0 0.0
        %2801 = vmatprep.subr.mxu0 0.0
        %2802 = vmatpush1.msra.mxu0 0.0
        %2803 = vmatprep.subr.mxu0 0.0
        %2804 = vmatpush1.msra.mxu0 0.0
        %2805 = vmatprep.subr.mxu0 0.0
        %2806 = vmatpush1.msra.mxu0 0.0
        %2807 = vmatprep.subr.mxu0 0.0
        %2808 = vmatpush1.msra.mxu0 0.0
        %2809 = vmatprep.subr.mxu0 0.0
        %2810 = vmatpush1.msra.mxu0 0.0
        %2811 = vmatprep.subr.mxu0 0.0
        %2812 = vmatpush1.msra.mxu0 0.0
        %2813 = vmatprep.subr.mxu0 0.0
        %2814 = vmatpush1.msra.mxu0 0.0
        %2815 = vmatprep.subr.mxu0 0.0
        %2816 = vmatpush1.msra.mxu0 0.0
        %2817 = vmatprep.subr.mxu0 0.0
        %2818 = vmatpush1.msra.mxu0 0.0
        %2819 = vmatprep.subr.mxu0 0.0
        %2820 = vmatpush1.msra.mxu0 0.0
        %2821 = vmatprep.subr.mxu0 0.0
        %2822 = vmatpush1.msra.mxu0 0.0
        %2823 = vmatprep.subr.mxu0 0.0
        %2824 = vmatpush1.msra.mxu0 0.0
        %2825 = vmatprep.subr.mxu0 0.0
        %2826 = vmatpush1.msra.mxu0 0.0
        %2827 = vmatprep.subr.mxu0 0.0
        %2828 = vmatpush1.msra.mxu0 0.0
        %2829 = vmatprep.subr.mxu0 0.0
        %2830 = vmatpush1.msra.mxu0 0.0
        %2831 = vmatprep.subr.mxu0 0.0
        %2832 = vmatpush1.msra.mxu0 0.0
        %2833 = vmatprep.subr.mxu0 0.0
        %2834 = vmatpush1.msra.mxu0 0.0
        %2835 = vmatprep.subr.mxu0 0.0
        %2836 = vmatpush1.msra.mxu0 0.0
        %2837 = vmatprep.subr.mxu0 0.0
        %2838 = vmatpush1.msra.mxu0 0.0
        %2839 = vmatprep.subr.mxu0 0.0
        %2840 = vmatpush1.msra.mxu0 0.0
        %2841 = vmatprep.subr.mxu0 0.0
        %2842 = vmatpush1.msra.mxu0 0.0
        %2843 = vmatprep.subr.mxu0 0.0
        %2844 = vmatpush1.msra.mxu0 0.0
        %2845 = vmatprep.subr.mxu0 0.0
        %2846 = vmatpush1.msra.mxu0 0.0
        %2847 = vmatprep.subr.mxu0 0.0
        %2848 = vmatpush1.msra.mxu0 0.0
        %2849 = vmatprep.subr.mxu0 0.0
        %2850 = vmatpush1.msra.mxu0 0.0
        %2851 = vmatprep.subr.mxu0 0.0
        %2852 = vmatpush1.msra.mxu0 0.0
        %2853 = vmatprep.mubr.f32.mxu0 0.0
        %2854 = vmatmul.mubr.f32.gmra.mrb[0].mxu0 %v1216
        %v2855 = vpop.f32.mrb[0].mxu0
        %v2856 = vadd.f32 %v748, %v2855
        %v2857 = vpop.f32.mrb[0].mxu0
        %v2858 = vadd.f32 %v752, %v2857
        %2859 = vdwg.mxu0
        %2860 = vmatprep.subr.mxu0 %v251
        %2861 = vmatpush1.msra.mxu0 %v250
        %2862 = vmatprep.subr.mxu0 %v372
        %2863 = vmatpush1.msra.mxu0 %v371
        %2864 = vmatprep.subr.mxu0 %v1331
        %2865 = vmatpush1.msra.mxu0 %v1328
        %2866 = vmatprep.subr.mxu0 0.0
        %2867 = vmatpush1.msra.mxu0 0.0
        %2868 = vmatprep.subr.mxu0 0.0
        %2869 = vmatpush1.msra.mxu0 0.0
        %2870 = vmatprep.subr.mxu0 0.0
        %2871 = vmatpush1.msra.mxu0 0.0
        %2872 = vmatprep.subr.mxu0 0.0
        %2873 = vmatpush1.msra.mxu0 0.0
        %2874 = vmatprep.subr.mxu0 0.0
        %2875 = vmatpush1.msra.mxu0 0.0
        %2876 = vmatprep.subr.mxu0 0.0
        %2877 = vmatpush1.msra.mxu0 0.0
        %2878 = vmatprep.subr.mxu0 0.0
        %2879 = vmatpush1.msra.mxu0 0.0
        %2880 = vmatprep.subr.mxu0 0.0
        %2881 = vmatpush1.msra.mxu0 0.0
        %2882 = vmatprep.subr.mxu0 0.0
        %2883 = vmatpush1.msra.mxu0 0.0
        %2884 = vmatprep.subr.mxu0 0.0
        %2885 = vmatpush1.msra.mxu0 0.0
        %2886 = vmatprep.subr.mxu0 0.0
        %2887 = vmatpush1.msra.mxu0 0.0
        %2888 = vmatprep.subr.mxu0 0.0
        %2889 = vmatpush1.msra.mxu0 0.0
        %2890 = vmatprep.subr.mxu0 0.0
        %2891 = vmatpush1.msra.mxu0 0.0
        %2892 = vmatprep.subr.mxu0 0.0
        %2893 = vmatpush1.msra.mxu0 0.0
        %2894 = vmatprep.subr.mxu0 0.0
        %2895 = vmatpush1.msra.mxu0 0.0
        %2896 = vmatprep.subr.mxu0 0.0
        %2897 = vmatpush1.msra.mxu0 0.0
        %2898 = vmatprep.subr.mxu0 0.0
        %2899 = vmatpush1.msra.mxu0 0.0
        %2900 = vmatprep.subr.mxu0 0.0
        %2901 = vmatpush1.msra.mxu0 0.0
        %2902 = vmatprep.subr.mxu0 0.0
        %2903 = vmatpush1.msra.mxu0 0.0
        %2904 = vmatprep.subr.mxu0 0.0
        %2905 = vmatpush1.msra.mxu0 0.0
        %2906 = vmatprep.subr.mxu0 0.0
        %2907 = vmatpush1.msra.mxu0 0.0
        %2908 = vmatprep.subr.mxu0 0.0
        %2909 = vmatpush1.msra.mxu0 0.0
        %2910 = vmatprep.subr.mxu0 0.0
        %2911 = vmatpush1.msra.mxu0 0.0
        %2912 = vmatprep.subr.mxu0 0.0
        %2913 = vmatpush1.msra.mxu0 0.0
        %2914 = vmatprep.subr.mxu0 0.0
        %2915 = vmatpush1.msra.mxu0 0.0
        %2916 = vmatprep.subr.mxu0 0.0
        %2917 = vmatpush1.msra.mxu0 0.0
        %2918 = vmatprep.subr.mxu0 0.0
        %2919 = vmatpush1.msra.mxu0 0.0
        %2920 = vmatprep.subr.mxu0 0.0
        %2921 = vmatpush1.msra.mxu0 0.0
        %2922 = vmatprep.subr.mxu0 0.0
        %2923 = vmatpush1.msra.mxu0 0.0
        %2924 = vmatprep.mubr.f32.mxu0 0.0
        %2925 = vmatmul.mubr.f32.gmra.mrb[0].mxu0 %v1216
        %v2926 = vpop.f32.mrb[0].mxu0
        %v2927 = vadd.f32 %v756, %v2926
        %v2928 = vpop.f32.mrb[0].mxu0
        %v2929 = vadd.f32 %v760, %v2928
        %2930 = vdwg.mxu0
        %2931 = vmatprep.subr.mxu0 %v253
        %2932 = vmatpush1.msra.mxu0 %v252
        %2933 = vmatprep.subr.mxu0 %v374
        %2934 = vmatpush1.msra.mxu0 %v373
        %2935 = vmatprep.subr.mxu0 %v1337
        %2936 = vmatpush1.msra.mxu0 %v1334
        %2937 = vmatprep.subr.mxu0 0.0
        %2938 = vmatpush1.msra.mxu0 0.0
        %2939 = vmatprep.subr.mxu0 0.0
        %2940 = vmatpush1.msra.mxu0 0.0
        %2941 = vmatprep.subr.mxu0 0.0
        %2942 = vmatpush1.msra.mxu0 0.0
        %2943 = vmatprep.subr.mxu0 0.0
        %2944 = vmatpush1.msra.mxu0 0.0
        %2945 = vmatprep.subr.mxu0 0.0
        %2946 = vmatpush1.msra.mxu0 0.0
        %2947 = vmatprep.subr.mxu0 0.0
        %2948 = vmatpush1.msra.mxu0 0.0
        %2949 = vmatprep.subr.mxu0 0.0
        %2950 = vmatpush1.msra.mxu0 0.0
        %2951 = vmatprep.subr.mxu0 0.0
        %2952 = vmatpush1.msra.mxu0 0.0
        %2953 = vmatprep.subr.mxu0 0.0
        %2954 = vmatpush1.msra.mxu0 0.0
        %2955 = vmatprep.subr.mxu0 0.0
        %2956 = vmatpush1.msra.mxu0 0.0
        %2957 = vmatprep.subr.mxu0 0.0
        %2958 = vmatpush1.msra.mxu0 0.0
        %2959 = vmatprep.subr.mxu0 0.0
        %2960 = vmatpush1.msra.mxu0 0.0
        %2961 = vmatprep.subr.mxu0 0.0
        %2962 = vmatpush1.msra.mxu0 0.0
        %2963 = vmatprep.subr.mxu0 0.0
        %2964 = vmatpush1.msra.mxu0 0.0
        %2965 = vmatprep.subr.mxu0 0.0
        %2966 = vmatpush1.msra.mxu0 0.0
        %2967 = vmatprep.subr.mxu0 0.0
        %2968 = vmatpush1.msra.mxu0 0.0
        %2969 = vmatprep.subr.mxu0 0.0
        %2970 = vmatpush1.msra.mxu0 0.0
        %2971 = vmatprep.subr.mxu0 0.0
        %2972 = vmatpush1.msra.mxu0 0.0
        %2973 = vmatprep.subr.mxu0 0.0
        %2974 = vmatpush1.msra.mxu0 0.0
        %2975 = vmatprep.subr.mxu0 0.0
        %2976 = vmatpush1.msra.mxu0 0.0
        %2977 = vmatprep.subr.mxu0 0.0
        %2978 = vmatpush1.msra.mxu0 0.0
        %2979 = vmatprep.subr.mxu0 0.0
        %2980 = vmatpush1.msra.mxu0 0.0
        %2981 = vmatprep.subr.mxu0 0.0
        %2982 = vmatpush1.msra.mxu0 0.0
        %2983 = vmatprep.subr.mxu0 0.0
        %2984 = vmatpush1.msra.mxu0 0.0
        %2985 = vmatprep.subr.mxu0 0.0
        %2986 = vmatpush1.msra.mxu0 0.0
        %2987 = vmatprep.subr.mxu0 0.0
        %2988 = vmatpush1.msra.mxu0 0.0
        %2989 = vmatprep.subr.mxu0 0.0
        %2990 = vmatpush1.msra.mxu0 0.0
        %2991 = vmatprep.subr.mxu0 0.0
        %2992 = vmatpush1.msra.mxu0 0.0
        %2993 = vmatprep.subr.mxu0 0.0
        %2994 = vmatpush1.msra.mxu0 0.0
        %2995 = vmatprep.mubr.f32.mxu0 0.0
        %2996 = vmatmul.mubr.f32.gmra.mrb[0].mxu0 %v1216
        %v2997 = vpop.f32.mrb[0].mxu0
        %v2998 = vadd.f32 %v764, %v2997
        %v2999 = vpop.f32.mrb[0].mxu0
        %v3000 = vadd.f32 %v768, %v2999
        %3001 = vdwg.mxu0
        %3002 = vmatprep.subr.mxu0 %v255
        %3003 = vmatpush1.msra.mxu0 %v254
        %3004 = vmatprep.subr.mxu0 %v376
        %3005 = vmatpush1.msra.mxu0 %v375
        %3006 = vmatprep.subr.mxu0 %v1343
        %3007 = vmatpush1.msra.mxu0 %v1340
        %3008 = vmatprep.subr.mxu0 0.0
        %3009 = vmatpush1.msra.mxu0 0.0
        %3010 = vmatprep.subr.mxu0 0.0
        %3011 = vmatpush1.msra.mxu0 0.0
        %3012 = vmatprep.subr.mxu0 0.0
        %3013 = vmatpush1.msra.mxu0 0.0
        %3014 = vmatprep.subr.mxu0 0.0
        %3015 = vmatpush1.msra.mxu0 0.0
        %3016 = vmatprep.subr.mxu0 0.0
        %3017 = vmatpush1.msra.mxu0 0.0
        %3018 = vmatprep.subr.mxu0 0.0
        %3019 = vmatpush1.msra.mxu0 0.0
        %3020 = vmatprep.subr.mxu0 0.0
        %3021 = vmatpush1.msra.mxu0 0.0
        %3022 = vmatprep.subr.mxu0 0.0
        %3023 = vmatpush1.msra.mxu0 0.0
        %3024 = vmatprep.subr.mxu0 0.0
        %3025 = vmatpush1.msra.mxu0 0.0
        %3026 = vmatprep.subr.mxu0 0.0
        %3027 = vmatpush1.msra.mxu0 0.0
        %3028 = vmatprep.subr.mxu0 0.0
        %3029 = vmatpush1.msra.mxu0 0.0
        %3030 = vmatprep.subr.mxu0 0.0
        %3031 = vmatpush1.msra.mxu0 0.0
        %3032 = vmatprep.subr.mxu0 0.0
        %3033 = vmatpush1.msra.mxu0 0.0
        %3034 = vmatprep.subr.mxu0 0.0
        %3035 = vmatpush1.msra.mxu0 0.0
        %3036 = vmatprep.subr.mxu0 0.0
        %3037 = vmatpush1.msra.mxu0 0.0
        %3038 = vmatprep.subr.mxu0 0.0
        %3039 = vmatpush1.msra.mxu0 0.0
        %3040 = vmatprep.subr.mxu0 0.0
        %3041 = vmatpush1.msra.mxu0 0.0
        %3042 = vmatprep.subr.mxu0 0.0
        %3043 = vmatpush1.msra.mxu0 0.0
        %3044 = vmatprep.subr.mxu0 0.0
        %3045 = vmatpush1.msra.mxu0 0.0
        %3046 = vmatprep.subr.mxu0 0.0
        %3047 = vmatpush1.msra.mxu0 0.0
        %3048 = vmatprep.subr.mxu0 0.0
        %3049 = vmatpush1.msra.mxu0 0.0
        %3050 = vmatprep.subr.mxu0 0.0
        %3051 = vmatpush1.msra.mxu0 0.0
        %3052 = vmatprep.subr.mxu0 0.0
        %3053 = vmatpush1.msra.mxu0 0.0
        %3054 = vmatprep.subr.mxu0 0.0
        %3055 = vmatpush1.msra.mxu0 0.0
        %3056 = vmatprep.subr.mxu0 0.0
        %3057 = vmatpush1.msra.mxu0 0.0
        %3058 = vmatprep.subr.mxu0 0.0
        %3059 = vmatpush1.msra.mxu0 0.0
        %3060 = vmatprep.subr.mxu0 0.0
        %3061 = vmatpush1.msra.mxu0 0.0
        %3062 = vmatprep.subr.mxu0 0.0
        %3063 = vmatpush1.msra.mxu0 0.0
        %3064 = vmatprep.subr.mxu0 0.0
        %3065 = vmatpush1.msra.mxu0 0.0
        %3066 = vmatprep.mubr.f32.mxu0 0.0
        %3067 = vmatmul.mubr.f32.gmra.mrb[0].mxu0 %v1216
        %v3068 = vpop.f32.mrb[0].mxu0
        %v3069 = vadd.f32 %v772, %v3068
        %v3070 = vpop.f32.mrb[0].mxu0
        %v3071 = vadd.f32 %v776, %v3070
        %3072 = vdwg.mxu0
        %3073 = vmatprep.subr.mxu0 %v257
        %3074 = vmatpush1.msra.mxu0 %v256
        %3075 = vmatprep.subr.mxu0 %v378
        %3076 = vmatpush1.msra.mxu0 %v377
        %3077 = vmatprep.subr.mxu0 %v1349
        %3078 = vmatpush1.msra.mxu0 %v1346
        %3079 = vmatprep.subr.mxu0 0.0
        %3080 = vmatpush1.msra.mxu0 0.0
        %3081 = vmatprep.subr.mxu0 0.0
        %3082 = vmatpush1.msra.mxu0 0.0
        %3083 = vmatprep.subr.mxu0 0.0
        %3084 = vmatpush1.msra.mxu0 0.0
        %3085 = vmatprep.subr.mxu0 0.0
        %3086 = vmatpush1.msra.mxu0 0.0
        %3087 = vmatprep.subr.mxu0 0.0
        %3088 = vmatpush1.msra.mxu0 0.0
        %3089 = vmatprep.subr.mxu0 0.0
        %3090 = vmatpush1.msra.mxu0 0.0
        %3091 = vmatprep.subr.mxu0 0.0
        %3092 = vmatpush1.msra.mxu0 0.0
        %3093 = vmatprep.subr.mxu0 0.0
        %3094 = vmatpush1.msra.mxu0 0.0
        %3095 = vmatprep.subr.mxu0 0.0
        %3096 = vmatpush1.msra.mxu0 0.0
        %3097 = vmatprep.subr.mxu0 0.0
        %3098 = vmatpush1.msra.mxu0 0.0
        %3099 = vmatprep.subr.mxu0 0.0
        %3100 = vmatpush1.msra.mxu0 0.0
        %3101 = vmatprep.subr.mxu0 0.0
        %3102 = vmatpush1.msra.mxu0 0.0
        %3103 = vmatprep.subr.mxu0 0.0
        %3104 = vmatpush1.msra.mxu0 0.0
        %3105 = vmatprep.subr.mxu0 0.0
        %3106 = vmatpush1.msra.mxu0 0.0
        %3107 = vmatprep.subr.mxu0 0.0
        %3108 = vmatpush1.msra.mxu0 0.0
        %3109 = vmatprep.subr.mxu0 0.0
        %3110 = vmatpush1.msra.mxu0 0.0
        %3111 = vmatprep.subr.mxu0 0.0
        %3112 = vmatpush1.msra.mxu0 0.0
        %3113 = vmatprep.subr.mxu0 0.0
        %3114 = vmatpush1.msra.mxu0 0.0
        %3115 = vmatprep.subr.mxu0 0.0
        %3116 = vmatpush1.msra.mxu0 0.0
        %3117 = vmatprep.subr.mxu0 0.0
        %3118 = vmatpush1.msra.mxu0 0.0
        %3119 = vmatprep.subr.mxu0 0.0
        %3120 = vmatpush1.msra.mxu0 0.0
        %3121 = vmatprep.subr.mxu0 0.0
        %3122 = vmatpush1.msra.mxu0 0.0
        %3123 = vmatprep.subr.mxu0 0.0
        %3124 = vmatpush1.msra.mxu0 0.0
        %3125 = vmatprep.subr.mxu0 0.0
        %3126 = vmatpush1.msra.mxu0 0.0
        %3127 = vmatprep.subr.mxu0 0.0
        %3128 = vmatpush1.msra.mxu0 0.0
        %3129 = vmatprep.subr.mxu0 0.0
        %3130 = vmatpush1.msra.mxu0 0.0
        %3131 = vmatprep.subr.mxu0 0.0
        %3132 = vmatpush1.msra.mxu0 0.0
        %3133 = vmatprep.subr.mxu0 0.0
        %3134 = vmatpush1.msra.mxu0 0.0
        %3135 = vmatprep.subr.mxu0 0.0
        %3136 = vmatpush1.msra.mxu0 0.0
        %3137 = vmatprep.mubr.f32.mxu0 0.0
        %3138 = vmatmul.mubr.f32.gmra.mrb[0].mxu0 %v1216
        %v3139 = vpop.f32.mrb[0].mxu0
        %v3140 = vadd.f32 %v780, %v3139
        %v3141 = vpop.f32.mrb[0].mxu0
        %v3142 = vadd.f32 %v784, %v3141
        %3143 = vdwg.mxu0
        %3144 = vmatprep.subr.mxu0 %v259
        %3145 = vmatpush1.msra.mxu0 %v258
        %3146 = vmatprep.subr.mxu0 %v380
        %3147 = vmatpush1.msra.mxu0 %v379
        %3148 = vmatprep.subr.mxu0 %v1355
        %3149 = vmatpush1.msra.mxu0 %v1352
        %3150 = vmatprep.subr.mxu0 0.0
        %3151 = vmatpush1.msra.mxu0 0.0
        %3152 = vmatprep.subr.mxu0 0.0
        %3153 = vmatpush1.msra.mxu0 0.0
        %3154 = vmatprep.subr.mxu0 0.0
        %3155 = vmatpush1.msra.mxu0 0.0
        %3156 = vmatprep.subr.mxu0 0.0
        %3157 = vmatpush1.msra.mxu0 0.0
        %3158 = vmatprep.subr.mxu0 0.0
        %3159 = vmatpush1.msra.mxu0 0.0
        %3160 = vmatprep.subr.mxu0 0.0
        %3161 = vmatpush1.msra.mxu0 0.0
        %3162 = vmatprep.subr.mxu0 0.0
        %3163 = vmatpush1.msra.mxu0 0.0
        %3164 = vmatprep.subr.mxu0 0.0
        %3165 = vmatpush1.msra.mxu0 0.0
        %3166 = vmatprep.subr.mxu0 0.0
        %3167 = vmatpush1.msra.mxu0 0.0
        %3168 = vmatprep.subr.mxu0 0.0
        %3169 = vmatpush1.msra.mxu0 0.0
        %3170 = vmatprep.subr.mxu0 0.0
        %3171 = vmatpush1.msra.mxu0 0.0
        %3172 = vmatprep.subr.mxu0 0.0
        %3173 = vmatpush1.msra.mxu0 0.0
        %3174 = vmatprep.subr.mxu0 0.0
        %3175 = vmatpush1.msra.mxu0 0.0
        %3176 = vmatprep.subr.mxu0 0.0
        %3177 = vmatpush1.msra.mxu0 0.0
        %3178 = vmatprep.subr.mxu0 0.0
        %3179 = vmatpush1.msra.mxu0 0.0
        %3180 = vmatprep.subr.mxu0 0.0
        %3181 = vmatpush1.msra.mxu0 0.0
        %3182 = vmatprep.subr.mxu0 0.0
        %3183 = vmatpush1.msra.mxu0 0.0
        %3184 = vmatprep.subr.mxu0 0.0
        %3185 = vmatpush1.msra.mxu0 0.0
        %3186 = vmatprep.subr.mxu0 0.0
        %3187 = vmatpush1.msra.mxu0 0.0
        %3188 = vmatprep.subr.mxu0 0.0
        %3189 = vmatpush1.msra.mxu0 0.0
        %3190 = vmatprep.subr.mxu0 0.0
        %3191 = vmatpush1.msra.mxu0 0.0
        %3192 = vmatprep.subr.mxu0 0.0
        %3193 = vmatpush1.msra.mxu0 0.0
        %3194 = vmatprep.subr.mxu0 0.0
        %3195 = vmatpush1.msra.mxu0 0.0
        %3196 = vmatprep.subr.mxu0 0.0
        %3197 = vmatpush1.msra.mxu0 0.0
        %3198 = vmatprep.subr.mxu0 0.0
        %3199 = vmatpush1.msra.mxu0 0.0
        %3200 = vmatprep.subr.mxu0 0.0
        %3201 = vmatpush1.msra.mxu0 0.0
        %3202 = vmatprep.subr.mxu0 0.0
        %3203 = vmatpush1.msra.mxu0 0.0
        %3204 = vmatprep.subr.mxu0 0.0
        %3205 = vmatpush1.msra.mxu0 0.0
        %3206 = vmatprep.subr.mxu0 0.0
        %3207 = vmatpush1.msra.mxu0 0.0
        %3208 = vmatprep.mubr.f32.mxu0 0.0
        %3209 = vmatmul.mubr.f32.gmra.mrb[0].mxu0 %v1216
        %v3210 = vpop.f32.mrb[0].mxu0
        %v3211 = vadd.f32 %v788, %v3210
        %v3212 = vpop.f32.mrb[0].mxu0
        %v3213 = vadd.f32 %v792, %v3212
        %3214 = vdwg.mxu0
        %3215 = vmatprep.subr.mxu0 %v261
        %3216 = vmatpush1.msra.mxu0 %v260
        %3217 = vmatprep.subr.mxu0 %v382
        %3218 = vmatpush1.msra.mxu0 %v381
        %3219 = vmatprep.subr.mxu0 %v1361
        %3220 = vmatpush1.msra.mxu0 %v1358
        %3221 = vmatprep.subr.mxu0 0.0
        %3222 = vmatpush1.msra.mxu0 0.0
        %3223 = vmatprep.subr.mxu0 0.0
        %3224 = vmatpush1.msra.mxu0 0.0
        %3225 = vmatprep.subr.mxu0 0.0
        %3226 = vmatpush1.msra.mxu0 0.0
        %3227 = vmatprep.subr.mxu0 0.0
        %3228 = vmatpush1.msra.mxu0 0.0
        %3229 = vmatprep.subr.mxu0 0.0
        %3230 = vmatpush1.msra.mxu0 0.0
        %3231 = vmatprep.subr.mxu0 0.0
        %3232 = vmatpush1.msra.mxu0 0.0
        %3233 = vmatprep.subr.mxu0 0.0
        %3234 = vmatpush1.msra.mxu0 0.0
        %3235 = vmatprep.subr.mxu0 0.0
        %3236 = vmatpush1.msra.mxu0 0.0
        %3237 = vmatprep.subr.mxu0 0.0
        %3238 = vmatpush1.msra.mxu0 0.0
        %3239 = vmatprep.subr.mxu0 0.0
        %3240 = vmatpush1.msra.mxu0 0.0
        %3241 = vmatprep.subr.mxu0 0.0
        %3242 = vmatpush1.msra.mxu0 0.0
        %3243 = vmatprep.subr.mxu0 0.0
        %3244 = vmatpush1.msra.mxu0 0.0
        %3245 = vmatprep.subr.mxu0 0.0
        %3246 = vmatpush1.msra.mxu0 0.0
        %3247 = vmatprep.subr.mxu0 0.0
        %3248 = vmatpush1.msra.mxu0 0.0
        %3249 = vmatprep.subr.mxu0 0.0
        %3250 = vmatpush1.msra.mxu0 0.0
        %3251 = vmatprep.subr.mxu0 0.0
        %3252 = vmatpush1.msra.mxu0 0.0
        %3253 = vmatprep.subr.mxu0 0.0
        %3254 = vmatpush1.msra.mxu0 0.0
        %3255 = vmatprep.subr.mxu0 0.0
        %3256 = vmatpush1.msra.mxu0 0.0
        %3257 = vmatprep.subr.mxu0 0.0
        %3258 = vmatpush1.msra.mxu0 0.0
        %3259 = vmatprep.subr.mxu0 0.0
        %3260 = vmatpush1.msra.mxu0 0.0
        %3261 = vmatprep.subr.mxu0 0.0
        %3262 = vmatpush1.msra.mxu0 0.0
        %3263 = vmatprep.subr.mxu0 0.0
        %3264 = vmatpush1.msra.mxu0 0.0
        %3265 = vmatprep.subr.mxu0 0.0
        %3266 = vmatpush1.msra.mxu0 0.0
        %3267 = vmatprep.subr.mxu0 0.0
        %3268 = vmatpush1.msra.mxu0 0.0
        %3269 = vmatprep.subr.mxu0 0.0
        %3270 = vmatpush1.msra.mxu0 0.0
        %3271 = vmatprep.subr.mxu0 0.0
        %3272 = vmatpush1.msra.mxu0 0.0
        %3273 = vmatprep.subr.mxu0 0.0
        %3274 = vmatpush1.msra.mxu0 0.0
        %3275 = vmatprep.subr.mxu0 0.0
        %3276 = vmatpush1.msra.mxu0 0.0
        %3277 = vmatprep.subr.mxu0 0.0
        %3278 = vmatpush1.msra.mxu0 0.0
        %3279 = vmatprep.mubr.f32.mxu0 0.0
        %3280 = vmatmul.mubr.f32.gmra.mrb[0].mxu0 %v1216
        %v3281 = vpop.f32.mrb[0].mxu0
        %v3282 = vadd.f32 %v796, %v3281
        %v3283 = vpop.f32.mrb[0].mxu0
        %v3284 = vadd.f32 %v800, %v3283
        %3285 = vdwg.mxu0
        %3286 = vmatprep.subr.mxu0 %v263
        %3287 = vmatpush1.msra.mxu0 %v262
        %3288 = vmatprep.subr.mxu0 %v384
        %3289 = vmatpush1.msra.mxu0 %v383
        %3290 = vmatprep.subr.mxu0 %v1367
        %3291 = vmatpush1.msra.mxu0 %v1364
        %3292 = vmatprep.subr.mxu0 0.0
        %3293 = vmatpush1.msra.mxu0 0.0
        %3294 = vmatprep.subr.mxu0 0.0
        %3295 = vmatpush1.msra.mxu0 0.0
        %3296 = vmatprep.subr.mxu0 0.0
        %3297 = vmatpush1.msra.mxu0 0.0
        %3298 = vmatprep.subr.mxu0 0.0
        %3299 = vmatpush1.msra.mxu0 0.0
        %3300 = vmatprep.subr.mxu0 0.0
        %3301 = vmatpush1.msra.mxu0 0.0
        %3302 = vmatprep.subr.mxu0 0.0
        %3303 = vmatpush1.msra.mxu0 0.0
        %3304 = vmatprep.subr.mxu0 0.0
        %3305 = vmatpush1.msra.mxu0 0.0
        %3306 = vmatprep.subr.mxu0 0.0
        %3307 = vmatpush1.msra.mxu0 0.0
        %3308 = vmatprep.subr.mxu0 0.0
        %3309 = vmatpush1.msra.mxu0 0.0
        %3310 = vmatprep.subr.mxu0 0.0
        %3311 = vmatpush1.msra.mxu0 0.0
        %3312 = vmatprep.subr.mxu0 0.0
        %3313 = vmatpush1.msra.mxu0 0.0
        %3314 = vmatprep.subr.mxu0 0.0
        %3315 = vmatpush1.msra.mxu0 0.0
        %3316 = vmatprep.subr.mxu0 0.0
        %3317 = vmatpush1.msra.mxu0 0.0
        %3318 = vmatprep.subr.mxu0 0.0
        %3319 = vmatpush1.msra.mxu0 0.0
        %3320 = vmatprep.subr.mxu0 0.0
        %3321 = vmatpush1.msra.mxu0 0.0
        %3322 = vmatprep.subr.mxu0 0.0
        %3323 = vmatpush1.msra.mxu0 0.0
        %3324 = vmatprep.subr.mxu0 0.0
        %3325 = vmatpush1.msra.mxu0 0.0
        %3326 = vmatprep.subr.mxu0 0.0
        %3327 = vmatpush1.msra.mxu0 0.0
        %3328 = vmatprep.subr.mxu0 0.0
        %3329 = vmatpush1.msra.mxu0 0.0
        %3330 = vmatprep.subr.mxu0 0.0
        %3331 = vmatpush1.msra.mxu0 0.0
        %3332 = vmatprep.subr.mxu0 0.0
        %3333 = vmatpush1.msra.mxu0 0.0
        %3334 = vmatprep.subr.mxu0 0.0
        %3335 = vmatpush1.msra.mxu0 0.0
        %3336 = vmatprep.subr.mxu0 0.0
        %3337 = vmatpush1.msra.mxu0 0.0
        %3338 = vmatprep.subr.mxu0 0.0
        %3339 = vmatpush1.msra.mxu0 0.0
        %3340 = vmatprep.subr.mxu0 0.0
        %3341 = vmatpush1.msra.mxu0 0.0
        %3342 = vmatprep.subr.mxu0 0.0
        %3343 = vmatpush1.msra.mxu0 0.0
        %3344 = vmatprep.subr.mxu0 0.0
        %3345 = vmatpush1.msra.mxu0 0.0
        %3346 = vmatprep.subr.mxu0 0.0
        %3347 = vmatpush1.msra.mxu0 0.0
        %3348 = vmatprep.subr.mxu0 0.0
        %3349 = vmatpush1.msra.mxu0 0.0
        %3350 = vmatprep.mubr.f32.mxu0 0.0
        %3351 = vmatmul.mubr.f32.gmra.mrb[0].mxu0 %v1216
        %v3352 = vpop.f32.mrb[0].mxu0
        %v3353 = vadd.f32 %v804, %v3352
        %v3354 = vpop.f32.mrb[0].mxu0
        %v3355 = vadd.f32 %v808, %v3354
        %3356 = vdwg.mxu0
        %3357 = vmatprep.subr.mxu0 %v265
        %3358 = vmatpush1.msra.mxu0 %v264
        %3359 = vmatprep.subr.mxu0 %v386
        %3360 = vmatpush1.msra.mxu0 %v385
        %3361 = vmatprep.subr.mxu0 %v1373
        %3362 = vmatpush1.msra.mxu0 %v1370
        %3363 = vmatprep.subr.mxu0 0.0
        %3364 = vmatpush1.msra.mxu0 0.0
        %3365 = vmatprep.subr.mxu0 0.0
        %3366 = vmatpush1.msra.mxu0 0.0
        %3367 = vmatprep.subr.mxu0 0.0
        %3368 = vmatpush1.msra.mxu0 0.0
        %3369 = vmatprep.subr.mxu0 0.0
        %3370 = vmatpush1.msra.mxu0 0.0
        %3371 = vmatprep.subr.mxu0 0.0
        %3372 = vmatpush1.msra.mxu0 0.0
        %3373 = vmatprep.subr.mxu0 0.0
        %3374 = vmatpush1.msra.mxu0 0.0
        %3375 = vmatprep.subr.mxu0 0.0
        %3376 = vmatpush1.msra.mxu0 0.0
        %3377 = vmatprep.subr.mxu0 0.0
        %3378 = vmatpush1.msra.mxu0 0.0
        %3379 = vmatprep.subr.mxu0 0.0
        %3380 = vmatpush1.msra.mxu0 0.0
        %3381 = vmatprep.subr.mxu0 0.0
        %3382 = vmatpush1.msra.mxu0 0.0
        %3383 = vmatprep.subr.mxu0 0.0
        %3384 = vmatpush1.msra.mxu0 0.0
        %3385 = vmatprep.subr.mxu0 0.0
        %3386 = vmatpush1.msra.mxu0 0.0
        %3387 = vmatprep.subr.mxu0 0.0
        %3388 = vmatpush1.msra.mxu0 0.0
        %3389 = vmatprep.subr.mxu0 0.0
        %3390 = vmatpush1.msra.mxu0 0.0
        %3391 = vmatprep.subr.mxu0 0.0
        %3392 = vmatpush1.msra.mxu0 0.0
        %3393 = vmatprep.subr.mxu0 0.0
        %3394 = vmatpush1.msra.mxu0 0.0
        %3395 = vmatprep.subr.mxu0 0.0
        %3396 = vmatpush1.msra.mxu0 0.0
        %3397 = vmatprep.subr.mxu0 0.0
        %3398 = vmatpush1.msra.mxu0 0.0
        %3399 = vmatprep.subr.mxu0 0.0
        %3400 = vmatpush1.msra.mxu0 0.0
        %3401 = vmatprep.subr.mxu0 0.0
        %3402 = vmatpush1.msra.mxu0 0.0
        %3403 = vmatprep.subr.mxu0 0.0
        %3404 = vmatpush1.msra.mxu0 0.0
        %3405 = vmatprep.subr.mxu0 0.0
        %3406 = vmatpush1.msra.mxu0 0.0
        %3407 = vmatprep.subr.mxu0 0.0
        %3408 = vmatpush1.msra.mxu0 0.0
        %3409 = vmatprep.subr.mxu0 0.0
        %3410 = vmatpush1.msra.mxu0 0.0
        %3411 = vmatprep.subr.mxu0 0.0
        %3412 = vmatpush1.msra.mxu0 0.0
        %3413 = vmatprep.subr.mxu0 0.0
        %3414 = vmatpush1.msra.mxu0 0.0
        %3415 = vmatprep.subr.mxu0 0.0
        %3416 = vmatpush1.msra.mxu0 0.0
        %3417 = vmatprep.subr.mxu0 0.0
        %3418 = vmatpush1.msra.mxu0 0.0
        %3419 = vmatprep.subr.mxu0 0.0
        %3420 = vmatpush1.msra.mxu0 0.0
        %3421 = vmatprep.mubr.f32.mxu0 0.0
        %3422 = vmatmul.mubr.f32.gmra.mrb[0].mxu0 %v1216
        %v3423 = vpop.f32.mrb[0].mxu0
        %v3424 = vadd.f32 %v812, %v3423
        %v3425 = vpop.f32.mrb[0].mxu0
        %v3426 = vadd.f32 %v816, %v3425
        %3427 = vdwg.mxu0
        %3428 = vmatprep.subr.mxu0 %v267
        %3429 = vmatpush1.msra.mxu0 %v266
        %3430 = vmatprep.subr.mxu0 %v388
        %3431 = vmatpush1.msra.mxu0 %v387
        %3432 = vmatprep.subr.mxu0 %v1379
        %3433 = vmatpush1.msra.mxu0 %v1376
        %3434 = vmatprep.subr.mxu0 0.0
        %3435 = vmatpush1.msra.mxu0 0.0
        %3436 = vmatprep.subr.mxu0 0.0
        %3437 = vmatpush1.msra.mxu0 0.0
        %3438 = vmatprep.subr.mxu0 0.0
        %3439 = vmatpush1.msra.mxu0 0.0
        %3440 = vmatprep.subr.mxu0 0.0
        %3441 = vmatpush1.msra.mxu0 0.0
        %3442 = vmatprep.subr.mxu0 0.0
        %3443 = vmatpush1.msra.mxu0 0.0
        %3444 = vmatprep.subr.mxu0 0.0
        %3445 = vmatpush1.msra.mxu0 0.0
        %3446 = vmatprep.subr.mxu0 0.0
        %3447 = vmatpush1.msra.mxu0 0.0
        %3448 = vmatprep.subr.mxu0 0.0
        %3449 = vmatpush1.msra.mxu0 0.0
        %3450 = vmatprep.subr.mxu0 0.0
        %3451 = vmatpush1.msra.mxu0 0.0
        %3452 = vmatprep.subr.mxu0 0.0
        %3453 = vmatpush1.msra.mxu0 0.0
        %3454 = vmatprep.subr.mxu0 0.0
        %3455 = vmatpush1.msra.mxu0 0.0
        %3456 = vmatprep.subr.mxu0 0.0
        %3457 = vmatpush1.msra.mxu0 0.0
        %3458 = vmatprep.subr.mxu0 0.0
        %3459 = vmatpush1.msra.mxu0 0.0
        %3460 = vmatprep.subr.mxu0 0.0
        %3461 = vmatpush1.msra.mxu0 0.0
        %3462 = vmatprep.subr.mxu0 0.0
        %3463 = vmatpush1.msra.mxu0 0.0
        %3464 = vmatprep.subr.mxu0 0.0
        %3465 = vmatpush1.msra.mxu0 0.0
        %3466 = vmatprep.subr.mxu0 0.0
        %3467 = vmatpush1.msra.mxu0 0.0
        %3468 = vmatprep.subr.mxu0 0.0
        %3469 = vmatpush1.msra.mxu0 0.0
        %3470 = vmatprep.subr.mxu0 0.0
        %3471 = vmatpush1.msra.mxu0 0.0
        %3472 = vmatprep.subr.mxu0 0.0
        %3473 = vmatpush1.msra.mxu0 0.0
        %3474 = vmatprep.subr.mxu0 0.0
        %3475 = vmatpush1.msra.mxu0 0.0
        %3476 = vmatprep.subr.mxu0 0.0
        %3477 = vmatpush1.msra.mxu0 0.0
        %3478 = vmatprep.subr.mxu0 0.0
        %3479 = vmatpush1.msra.mxu0 0.0
        %3480 = vmatprep.subr.mxu0 0.0
        %3481 = vmatpush1.msra.mxu0 0.0
        %3482 = vmatprep.subr.mxu0 0.0
        %3483 = vmatpush1.msra.mxu0 0.0
        %3484 = vmatprep.subr.mxu0 0.0
        %3485 = vmatpush1.msra.mxu0 0.0
        %3486 = vmatprep.subr.mxu0 0.0
        %3487 = vmatpush1.msra.mxu0 0.0
        %3488 = vmatprep.subr.mxu0 0.0
        %3489 = vmatpush1.msra.mxu0 0.0
        %3490 = vmatprep.subr.mxu0 0.0
        %3491 = vmatpush1.msra.mxu0 0.0
        %3492 = vmatprep.mubr.f32.mxu0 0.0
        %3493 = vmatmul.mubr.f32.gmra.mrb[0].mxu0 %v1216
        %v3494 = vpop.f32.mrb[0].mxu0
        %v3495 = vadd.f32 %v820, %v3494
        %v3496 = vpop.f32.mrb[0].mxu0
        %v3497 = vadd.f32 %v824, %v3496
        %3498 = vdwg.mxu0
        %3499 = vmatprep.subr.mxu0 %v269
        %3500 = vmatpush1.msra.mxu0 %v268
        %3501 = vmatprep.subr.mxu0 %v390
        %3502 = vmatpush1.msra.mxu0 %v389
        %3503 = vmatprep.subr.mxu0 %v1385
        %3504 = vmatpush1.msra.mxu0 %v1382
        %3505 = vmatprep.subr.mxu0 0.0
        %3506 = vmatpush1.msra.mxu0 0.0
        %3507 = vmatprep.subr.mxu0 0.0
        %3508 = vmatpush1.msra.mxu0 0.0
        %3509 = vmatprep.subr.mxu0 0.0
        %3510 = vmatpush1.msra.mxu0 0.0
        %3511 = vmatprep.subr.mxu0 0.0
        %3512 = vmatpush1.msra.mxu0 0.0
        %3513 = vmatprep.subr.mxu0 0.0
        %3514 = vmatpush1.msra.mxu0 0.0
        %3515 = vmatprep.subr.mxu0 0.0
        %3516 = vmatpush1.msra.mxu0 0.0
        %3517 = vmatprep.subr.mxu0 0.0
        %3518 = vmatpush1.msra.mxu0 0.0
        %3519 = vmatprep.subr.mxu0 0.0
        %3520 = vmatpush1.msra.mxu0 0.0
        %3521 = vmatprep.subr.mxu0 0.0
        %3522 = vmatpush1.msra.mxu0 0.0
        %3523 = vmatprep.subr.mxu0 0.0
        %3524 = vmatpush1.msra.mxu0 0.0
        %3525 = vmatprep.subr.mxu0 0.0
        %3526 = vmatpush1.msra.mxu0 0.0
        %3527 = vmatprep.subr.mxu0 0.0
        %3528 = vmatpush1.msra.mxu0 0.0
        %3529 = vmatprep.subr.mxu0 0.0
        %3530 = vmatpush1.msra.mxu0 0.0
        %3531 = vmatprep.subr.mxu0 0.0
        %3532 = vmatpush1.msra.mxu0 0.0
        %3533 = vmatprep.subr.mxu0 0.0
        %3534 = vmatpush1.msra.mxu0 0.0
        %3535 = vmatprep.subr.mxu0 0.0
        %3536 = vmatpush1.msra.mxu0 0.0
        %3537 = vmatprep.subr.mxu0 0.0
        %3538 = vmatpush1.msra.mxu0 0.0
        %3539 = vmatprep.subr.mxu0 0.0
        %3540 = vmatpush1.msra.mxu0 0.0
        %3541 = vmatprep.subr.mxu0 0.0
        %3542 = vmatpush1.msra.mxu0 0.0
        %3543 = vmatprep.subr.mxu0 0.0
        %3544 = vmatpush1.msra.mxu0 0.0
        %3545 = vmatprep.subr.mxu0 0.0
        %3546 = vmatpush1.msra.mxu0 0.0
        %3547 = vmatprep.subr.mxu0 0.0
        %3548 = vmatpush1.msra.mxu0 0.0
        %3549 = vmatprep.subr.mxu0 0.0
        %3550 = vmatpush1.msra.mxu0 0.0
        %3551 = vmatprep.subr.mxu0 0.0
        %3552 = vmatpush1.msra.mxu0 0.0
        %3553 = vmatprep.subr.mxu0 0.0
        %3554 = vmatpush1.msra.mxu0 0.0
        %3555 = vmatprep.subr.mxu0 0.0
        %3556 = vmatpush1.msra.mxu0 0.0
        %3557 = vmatprep.subr.mxu0 0.0
        %3558 = vmatpush1.msra.mxu0 0.0
        %3559 = vmatprep.subr.mxu0 0.0
        %3560 = vmatpush1.msra.mxu0 0.0
        %3561 = vmatprep.subr.mxu0 0.0
        %3562 = vmatpush1.msra.mxu0 0.0
        %3563 = vmatprep.mubr.f32.mxu0 0.0
        %3564 = vmatmul.mubr.f32.gmra.mrb[0].mxu0 %v1216
        %v3565 = vpop.f32.mrb[0].mxu0
        %v3566 = vadd.f32 %v828, %v3565
        %v3567 = vpop.f32.mrb[0].mxu0
        %v3568 = vadd.f32 %v832, %v3567
        %3569 = vdwg.mxu0
        %3570 = vmatprep.subr.mxu0 %v271
        %3571 = vmatpush1.msra.mxu0 %v270
        %3572 = vmatprep.subr.mxu0 %v392
        %3573 = vmatpush1.msra.mxu0 %v391
        %3574 = vmatprep.subr.mxu0 %v1391
        %3575 = vmatpush1.msra.mxu0 %v1388
        %3576 = vmatprep.subr.mxu0 0.0
        %3577 = vmatpush1.msra.mxu0 0.0
        %3578 = vmatprep.subr.mxu0 0.0
        %3579 = vmatpush1.msra.mxu0 0.0
        %3580 = vmatprep.subr.mxu0 0.0
        %3581 = vmatpush1.msra.mxu0 0.0
        %3582 = vmatprep.subr.mxu0 0.0
        %3583 = vmatpush1.msra.mxu0 0.0
        %3584 = vmatprep.subr.mxu0 0.0
        %3585 = vmatpush1.msra.mxu0 0.0
        %3586 = vmatprep.subr.mxu0 0.0
        %3587 = vmatpush1.msra.mxu0 0.0
        %3588 = vmatprep.subr.mxu0 0.0
        %3589 = vmatpush1.msra.mxu0 0.0
        %3590 = vmatprep.subr.mxu0 0.0
        %3591 = vmatpush1.msra.mxu0 0.0
        %3592 = vmatprep.subr.mxu0 0.0
        %3593 = vmatpush1.msra.mxu0 0.0
        %3594 = vmatprep.subr.mxu0 0.0
        %3595 = vmatpush1.msra.mxu0 0.0
        %3596 = vmatprep.subr.mxu0 0.0
        %3597 = vmatpush1.msra.mxu0 0.0
        %3598 = vmatprep.subr.mxu0 0.0
        %3599 = vmatpush1.msra.mxu0 0.0
        %3600 = vmatprep.subr.mxu0 0.0
        %3601 = vmatpush1.msra.mxu0 0.0
        %3602 = vmatprep.subr.mxu0 0.0
        %3603 = vmatpush1.msra.mxu0 0.0
        %3604 = vmatprep.subr.mxu0 0.0
        %3605 = vmatpush1.msra.mxu0 0.0
        %3606 = vmatprep.subr.mxu0 0.0
        %3607 = vmatpush1.msra.mxu0 0.0
        %3608 = vmatprep.subr.mxu0 0.0
        %3609 = vmatpush1.msra.mxu0 0.0
        %3610 = vmatprep.subr.mxu0 0.0
        %3611 = vmatpush1.msra.mxu0 0.0
        %3612 = vmatprep.subr.mxu0 0.0
        %3613 = vmatpush1.msra.mxu0 0.0
        %3614 = vmatprep.subr.mxu0 0.0
        %3615 = vmatpush1.msra.mxu0 0.0
        %3616 = vmatprep.subr.mxu0 0.0
        %3617 = vmatpush1.msra.mxu0 0.0
        %3618 = vmatprep.subr.mxu0 0.0
        %3619 = vmatpush1.msra.mxu0 0.0
        %3620 = vmatprep.subr.mxu0 0.0
        %3621 = vmatpush1.msra.mxu0 0.0
        %3622 = vmatprep.subr.mxu0 0.0
        %3623 = vmatpush1.msra.mxu0 0.0
        %3624 = vmatprep.subr.mxu0 0.0
        %3625 = vmatpush1.msra.mxu0 0.0
        %3626 = vmatprep.subr.mxu0 0.0
        %3627 = vmatpush1.msra.mxu0 0.0
        %3628 = vmatprep.subr.mxu0 0.0
        %3629 = vmatpush1.msra.mxu0 0.0
        %3630 = vmatprep.subr.mxu0 0.0
        %3631 = vmatpush1.msra.mxu0 0.0
        %3632 = vmatprep.subr.mxu0 0.0
        %3633 = vmatpush1.msra.mxu0 0.0
        %3634 = vmatprep.mubr.f32.mxu0 0.0
        %3635 = vmatmul.mubr.f32.gmra.mrb[0].mxu0 %v1216
        %v3636 = vpop.f32.mrb[0].mxu0
        %v3637 = vadd.f32 %v836, %v3636
        %v3638 = vpop.f32.mrb[0].mxu0
        %v3639 = vadd.f32 %v840, %v3638
        %3640 = vdwg.mxu0
        %3641 = vmatprep.subr.mxu0 %v273
        %3642 = vmatpush1.msra.mxu0 %v272
        %3643 = vmatprep.subr.mxu0 %v394
        %3644 = vmatpush1.msra.mxu0 %v393
        %3645 = vmatprep.subr.mxu0 %v1397
        %3646 = vmatpush1.msra.mxu0 %v1394
        %3647 = vmatprep.subr.mxu0 0.0
        %3648 = vmatpush1.msra.mxu0 0.0
        %3649 = vmatprep.subr.mxu0 0.0
        %3650 = vmatpush1.msra.mxu0 0.0
        %3651 = vmatprep.subr.mxu0 0.0
        %3652 = vmatpush1.msra.mxu0 0.0
        %3653 = vmatprep.subr.mxu0 0.0
        %3654 = vmatpush1.msra.mxu0 0.0
        %3655 = vmatprep.subr.mxu0 0.0
        %3656 = vmatpush1.msra.mxu0 0.0
        %3657 = vmatprep.subr.mxu0 0.0
        %3658 = vmatpush1.msra.mxu0 0.0
        %3659 = vmatprep.subr.mxu0 0.0
        %3660 = vmatpush1.msra.mxu0 0.0
        %3661 = vmatprep.subr.mxu0 0.0
        %3662 = vmatpush1.msra.mxu0 0.0
        %3663 = vmatprep.subr.mxu0 0.0
        %3664 = vmatpush1.msra.mxu0 0.0
        %3665 = vmatprep.subr.mxu0 0.0
        %3666 = vmatpush1.msra.mxu0 0.0
        %3667 = vmatprep.subr.mxu0 0.0
        %3668 = vmatpush1.msra.mxu0 0.0
        %3669 = vmatprep.subr.mxu0 0.0
        %3670 = vmatpush1.msra.mxu0 0.0
        %3671 = vmatprep.subr.mxu0 0.0
        %3672 = vmatpush1.msra.mxu0 0.0
        %3673 = vmatprep.subr.mxu0 0.0
        %3674 = vmatpush1.msra.mxu0 0.0
        %3675 = vmatprep.subr.mxu0 0.0
        %3676 = vmatpush1.msra.mxu0 0.0
        %3677 = vmatprep.subr.mxu0 0.0
        %3678 = vmatpush1.msra.mxu0 0.0
        %3679 = vmatprep.subr.mxu0 0.0
        %3680 = vmatpush1.msra.mxu0 0.0
        %3681 = vmatprep.subr.mxu0 0.0
        %3682 = vmatpush1.msra.mxu0 0.0
        %3683 = vmatprep.subr.mxu0 0.0
        %3684 = vmatpush1.msra.mxu0 0.0
        %3685 = vmatprep.subr.mxu0 0.0
        %3686 = vmatpush1.msra.mxu0 0.0
        %3687 = vmatprep.subr.mxu0 0.0
        %3688 = vmatpush1.msra.mxu0 0.0
        %3689 = vmatprep.subr.mxu0 0.0
        %3690 = vmatpush1.msra.mxu0 0.0
        %3691 = vmatprep.subr.mxu0 0.0
        %3692 = vmatpush1.msra.mxu0 0.0
        %3693 = vmatprep.subr.mxu0 0.0
        %3694 = vmatpush1.msra.mxu0 0.0
        %3695 = vmatprep.subr.mxu0 0.0
        %3696 = vmatpush1.msra.mxu0 0.0
        %3697 = vmatprep.subr.mxu0 0.0
        %3698 = vmatpush1.msra.mxu0 0.0
        %3699 = vmatprep.subr.mxu0 0.0
        %3700 = vmatpush1.msra.mxu0 0.0
        %3701 = vmatprep.subr.mxu0 0.0
        %3702 = vmatpush1.msra.mxu0 0.0
        %3703 = vmatprep.subr.mxu0 0.0
        %3704 = vmatpush1.msra.mxu0 0.0
        %3705 = vmatprep.mubr.f32.mxu0 0.0
        %3706 = vmatmul.mubr.f32.gmra.mrb[0].mxu0 %v1216
        %v3707 = vpop.f32.mrb[0].mxu0
        %v3708 = vadd.f32 %v844, %v3707
        %v3709 = vpop.f32.mrb[0].mxu0
        %v3710 = vadd.f32 %v848, %v3709
        %3711 = vdwg.mxu0
        %3712 = vmatprep.subr.mxu0 %v275
        %3713 = vmatpush1.msra.mxu0 %v274
        %3714 = vmatprep.subr.mxu0 %v396
        %3715 = vmatpush1.msra.mxu0 %v395
        %3716 = vmatprep.subr.mxu0 %v1403
        %3717 = vmatpush1.msra.mxu0 %v1400
        %3718 = vmatprep.subr.mxu0 0.0
        %3719 = vmatpush1.msra.mxu0 0.0
        %3720 = vmatprep.subr.mxu0 0.0
        %3721 = vmatpush1.msra.mxu0 0.0
        %3722 = vmatprep.subr.mxu0 0.0
        %3723 = vmatpush1.msra.mxu0 0.0
        %3724 = vmatprep.subr.mxu0 0.0
        %3725 = vmatpush1.msra.mxu0 0.0
        %3726 = vmatprep.subr.mxu0 0.0
        %3727 = vmatpush1.msra.mxu0 0.0
        %3728 = vmatprep.subr.mxu0 0.0
        %3729 = vmatpush1.msra.mxu0 0.0
        %3730 = vmatprep.subr.mxu0 0.0
        %3731 = vmatpush1.msra.mxu0 0.0
        %3732 = vmatprep.subr.mxu0 0.0
        %3733 = vmatpush1.msra.mxu0 0.0
        %3734 = vmatprep.subr.mxu0 0.0
        %3735 = vmatpush1.msra.mxu0 0.0
        %3736 = vmatprep.subr.mxu0 0.0
        %3737 = vmatpush1.msra.mxu0 0.0
        %3738 = vmatprep.subr.mxu0 0.0
        %3739 = vmatpush1.msra.mxu0 0.0
        %3740 = vmatprep.subr.mxu0 0.0
        %3741 = vmatpush1.msra.mxu0 0.0
        %3742 = vmatprep.subr.mxu0 0.0
        %3743 = vmatpush1.msra.mxu0 0.0
        %3744 = vmatprep.subr.mxu0 0.0
        %3745 = vmatpush1.msra.mxu0 0.0
        %3746 = vmatprep.subr.mxu0 0.0
        %3747 = vmatpush1.msra.mxu0 0.0
        %3748 = vmatprep.subr.mxu0 0.0
        %3749 = vmatpush1.msra.mxu0 0.0
        %3750 = vmatprep.subr.mxu0 0.0
        %3751 = vmatpush1.msra.mxu0 0.0
        %3752 = vmatprep.subr.mxu0 0.0
        %3753 = vmatpush1.msra.mxu0 0.0
        %3754 = vmatprep.subr.mxu0 0.0
        %3755 = vmatpush1.msra.mxu0 0.0
        %3756 = vmatprep.subr.mxu0 0.0
        %3757 = vmatpush1.msra.mxu0 0.0
        %3758 = vmatprep.subr.mxu0 0.0
        %3759 = vmatpush1.msra.mxu0 0.0
        %3760 = vmatprep.subr.mxu0 0.0
        %3761 = vmatpush1.msra.mxu0 0.0
        %3762 = vmatprep.subr.mxu0 0.0
        %3763 = vmatpush1.msra.mxu0 0.0
        %3764 = vmatprep.subr.mxu0 0.0
        %3765 = vmatpush1.msra.mxu0 0.0
        %3766 = vmatprep.subr.mxu0 0.0
        %3767 = vmatpush1.msra.mxu0 0.0
        %3768 = vmatprep.subr.mxu0 0.0
        %3769 = vmatpush1.msra.mxu0 0.0
        %3770 = vmatprep.subr.mxu0 0.0
        %3771 = vmatpush1.msra.mxu0 0.0
        %3772 = vmatprep.subr.mxu0 0.0
        %3773 = vmatpush1.msra.mxu0 0.0
        %3774 = vmatprep.subr.mxu0 0.0
        %3775 = vmatpush1.msra.mxu0 0.0
        %3776 = vmatprep.mubr.f32.mxu0 0.0
        %3777 = vmatmul.mubr.f32.gmra.mrb[0].mxu0 %v1216
        %v3778 = vpop.f32.mrb[0].mxu0
        %v3779 = vadd.f32 %v852, %v3778
        %v3780 = vpop.f32.mrb[0].mxu0
        %v3781 = vadd.f32 %v856, %v3780
        %3782 = vdwg.mxu0
        %3783 = vmatprep.subr.mxu0 %v277
        %3784 = vmatpush1.msra.mxu0 %v276
        %3785 = vmatprep.subr.mxu0 %v398
        %3786 = vmatpush1.msra.mxu0 %v397
        %3787 = vmatprep.subr.mxu0 %v1409
        %3788 = vmatpush1.msra.mxu0 %v1406
        %3789 = vmatprep.subr.mxu0 0.0
        %3790 = vmatpush1.msra.mxu0 0.0
        %3791 = vmatprep.subr.mxu0 0.0
        %3792 = vmatpush1.msra.mxu0 0.0
        %3793 = vmatprep.subr.mxu0 0.0
        %3794 = vmatpush1.msra.mxu0 0.0
        %3795 = vmatprep.subr.mxu0 0.0
        %3796 = vmatpush1.msra.mxu0 0.0
        %3797 = vmatprep.subr.mxu0 0.0
        %3798 = vmatpush1.msra.mxu0 0.0
        %3799 = vmatprep.subr.mxu0 0.0
        %3800 = vmatpush1.msra.mxu0 0.0
        %3801 = vmatprep.subr.mxu0 0.0
        %3802 = vmatpush1.msra.mxu0 0.0
        %3803 = vmatprep.subr.mxu0 0.0
        %3804 = vmatpush1.msra.mxu0 0.0
        %3805 = vmatprep.subr.mxu0 0.0
        %3806 = vmatpush1.msra.mxu0 0.0
        %3807 = vmatprep.subr.mxu0 0.0
        %3808 = vmatpush1.msra.mxu0 0.0
        %3809 = vmatprep.subr.mxu0 0.0
        %3810 = vmatpush1.msra.mxu0 0.0
        %3811 = vmatprep.subr.mxu0 0.0
        %3812 = vmatpush1.msra.mxu0 0.0
        %3813 = vmatprep.subr.mxu0 0.0
        %3814 = vmatpush1.msra.mxu0 0.0
        %3815 = vmatprep.subr.mxu0 0.0
        %3816 = vmatpush1.msra.mxu0 0.0
        %3817 = vmatprep.subr.mxu0 0.0
        %3818 = vmatpush1.msra.mxu0 0.0
        %3819 = vmatprep.subr.mxu0 0.0
        %3820 = vmatpush1.msra.mxu0 0.0
        %3821 = vmatprep.subr.mxu0 0.0
        %3822 = vmatpush1.msra.mxu0 0.0
        %3823 = vmatprep.subr.mxu0 0.0
        %3824 = vmatpush1.msra.mxu0 0.0
        %3825 = vmatprep.subr.mxu0 0.0
        %3826 = vmatpush1.msra.mxu0 0.0
        %3827 = vmatprep.subr.mxu0 0.0
        %3828 = vmatpush1.msra.mxu0 0.0
        %3829 = vmatprep.subr.mxu0 0.0
        %3830 = vmatpush1.msra.mxu0 0.0
        %3831 = vmatprep.subr.mxu0 0.0
        %3832 = vmatpush1.msra.mxu0 0.0
        %3833 = vmatprep.subr.mxu0 0.0
        %3834 = vmatpush1.msra.mxu0 0.0
        %3835 = vmatprep.subr.mxu0 0.0
        %3836 = vmatpush1.msra.mxu0 0.0
        %3837 = vmatprep.subr.mxu0 0.0
        %3838 = vmatpush1.msra.mxu0 0.0
        %3839 = vmatprep.subr.mxu0 0.0
        %3840 = vmatpush1.msra.mxu0 0.0
        %3841 = vmatprep.subr.mxu0 0.0
        %3842 = vmatpush1.msra.mxu0 0.0
        %3843 = vmatprep.subr.mxu0 0.0
        %3844 = vmatpush1.msra.mxu0 0.0
        %3845 = vmatprep.subr.mxu0 0.0
        %3846 = vmatpush1.msra.mxu0 0.0
        %3847 = vmatprep.mubr.f32.mxu0 0.0
        %3848 = vmatmul.mubr.f32.gmra.mrb[0].mxu0 %v1216
        %v3849 = vpop.f32.mrb[0].mxu0
        %v3850 = vadd.f32 %v860, %v3849
        %v3851 = vpop.f32.mrb[0].mxu0
        %v3852 = vadd.f32 %v864, %v3851
        %3853 = vdwg.mxu0
        %3854 = vmatprep.subr.mxu0 %v279
        %3855 = vmatpush1.msra.mxu0 %v278
        %3856 = vmatprep.subr.mxu0 %v400
        %3857 = vmatpush1.msra.mxu0 %v399
        %3858 = vmatprep.subr.mxu0 %v1415
        %3859 = vmatpush1.msra.mxu0 %v1412
        %3860 = vmatprep.subr.mxu0 0.0
        %3861 = vmatpush1.msra.mxu0 0.0
        %3862 = vmatprep.subr.mxu0 0.0
        %3863 = vmatpush1.msra.mxu0 0.0
        %3864 = vmatprep.subr.mxu0 0.0
        %3865 = vmatpush1.msra.mxu0 0.0
        %3866 = vmatprep.subr.mxu0 0.0
        %3867 = vmatpush1.msra.mxu0 0.0
        %3868 = vmatprep.subr.mxu0 0.0
        %3869 = vmatpush1.msra.mxu0 0.0
        %3870 = vmatprep.subr.mxu0 0.0
        %3871 = vmatpush1.msra.mxu0 0.0
        %3872 = vmatprep.subr.mxu0 0.0
        %3873 = vmatpush1.msra.mxu0 0.0
        %3874 = vmatprep.subr.mxu0 0.0
        %3875 = vmatpush1.msra.mxu0 0.0
        %3876 = vmatprep.subr.mxu0 0.0
        %3877 = vmatpush1.msra.mxu0 0.0
        %3878 = vmatprep.subr.mxu0 0.0
        %3879 = vmatpush1.msra.mxu0 0.0
        %3880 = vmatprep.subr.mxu0 0.0
        %3881 = vmatpush1.msra.mxu0 0.0
        %3882 = vmatprep.subr.mxu0 0.0
        %3883 = vmatpush1.msra.mxu0 0.0
        %3884 = vmatprep.subr.mxu0 0.0
        %3885 = vmatpush1.msra.mxu0 0.0
        %3886 = vmatprep.subr.mxu0 0.0
        %3887 = vmatpush1.msra.mxu0 0.0
        %3888 = vmatprep.subr.mxu0 0.0
        %3889 = vmatpush1.msra.mxu0 0.0
        %3890 = vmatprep.subr.mxu0 0.0
        %3891 = vmatpush1.msra.mxu0 0.0
        %3892 = vmatprep.subr.mxu0 0.0
        %3893 = vmatpush1.msra.mxu0 0.0
        %3894 = vmatprep.subr.mxu0 0.0
        %3895 = vmatpush1.msra.mxu0 0.0
        %3896 = vmatprep.subr.mxu0 0.0
        %3897 = vmatpush1.msra.mxu0 0.0
        %3898 = vmatprep.subr.mxu0 0.0
        %3899 = vmatpush1.msra.mxu0 0.0
        %3900 = vmatprep.subr.mxu0 0.0
        %3901 = vmatpush1.msra.mxu0 0.0
        %3902 = vmatprep.subr.mxu0 0.0
        %3903 = vmatpush1.msra.mxu0 0.0
        %3904 = vmatprep.subr.mxu0 0.0
        %3905 = vmatpush1.msra.mxu0 0.0
        %3906 = vmatprep.subr.mxu0 0.0
        %3907 = vmatpush1.msra.mxu0 0.0
        %3908 = vmatprep.subr.mxu0 0.0
        %3909 = vmatpush1.msra.mxu0 0.0
        %3910 = vmatprep.subr.mxu0 0.0
        %3911 = vmatpush1.msra.mxu0 0.0
        %3912 = vmatprep.subr.mxu0 0.0
        %3913 = vmatpush1.msra.mxu0 0.0
        %3914 = vmatprep.subr.mxu0 0.0
        %3915 = vmatpush1.msra.mxu0 0.0
        %3916 = vmatprep.subr.mxu0 0.0
        %3917 = vmatpush1.msra.mxu0 0.0
        %3918 = vmatprep.mubr.f32.mxu0 0.0
        %3919 = vmatmul.mubr.f32.gmra.mrb[0].mxu0 %v1216
        %v3920 = vpop.f32.mrb[0].mxu0
        %v3921 = vadd.f32 %v868, %v3920
        %v3922 = vpop.f32.mrb[0].mxu0
        %v3923 = vadd.f32 %v872, %v3922
        %3924 = vdwg.mxu0
        %3925 = vmatprep.subr.mxu0 %v281
        %3926 = vmatpush1.msra.mxu0 %v280
        %3927 = vmatprep.subr.mxu0 %v402
        %3928 = vmatpush1.msra.mxu0 %v401
        %3929 = vmatprep.subr.mxu0 %v1421
        %3930 = vmatpush1.msra.mxu0 %v1418
        %3931 = vmatprep.subr.mxu0 0.0
        %3932 = vmatpush1.msra.mxu0 0.0
        %3933 = vmatprep.subr.mxu0 0.0
        %3934 = vmatpush1.msra.mxu0 0.0
        %3935 = vmatprep.subr.mxu0 0.0
        %3936 = vmatpush1.msra.mxu0 0.0
        %3937 = vmatprep.subr.mxu0 0.0
        %3938 = vmatpush1.msra.mxu0 0.0
        %3939 = vmatprep.subr.mxu0 0.0
        %3940 = vmatpush1.msra.mxu0 0.0
        %3941 = vmatprep.subr.mxu0 0.0
        %3942 = vmatpush1.msra.mxu0 0.0
        %3943 = vmatprep.subr.mxu0 0.0
        %3944 = vmatpush1.msra.mxu0 0.0
        %3945 = vmatprep.subr.mxu0 0.0
        %3946 = vmatpush1.msra.mxu0 0.0
        %3947 = vmatprep.subr.mxu0 0.0
        %3948 = vmatpush1.msra.mxu0 0.0
        %3949 = vmatprep.subr.mxu0 0.0
        %3950 = vmatpush1.msra.mxu0 0.0
        %3951 = vmatprep.subr.mxu0 0.0
        %3952 = vmatpush1.msra.mxu0 0.0
        %3953 = vmatprep.subr.mxu0 0.0
        %3954 = vmatpush1.msra.mxu0 0.0
        %3955 = vmatprep.subr.mxu0 0.0
        %3956 = vmatpush1.msra.mxu0 0.0
        %3957 = vmatprep.subr.mxu0 0.0
        %3958 = vmatpush1.msra.mxu0 0.0
        %3959 = vmatprep.subr.mxu0 0.0
        %3960 = vmatpush1.msra.mxu0 0.0
        %3961 = vmatprep.subr.mxu0 0.0
        %3962 = vmatpush1.msra.mxu0 0.0
        %3963 = vmatprep.subr.mxu0 0.0
        %3964 = vmatpush1.msra.mxu0 0.0
        %3965 = vmatprep.subr.mxu0 0.0
        %3966 = vmatpush1.msra.mxu0 0.0
        %3967 = vmatprep.subr.mxu0 0.0
        %3968 = vmatpush1.msra.mxu0 0.0
        %3969 = vmatprep.subr.mxu0 0.0
        %3970 = vmatpush1.msra.mxu0 0.0
        %3971 = vmatprep.subr.mxu0 0.0
        %3972 = vmatpush1.msra.mxu0 0.0
        %3973 = vmatprep.subr.mxu0 0.0
        %3974 = vmatpush1.msra.mxu0 0.0
        %3975 = vmatprep.subr.mxu0 0.0
        %3976 = vmatpush1.msra.mxu0 0.0
        %3977 = vmatprep.subr.mxu0 0.0
        %3978 = vmatpush1.msra.mxu0 0.0
        %3979 = vmatprep.subr.mxu0 0.0
        %3980 = vmatpush1.msra.mxu0 0.0
        %3981 = vmatprep.subr.mxu0 0.0
        %3982 = vmatpush1.msra.mxu0 0.0
        %3983 = vmatprep.subr.mxu0 0.0
        %3984 = vmatpush1.msra.mxu0 0.0
        %3985 = vmatprep.subr.mxu0 0.0
        %3986 = vmatpush1.msra.mxu0 0.0
        %3987 = vmatprep.subr.mxu0 0.0
        %3988 = vmatpush1.msra.mxu0 0.0
        %3989 = vmatprep.mubr.f32.mxu0 0.0
        %3990 = vmatmul.mubr.f32.gmra.mrb[0].mxu0 %v1216
        %v3991 = vpop.f32.mrb[0].mxu0
        %v3992 = vadd.f32 %v876, %v3991
        %v3993 = vpop.f32.mrb[0].mxu0
        %v3994 = vadd.f32 %v880, %v3993
        %3995 = vdwg.mxu0
        %3996 = vmatprep.subr.mxu0 %v283
        %3997 = vmatpush1.msra.mxu0 %v282
        %3998 = vmatprep.subr.mxu0 %v404
        %3999 = vmatpush1.msra.mxu0 %v403
        %4000 = vmatprep.subr.mxu0 %v1427
        %4001 = vmatpush1.msra.mxu0 %v1424
        %4002 = vmatprep.subr.mxu0 0.0
        %4003 = vmatpush1.msra.mxu0 0.0
        %4004 = vmatprep.subr.mxu0 0.0
        %4005 = vmatpush1.msra.mxu0 0.0
        %4006 = vmatprep.subr.mxu0 0.0
        %4007 = vmatpush1.msra.mxu0 0.0
        %4008 = vmatprep.subr.mxu0 0.0
        %4009 = vmatpush1.msra.mxu0 0.0
        %4010 = vmatprep.subr.mxu0 0.0
        %4011 = vmatpush1.msra.mxu0 0.0
        %4012 = vmatprep.subr.mxu0 0.0
        %4013 = vmatpush1.msra.mxu0 0.0
        %4014 = vmatprep.subr.mxu0 0.0
        %4015 = vmatpush1.msra.mxu0 0.0
        %4016 = vmatprep.subr.mxu0 0.0
        %4017 = vmatpush1.msra.mxu0 0.0
        %4018 = vmatprep.subr.mxu0 0.0
        %4019 = vmatpush1.msra.mxu0 0.0
        %4020 = vmatprep.subr.mxu0 0.0
        %4021 = vmatpush1.msra.mxu0 0.0
        %4022 = vmatprep.subr.mxu0 0.0
        %4023 = vmatpush1.msra.mxu0 0.0
        %4024 = vmatprep.subr.mxu0 0.0
        %4025 = vmatpush1.msra.mxu0 0.0
        %4026 = vmatprep.subr.mxu0 0.0
        %4027 = vmatpush1.msra.mxu0 0.0
        %4028 = vmatprep.subr.mxu0 0.0
        %4029 = vmatpush1.msra.mxu0 0.0
        %4030 = vmatprep.subr.mxu0 0.0
        %4031 = vmatpush1.msra.mxu0 0.0
        %4032 = vmatprep.subr.mxu0 0.0
        %4033 = vmatpush1.msra.mxu0 0.0
        %4034 = vmatprep.subr.mxu0 0.0
        %4035 = vmatpush1.msra.mxu0 0.0
        %4036 = vmatprep.subr.mxu0 0.0
        %4037 = vmatpush1.msra.mxu0 0.0
        %4038 = vmatprep.subr.mxu0 0.0
        %4039 = vmatpush1.msra.mxu0 0.0
        %4040 = vmatprep.subr.mxu0 0.0
        %4041 = vmatpush1.msra.mxu0 0.0
        %4042 = vmatprep.subr.mxu0 0.0
        %4043 = vmatpush1.msra.mxu0 0.0
        %4044 = vmatprep.subr.mxu0 0.0
        %4045 = vmatpush1.msra.mxu0 0.0
        %4046 = vmatprep.subr.mxu0 0.0
        %4047 = vmatpush1.msra.mxu0 0.0
        %4048 = vmatprep.subr.mxu0 0.0
        %4049 = vmatpush1.msra.mxu0 0.0
        %4050 = vmatprep.subr.mxu0 0.0
        %4051 = vmatpush1.msra.mxu0 0.0
        %4052 = vmatprep.subr.mxu0 0.0
        %4053 = vmatpush1.msra.mxu0 0.0
        %4054 = vmatprep.subr.mxu0 0.0
        %4055 = vmatpush1.msra.mxu0 0.0
        %4056 = vmatprep.subr.mxu0 0.0
        %4057 = vmatpush1.msra.mxu0 0.0
        %4058 = vmatprep.subr.mxu0 0.0
        %4059 = vmatpush1.msra.mxu0 0.0
        %4060 = vmatprep.mubr.f32.mxu0 0.0
        %4061 = vmatmul.mubr.f32.gmra.mrb[0].mxu0 %v1216
        %v4062 = vpop.f32.mrb[0].mxu0
        %v4063 = vadd.f32 %v884, %v4062
        %v4064 = vpop.f32.mrb[0].mxu0
        %v4065 = vadd.f32 %v888, %v4064
        %4066 = vdwg.mxu0
        %4067 = vmatprep.subr.mxu0 %v285
        %4068 = vmatpush1.msra.mxu0 %v284
        %4069 = vmatprep.subr.mxu0 %v406
        %4070 = vmatpush1.msra.mxu0 %v405
        %4071 = vmatprep.subr.mxu0 %v1433
        %4072 = vmatpush1.msra.mxu0 %v1430
        %4073 = vmatprep.subr.mxu0 0.0
        %4074 = vmatpush1.msra.mxu0 0.0
        %4075 = vmatprep.subr.mxu0 0.0
        %4076 = vmatpush1.msra.mxu0 0.0
        %4077 = vmatprep.subr.mxu0 0.0
        %4078 = vmatpush1.msra.mxu0 0.0
        %4079 = vmatprep.subr.mxu0 0.0
        %4080 = vmatpush1.msra.mxu0 0.0
        %4081 = vmatprep.subr.mxu0 0.0
        %4082 = vmatpush1.msra.mxu0 0.0
        %4083 = vmatprep.subr.mxu0 0.0
        %4084 = vmatpush1.msra.mxu0 0.0
        %4085 = vmatprep.subr.mxu0 0.0
        %4086 = vmatpush1.msra.mxu0 0.0
        %4087 = vmatprep.subr.mxu0 0.0
        %4088 = vmatpush1.msra.mxu0 0.0
        %4089 = vmatprep.subr.mxu0 0.0
        %4090 = vmatpush1.msra.mxu0 0.0
        %4091 = vmatprep.subr.mxu0 0.0
        %4092 = vmatpush1.msra.mxu0 0.0
        %4093 = vmatprep.subr.mxu0 0.0
        %4094 = vmatpush1.msra.mxu0 0.0
        %4095 = vmatprep.subr.mxu0 0.0
        %4096 = vmatpush1.msra.mxu0 0.0
        %4097 = vmatprep.subr.mxu0 0.0
        %4098 = vmatpush1.msra.mxu0 0.0
        %4099 = vmatprep.subr.mxu0 0.0
        %4100 = vmatpush1.msra.mxu0 0.0
        %4101 = vmatprep.subr.mxu0 0.0
        %4102 = vmatpush1.msra.mxu0 0.0
        %4103 = vmatprep.subr.mxu0 0.0
        %4104 = vmatpush1.msra.mxu0 0.0
        %4105 = vmatprep.subr.mxu0 0.0
        %4106 = vmatpush1.msra.mxu0 0.0
        %4107 = vmatprep.subr.mxu0 0.0
        %4108 = vmatpush1.msra.mxu0 0.0
        %4109 = vmatprep.subr.mxu0 0.0
        %4110 = vmatpush1.msra.mxu0 0.0
        %4111 = vmatprep.subr.mxu0 0.0
        %4112 = vmatpush1.msra.mxu0 0.0
        %4113 = vmatprep.subr.mxu0 0.0
        %4114 = vmatpush1.msra.mxu0 0.0
        %4115 = vmatprep.subr.mxu0 0.0
        %4116 = vmatpush1.msra.mxu0 0.0
        %4117 = vmatprep.subr.mxu0 0.0
        %4118 = vmatpush1.msra.mxu0 0.0
        %4119 = vmatprep.subr.mxu0 0.0
        %4120 = vmatpush1.msra.mxu0 0.0
        %4121 = vmatprep.subr.mxu0 0.0
        %4122 = vmatpush1.msra.mxu0 0.0
        %4123 = vmatprep.subr.mxu0 0.0
        %4124 = vmatpush1.msra.mxu0 0.0
        %4125 = vmatprep.subr.mxu0 0.0
        %4126 = vmatpush1.msra.mxu0 0.0
        %4127 = vmatprep.subr.mxu0 0.0
        %4128 = vmatpush1.msra.mxu0 0.0
        %4129 = vmatprep.subr.mxu0 0.0
        %4130 = vmatpush1.msra.mxu0 0.0
        %4131 = vmatprep.mubr.f32.mxu0 0.0
        %4132 = vmatmul.mubr.f32.gmra.mrb[0].mxu0 %v1216
        %v4133 = vpop.f32.mrb[0].mxu0
        %v4134 = vadd.f32 %v892, %v4133
        %v4135 = vpop.f32.mrb[0].mxu0
        %v4136 = vadd.f32 %v896, %v4135
        %4137 = vdwg.mxu0
        %4138 = vmatprep.subr.mxu0 %v287
        %4139 = vmatpush1.msra.mxu0 %v286
        %4140 = vmatprep.subr.mxu0 %v408
        %4141 = vmatpush1.msra.mxu0 %v407
        %4142 = vmatprep.subr.mxu0 %v1439
        %4143 = vmatpush1.msra.mxu0 %v1436
        %4144 = vmatprep.subr.mxu0 0.0
        %4145 = vmatpush1.msra.mxu0 0.0
        %4146 = vmatprep.subr.mxu0 0.0
        %4147 = vmatpush1.msra.mxu0 0.0
        %4148 = vmatprep.subr.mxu0 0.0
        %4149 = vmatpush1.msra.mxu0 0.0
        %4150 = vmatprep.subr.mxu0 0.0
        %4151 = vmatpush1.msra.mxu0 0.0
        %4152 = vmatprep.subr.mxu0 0.0
        %4153 = vmatpush1.msra.mxu0 0.0
        %4154 = vmatprep.subr.mxu0 0.0
        %4155 = vmatpush1.msra.mxu0 0.0
        %4156 = vmatprep.subr.mxu0 0.0
        %4157 = vmatpush1.msra.mxu0 0.0
        %4158 = vmatprep.subr.mxu0 0.0
        %4159 = vmatpush1.msra.mxu0 0.0
        %4160 = vmatprep.subr.mxu0 0.0
        %4161 = vmatpush1.msra.mxu0 0.0
        %4162 = vmatprep.subr.mxu0 0.0
        %4163 = vmatpush1.msra.mxu0 0.0
        %4164 = vmatprep.subr.mxu0 0.0
        %4165 = vmatpush1.msra.mxu0 0.0
        %4166 = vmatprep.subr.mxu0 0.0
        %4167 = vmatpush1.msra.mxu0 0.0
        %4168 = vmatprep.subr.mxu0 0.0
        %4169 = vmatpush1.msra.mxu0 0.0
        %4170 = vmatprep.subr.mxu0 0.0
        %4171 = vmatpush1.msra.mxu0 0.0
        %4172 = vmatprep.subr.mxu0 0.0
        %4173 = vmatpush1.msra.mxu0 0.0
        %4174 = vmatprep.subr.mxu0 0.0
        %4175 = vmatpush1.msra.mxu0 0.0
        %4176 = vmatprep.subr.mxu0 0.0
        %4177 = vmatpush1.msra.mxu0 0.0
        %4178 = vmatprep.subr.mxu0 0.0
        %4179 = vmatpush1.msra.mxu0 0.0
        %4180 = vmatprep.subr.mxu0 0.0
        %4181 = vmatpush1.msra.mxu0 0.0
        %4182 = vmatprep.subr.mxu0 0.0
        %4183 = vmatpush1.msra.mxu0 0.0
        %4184 = vmatprep.subr.mxu0 0.0
        %4185 = vmatpush1.msra.mxu0 0.0
        %4186 = vmatprep.subr.mxu0 0.0
        %4187 = vmatpush1.msra.mxu0 0.0
        %4188 = vmatprep.subr.mxu0 0.0
        %4189 = vmatpush1.msra.mxu0 0.0
        %4190 = vmatprep.subr.mxu0 0.0
        %4191 = vmatpush1.msra.mxu0 0.0
        %4192 = vmatprep.subr.mxu0 0.0
        %4193 = vmatpush1.msra.mxu0 0.0
        %4194 = vmatprep.subr.mxu0 0.0
        %4195 = vmatpush1.msra.mxu0 0.0
        %4196 = vmatprep.subr.mxu0 0.0
        %4197 = vmatpush1.msra.mxu0 0.0
        %4198 = vmatprep.subr.mxu0 0.0
        %4199 = vmatpush1.msra.mxu0 0.0
        %4200 = vmatprep.subr.mxu0 0.0
        %4201 = vmatpush1.msra.mxu0 0.0
        %4202 = vmatprep.mubr.f32.mxu0 0.0
        %4203 = vmatmul.mubr.f32.gmra.mrb[0].mxu0 %v1216
        %v4204 = vpop.f32.mrb[0].mxu0
        %v4205 = vadd.f32 %v900, %v4204
        %v4206 = vpop.f32.mrb[0].mxu0
        %v4207 = vadd.f32 %v904, %v4206
        %4208 = vdwg.mxu0
        %4209 = vmatprep.subr.mxu0 %v289
        %4210 = vmatpush1.msra.mxu0 %v288
        %4211 = vmatprep.subr.mxu0 %v410
        %4212 = vmatpush1.msra.mxu0 %v409
        %4213 = vmatprep.subr.mxu0 %v1445
        %4214 = vmatpush1.msra.mxu0 %v1442
        %4215 = vmatprep.subr.mxu0 0.0
        %4216 = vmatpush1.msra.mxu0 0.0
        %4217 = vmatprep.subr.mxu0 0.0
        %4218 = vmatpush1.msra.mxu0 0.0
        %4219 = vmatprep.subr.mxu0 0.0
        %4220 = vmatpush1.msra.mxu0 0.0
        %4221 = vmatprep.subr.mxu0 0.0
        %4222 = vmatpush1.msra.mxu0 0.0
        %4223 = vmatprep.subr.mxu0 0.0
        %4224 = vmatpush1.msra.mxu0 0.0
        %4225 = vmatprep.subr.mxu0 0.0
        %4226 = vmatpush1.msra.mxu0 0.0
        %4227 = vmatprep.subr.mxu0 0.0
        %4228 = vmatpush1.msra.mxu0 0.0
        %4229 = vmatprep.subr.mxu0 0.0
        %4230 = vmatpush1.msra.mxu0 0.0
        %4231 = vmatprep.subr.mxu0 0.0
        %4232 = vmatpush1.msra.mxu0 0.0
        %4233 = vmatprep.subr.mxu0 0.0
        %4234 = vmatpush1.msra.mxu0 0.0
        %4235 = vmatprep.subr.mxu0 0.0
        %4236 = vmatpush1.msra.mxu0 0.0
        %4237 = vmatprep.subr.mxu0 0.0
        %4238 = vmatpush1.msra.mxu0 0.0
        %4239 = vmatprep.subr.mxu0 0.0
        %4240 = vmatpush1.msra.mxu0 0.0
        %4241 = vmatprep.subr.mxu0 0.0
        %4242 = vmatpush1.msra.mxu0 0.0
        %4243 = vmatprep.subr.mxu0 0.0
        %4244 = vmatpush1.msra.mxu0 0.0
        %4245 = vmatprep.subr.mxu0 0.0
        %4246 = vmatpush1.msra.mxu0 0.0
        %4247 = vmatprep.subr.mxu0 0.0
        %4248 = vmatpush1.msra.mxu0 0.0
        %4249 = vmatprep.subr.mxu0 0.0
        %4250 = vmatpush1.msra.mxu0 0.0
        %4251 = vmatprep.subr.mxu0 0.0
        %4252 = vmatpush1.msra.mxu0 0.0
        %4253 = vmatprep.subr.mxu0 0.0
        %4254 = vmatpush1.msra.mxu0 0.0
        %4255 = vmatprep.subr.mxu0 0.0
        %4256 = vmatpush1.msra.mxu0 0.0
        %4257 = vmatprep.subr.mxu0 0.0
        %4258 = vmatpush1.msra.mxu0 0.0
        %4259 = vmatprep.subr.mxu0 0.0
        %4260 = vmatpush1.msra.mxu0 0.0
        %4261 = vmatprep.subr.mxu0 0.0
        %4262 = vmatpush1.msra.mxu0 0.0
        %4263 = vmatprep.subr.mxu0 0.0
        %4264 = vmatpush1.msra.mxu0 0.0
        %4265 = vmatprep.subr.mxu0 0.0
        %4266 = vmatpush1.msra.mxu0 0.0
        %4267 = vmatprep.subr.mxu0 0.0
        %4268 = vmatpush1.msra.mxu0 0.0
        %4269 = vmatprep.subr.mxu0 0.0
        %4270 = vmatpush1.msra.mxu0 0.0
        %4271 = vmatprep.subr.mxu0 0.0
        %4272 = vmatpush1.msra.mxu0 0.0
        %4273 = vmatprep.mubr.f32.mxu0 0.0
        %4274 = vmatmul.mubr.f32.gmra.mrb[0].mxu0 %v1216
        %v4275 = vpop.f32.mrb[0].mxu0
        %v4276 = vadd.f32 %v908, %v4275
        %v4277 = vpop.f32.mrb[0].mxu0
        %v4278 = vadd.f32 %v912, %v4277
        %4279 = vdwg.mxu0
        %4280 = vmatprep.subr.mxu0 %v291
        %4281 = vmatpush1.msra.mxu0 %v290
        %4282 = vmatprep.subr.mxu0 %v412
        %4283 = vmatpush1.msra.mxu0 %v411
        %4284 = vmatprep.subr.mxu0 %v1451
        %4285 = vmatpush1.msra.mxu0 %v1448
        %4286 = vmatprep.subr.mxu0 0.0
        %4287 = vmatpush1.msra.mxu0 0.0
        %4288 = vmatprep.subr.mxu0 0.0
        %4289 = vmatpush1.msra.mxu0 0.0
        %4290 = vmatprep.subr.mxu0 0.0
        %4291 = vmatpush1.msra.mxu0 0.0
        %4292 = vmatprep.subr.mxu0 0.0
        %4293 = vmatpush1.msra.mxu0 0.0
        %4294 = vmatprep.subr.mxu0 0.0
        %4295 = vmatpush1.msra.mxu0 0.0
        %4296 = vmatprep.subr.mxu0 0.0
        %4297 = vmatpush1.msra.mxu0 0.0
        %4298 = vmatprep.subr.mxu0 0.0
        %4299 = vmatpush1.msra.mxu0 0.0
        %4300 = vmatprep.subr.mxu0 0.0
        %4301 = vmatpush1.msra.mxu0 0.0
        %4302 = vmatprep.subr.mxu0 0.0
        %4303 = vmatpush1.msra.mxu0 0.0
        %4304 = vmatprep.subr.mxu0 0.0
        %4305 = vmatpush1.msra.mxu0 0.0
        %4306 = vmatprep.subr.mxu0 0.0
        %4307 = vmatpush1.msra.mxu0 0.0
        %4308 = vmatprep.subr.mxu0 0.0
        %4309 = vmatpush1.msra.mxu0 0.0
        %4310 = vmatprep.subr.mxu0 0.0
        %4311 = vmatpush1.msra.mxu0 0.0
        %4312 = vmatprep.subr.mxu0 0.0
        %4313 = vmatpush1.msra.mxu0 0.0
        %4314 = vmatprep.subr.mxu0 0.0
        %4315 = vmatpush1.msra.mxu0 0.0
        %4316 = vmatprep.subr.mxu0 0.0
        %4317 = vmatpush1.msra.mxu0 0.0
        %4318 = vmatprep.subr.mxu0 0.0
        %4319 = vmatpush1.msra.mxu0 0.0
        %4320 = vmatprep.subr.mxu0 0.0
        %4321 = vmatpush1.msra.mxu0 0.0
        %4322 = vmatprep.subr.mxu0 0.0
        %4323 = vmatpush1.msra.mxu0 0.0
        %4324 = vmatprep.subr.mxu0 0.0
        %4325 = vmatpush1.msra.mxu0 0.0
        %4326 = vmatprep.subr.mxu0 0.0
        %4327 = vmatpush1.msra.mxu0 0.0
        %4328 = vmatprep.subr.mxu0 0.0
        %4329 = vmatpush1.msra.mxu0 0.0
        %4330 = vmatprep.subr.mxu0 0.0
        %4331 = vmatpush1.msra.mxu0 0.0
        %4332 = vmatprep.subr.mxu0 0.0
        %4333 = vmatpush1.msra.mxu0 0.0
        %4334 = vmatprep.subr.mxu0 0.0
        %4335 = vmatpush1.msra.mxu0 0.0
        %4336 = vmatprep.subr.mxu0 0.0
        %4337 = vmatpush1.msra.mxu0 0.0
        %4338 = vmatprep.subr.mxu0 0.0
        %4339 = vmatpush1.msra.mxu0 0.0
        %4340 = vmatprep.subr.mxu0 0.0
        %4341 = vmatpush1.msra.mxu0 0.0
        %4342 = vmatprep.subr.mxu0 0.0
        %4343 = vmatpush1.msra.mxu0 0.0
        %4344 = vmatprep.mubr.f32.mxu0 0.0
        %4345 = vmatmul.mubr.f32.gmra.mrb[0].mxu0 %v1216
        %v4346 = vpop.f32.mrb[0].mxu0
        %v4347 = vadd.f32 %v916, %v4346
        %v4348 = vpop.f32.mrb[0].mxu0
        %v4349 = vadd.f32 %v920, %v4348
        %4350 = vdwg.mxu0
        %4351 = vmatprep.subr.mxu0 %v293
        %4352 = vmatpush1.msra.mxu0 %v292
        %4353 = vmatprep.subr.mxu0 %v414
        %4354 = vmatpush1.msra.mxu0 %v413
        %4355 = vmatprep.subr.mxu0 %v1457
        %4356 = vmatpush1.msra.mxu0 %v1454
        %4357 = vmatprep.subr.mxu0 0.0
        %4358 = vmatpush1.msra.mxu0 0.0
        %4359 = vmatprep.subr.mxu0 0.0
        %4360 = vmatpush1.msra.mxu0 0.0
        %4361 = vmatprep.subr.mxu0 0.0
        %4362 = vmatpush1.msra.mxu0 0.0
        %4363 = vmatprep.subr.mxu0 0.0
        %4364 = vmatpush1.msra.mxu0 0.0
        %4365 = vmatprep.subr.mxu0 0.0
        %4366 = vmatpush1.msra.mxu0 0.0
        %4367 = vmatprep.subr.mxu0 0.0
        %4368 = vmatpush1.msra.mxu0 0.0
        %4369 = vmatprep.subr.mxu0 0.0
        %4370 = vmatpush1.msra.mxu0 0.0
        %4371 = vmatprep.subr.mxu0 0.0
        %4372 = vmatpush1.msra.mxu0 0.0
        %4373 = vmatprep.subr.mxu0 0.0
        %4374 = vmatpush1.msra.mxu0 0.0
        %4375 = vmatprep.subr.mxu0 0.0
        %4376 = vmatpush1.msra.mxu0 0.0
        %4377 = vmatprep.subr.mxu0 0.0
        %4378 = vmatpush1.msra.mxu0 0.0
        %4379 = vmatprep.subr.mxu0 0.0
        %4380 = vmatpush1.msra.mxu0 0.0
        %4381 = vmatprep.subr.mxu0 0.0
        %4382 = vmatpush1.msra.mxu0 0.0
        %4383 = vmatprep.subr.mxu0 0.0
        %4384 = vmatpush1.msra.mxu0 0.0
        %4385 = vmatprep.subr.mxu0 0.0
        %4386 = vmatpush1.msra.mxu0 0.0
        %4387 = vmatprep.subr.mxu0 0.0
        %4388 = vmatpush1.msra.mxu0 0.0
        %4389 = vmatprep.subr.mxu0 0.0
        %4390 = vmatpush1.msra.mxu0 0.0
        %4391 = vmatprep.subr.mxu0 0.0
        %4392 = vmatpush1.msra.mxu0 0.0
        %4393 = vmatprep.subr.mxu0 0.0
        %4394 = vmatpush1.msra.mxu0 0.0
        %4395 = vmatprep.subr.mxu0 0.0
        %4396 = vmatpush1.msra.mxu0 0.0
        %4397 = vmatprep.subr.mxu0 0.0
        %4398 = vmatpush1.msra.mxu0 0.0
        %4399 = vmatprep.subr.mxu0 0.0
        %4400 = vmatpush1.msra.mxu0 0.0
        %4401 = vmatprep.subr.mxu0 0.0
        %4402 = vmatpush1.msra.mxu0 0.0
        %4403 = vmatprep.subr.mxu0 0.0
        %4404 = vmatpush1.msra.mxu0 0.0
        %4405 = vmatprep.subr.mxu0 0.0
        %4406 = vmatpush1.msra.mxu0 0.0
        %4407 = vmatprep.subr.mxu0 0.0
        %4408 = vmatpush1.msra.mxu0 0.0
        %4409 = vmatprep.subr.mxu0 0.0
        %4410 = vmatpush1.msra.mxu0 0.0
        %4411 = vmatprep.subr.mxu0 0.0
        %4412 = vmatpush1.msra.mxu0 0.0
        %4413 = vmatprep.subr.mxu0 0.0
        %4414 = vmatpush1.msra.mxu0 0.0
        %4415 = vmatprep.mubr.f32.mxu0 0.0
        %4416 = vmatmul.mubr.f32.gmra.mrb[0].mxu0 %v1216
        %v4417 = vpop.f32.mrb[0].mxu0
        %v4418 = vadd.f32 %v924, %v4417
        %v4419 = vpop.f32.mrb[0].mxu0
        %v4420 = vadd.f32 %v928, %v4419
        %4421 = vdwg.mxu0
        %4422 = vmatprep.subr.mxu0 %v295
        %4423 = vmatpush1.msra.mxu0 %v294
        %4424 = vmatprep.subr.mxu0 %v416
        %4425 = vmatpush1.msra.mxu0 %v415
        %4426 = vmatprep.subr.mxu0 %v1463
        %4427 = vmatpush1.msra.mxu0 %v1460
        %4428 = vmatprep.subr.mxu0 0.0
        %4429 = vmatpush1.msra.mxu0 0.0
        %4430 = vmatprep.subr.mxu0 0.0
        %4431 = vmatpush1.msra.mxu0 0.0
        %4432 = vmatprep.subr.mxu0 0.0
        %4433 = vmatpush1.msra.mxu0 0.0
        %4434 = vmatprep.subr.mxu0 0.0
        %4435 = vmatpush1.msra.mxu0 0.0
        %4436 = vmatprep.subr.mxu0 0.0
        %4437 = vmatpush1.msra.mxu0 0.0
        %4438 = vmatprep.subr.mxu0 0.0
        %4439 = vmatpush1.msra.mxu0 0.0
        %4440 = vmatprep.subr.mxu0 0.0
        %4441 = vmatpush1.msra.mxu0 0.0
        %4442 = vmatprep.subr.mxu0 0.0
        %4443 = vmatpush1.msra.mxu0 0.0
        %4444 = vmatprep.subr.mxu0 0.0
        %4445 = vmatpush1.msra.mxu0 0.0
        %4446 = vmatprep.subr.mxu0 0.0
        %4447 = vmatpush1.msra.mxu0 0.0
        %4448 = vmatprep.subr.mxu0 0.0
        %4449 = vmatpush1.msra.mxu0 0.0
        %4450 = vmatprep.subr.mxu0 0.0
        %4451 = vmatpush1.msra.mxu0 0.0
        %4452 = vmatprep.subr.mxu0 0.0
        %4453 = vmatpush1.msra.mxu0 0.0
        %4454 = vmatprep.subr.mxu0 0.0
        %4455 = vmatpush1.msra.mxu0 0.0
        %4456 = vmatprep.subr.mxu0 0.0
        %4457 = vmatpush1.msra.mxu0 0.0
        %4458 = vmatprep.subr.mxu0 0.0
        %4459 = vmatpush1.msra.mxu0 0.0
        %4460 = vmatprep.subr.mxu0 0.0
        %4461 = vmatpush1.msra.mxu0 0.0
        %4462 = vmatprep.subr.mxu0 0.0
        %4463 = vmatpush1.msra.mxu0 0.0
        %4464 = vmatprep.subr.mxu0 0.0
        %4465 = vmatpush1.msra.mxu0 0.0
        %4466 = vmatprep.subr.mxu0 0.0
        %4467 = vmatpush1.msra.mxu0 0.0
        %4468 = vmatprep.subr.mxu0 0.0
        %4469 = vmatpush1.msra.mxu0 0.0
        %4470 = vmatprep.subr.mxu0 0.0
        %4471 = vmatpush1.msra.mxu0 0.0
        %4472 = vmatprep.subr.mxu0 0.0
        %4473 = vmatpush1.msra.mxu0 0.0
        %4474 = vmatprep.subr.mxu0 0.0
        %4475 = vmatpush1.msra.mxu0 0.0
        %4476 = vmatprep.subr.mxu0 0.0
        %4477 = vmatpush1.msra.mxu0 0.0
        %4478 = vmatprep.subr.mxu0 0.0
        %4479 = vmatpush1.msra.mxu0 0.0
        %4480 = vmatprep.subr.mxu0 0.0
        %4481 = vmatpush1.msra.mxu0 0.0
        %4482 = vmatprep.subr.mxu0 0.0
        %4483 = vmatpush1.msra.mxu0 0.0
        %4484 = vmatprep.subr.mxu0 0.0
        %4485 = vmatpush1.msra.mxu0 0.0
        %4486 = vmatprep.mubr.f32.mxu0 0.0
        %4487 = vmatmul.mubr.f32.gmra.mrb[0].mxu0 %v1216
        %v4488 = vpop.f32.mrb[0].mxu0
        %v4489 = vadd.f32 %v932, %v4488
        %v4490 = vpop.f32.mrb[0].mxu0
        %v4491 = vadd.f32 %v936, %v4490
        %4492 = vdwg.mxu0
        %4493 = vmatprep.subr.mxu0 %v297
        %4494 = vmatpush1.msra.mxu0 %v296
        %4495 = vmatprep.subr.mxu0 %v418
        %4496 = vmatpush1.msra.mxu0 %v417
        %4497 = vmatprep.subr.mxu0 %v1469
        %4498 = vmatpush1.msra.mxu0 %v1466
        %4499 = vmatprep.subr.mxu0 0.0
        %4500 = vmatpush1.msra.mxu0 0.0
        %4501 = vmatprep.subr.mxu0 0.0
        %4502 = vmatpush1.msra.mxu0 0.0
        %4503 = vmatprep.subr.mxu0 0.0
        %4504 = vmatpush1.msra.mxu0 0.0
        %4505 = vmatprep.subr.mxu0 0.0
        %4506 = vmatpush1.msra.mxu0 0.0
        %4507 = vmatprep.subr.mxu0 0.0
        %4508 = vmatpush1.msra.mxu0 0.0
        %4509 = vmatprep.subr.mxu0 0.0
        %4510 = vmatpush1.msra.mxu0 0.0
        %4511 = vmatprep.subr.mxu0 0.0
        %4512 = vmatpush1.msra.mxu0 0.0
        %4513 = vmatprep.subr.mxu0 0.0
        %4514 = vmatpush1.msra.mxu0 0.0
        %4515 = vmatprep.subr.mxu0 0.0
        %4516 = vmatpush1.msra.mxu0 0.0
        %4517 = vmatprep.subr.mxu0 0.0
        %4518 = vmatpush1.msra.mxu0 0.0
        %4519 = vmatprep.subr.mxu0 0.0
        %4520 = vmatpush1.msra.mxu0 0.0
        %4521 = vmatprep.subr.mxu0 0.0
        %4522 = vmatpush1.msra.mxu0 0.0
        %4523 = vmatprep.subr.mxu0 0.0
        %4524 = vmatpush1.msra.mxu0 0.0
        %4525 = vmatprep.subr.mxu0 0.0
        %4526 = vmatpush1.msra.mxu0 0.0
        %4527 = vmatprep.subr.mxu0 0.0
        %4528 = vmatpush1.msra.mxu0 0.0
        %4529 = vmatprep.subr.mxu0 0.0
        %4530 = vmatpush1.msra.mxu0 0.0
        %4531 = vmatprep.subr.mxu0 0.0
        %4532 = vmatpush1.msra.mxu0 0.0
        %4533 = vmatprep.subr.mxu0 0.0
        %4534 = vmatpush1.msra.mxu0 0.0
        %4535 = vmatprep.subr.mxu0 0.0
        %4536 = vmatpush1.msra.mxu0 0.0
        %4537 = vmatprep.subr.mxu0 0.0
        %4538 = vmatpush1.msra.mxu0 0.0
        %4539 = vmatprep.subr.mxu0 0.0
        %4540 = vmatpush1.msra.mxu0 0.0
        %4541 = vmatprep.subr.mxu0 0.0
        %4542 = vmatpush1.msra.mxu0 0.0
        %4543 = vmatprep.subr.mxu0 0.0
        %4544 = vmatpush1.msra.mxu0 0.0
        %4545 = vmatprep.subr.mxu0 0.0
        %4546 = vmatpush1.msra.mxu0 0.0
        %4547 = vmatprep.subr.mxu0 0.0
        %4548 = vmatpush1.msra.mxu0 0.0
        %4549 = vmatprep.subr.mxu0 0.0
        %4550 = vmatpush1.msra.mxu0 0.0
        %4551 = vmatprep.subr.mxu0 0.0
        %4552 = vmatpush1.msra.mxu0 0.0
        %4553 = vmatprep.subr.mxu0 0.0
        %4554 = vmatpush1.msra.mxu0 0.0
        %4555 = vmatprep.subr.mxu0 0.0
        %4556 = vmatpush1.msra.mxu0 0.0
        %4557 = vmatprep.mubr.f32.mxu0 0.0
        %4558 = vmatmul.mubr.f32.gmra.mrb[0].mxu0 %v1216
        %v4559 = vpop.f32.mrb[0].mxu0
        %v4560 = vadd.f32 %v940, %v4559
        %v4561 = vpop.f32.mrb[0].mxu0
        %v4562 = vadd.f32 %v944, %v4561
        %4563 = vdwg.mxu0
        %4564 = vmatprep.subr.mxu0 %v299
        %4565 = vmatpush1.msra.mxu0 %v298
        %4566 = vmatprep.subr.mxu0 %v420
        %4567 = vmatpush1.msra.mxu0 %v419
        %4568 = vmatprep.subr.mxu0 %v1475
        %4569 = vmatpush1.msra.mxu0 %v1472
        %4570 = vmatprep.subr.mxu0 0.0
        %4571 = vmatpush1.msra.mxu0 0.0
        %4572 = vmatprep.subr.mxu0 0.0
        %4573 = vmatpush1.msra.mxu0 0.0
        %4574 = vmatprep.subr.mxu0 0.0
        %4575 = vmatpush1.msra.mxu0 0.0
        %4576 = vmatprep.subr.mxu0 0.0
        %4577 = vmatpush1.msra.mxu0 0.0
        %4578 = vmatprep.subr.mxu0 0.0
        %4579 = vmatpush1.msra.mxu0 0.0
        %4580 = vmatprep.subr.mxu0 0.0
        %4581 = vmatpush1.msra.mxu0 0.0
        %4582 = vmatprep.subr.mxu0 0.0
        %4583 = vmatpush1.msra.mxu0 0.0
        %4584 = vmatprep.subr.mxu0 0.0
        %4585 = vmatpush1.msra.mxu0 0.0
        %4586 = vmatprep.subr.mxu0 0.0
        %4587 = vmatpush1.msra.mxu0 0.0
        %4588 = vmatprep.subr.mxu0 0.0
        %4589 = vmatpush1.msra.mxu0 0.0
        %4590 = vmatprep.subr.mxu0 0.0
        %4591 = vmatpush1.msra.mxu0 0.0
        %4592 = vmatprep.subr.mxu0 0.0
        %4593 = vmatpush1.msra.mxu0 0.0
        %4594 = vmatprep.subr.mxu0 0.0
        %4595 = vmatpush1.msra.mxu0 0.0
        %4596 = vmatprep.subr.mxu0 0.0
        %4597 = vmatpush1.msra.mxu0 0.0
        %4598 = vmatprep.subr.mxu0 0.0
        %4599 = vmatpush1.msra.mxu0 0.0
        %4600 = vmatprep.subr.mxu0 0.0
        %4601 = vmatpush1.msra.mxu0 0.0
        %4602 = vmatprep.subr.mxu0 0.0
        %4603 = vmatpush1.msra.mxu0 0.0
        %4604 = vmatprep.subr.mxu0 0.0
        %4605 = vmatpush1.msra.mxu0 0.0
        %4606 = vmatprep.subr.mxu0 0.0
        %4607 = vmatpush1.msra.mxu0 0.0
        %4608 = vmatprep.subr.mxu0 0.0
        %4609 = vmatpush1.msra.mxu0 0.0
        %4610 = vmatprep.subr.mxu0 0.0
        %4611 = vmatpush1.msra.mxu0 0.0
        %4612 = vmatprep.subr.mxu0 0.0
        %4613 = vmatpush1.msra.mxu0 0.0
        %4614 = vmatprep.subr.mxu0 0.0
        %4615 = vmatpush1.msra.mxu0 0.0
        %4616 = vmatprep.subr.mxu0 0.0
        %4617 = vmatpush1.msra.mxu0 0.0
        %4618 = vmatprep.subr.mxu0 0.0
        %4619 = vmatpush1.msra.mxu0 0.0
        %4620 = vmatprep.subr.mxu0 0.0
        %4621 = vmatpush1.msra.mxu0 0.0
        %4622 = vmatprep.subr.mxu0 0.0
        %4623 = vmatpush1.msra.mxu0 0.0
        %4624 = vmatprep.subr.mxu0 0.0
        %4625 = vmatpush1.msra.mxu0 0.0
        %4626 = vmatprep.subr.mxu0 0.0
        %4627 = vmatpush1.msra.mxu0 0.0
        %4628 = vmatprep.mubr.f32.mxu0 0.0
        %4629 = vmatmul.mubr.f32.gmra.mrb[0].mxu0 %v1216
        %v4630 = vpop.f32.mrb[0].mxu0
        %v4631 = vadd.f32 %v948, %v4630
        %v4632 = vpop.f32.mrb[0].mxu0
        %v4633 = vadd.f32 %v952, %v4632
        %4634 = vdwg.mxu0
        %4635 = vmatprep.subr.mxu0 %v301
        %4636 = vmatpush1.msra.mxu0 %v300
        %4637 = vmatprep.subr.mxu0 %v422
        %4638 = vmatpush1.msra.mxu0 %v421
        %4639 = vmatprep.subr.mxu0 %v1481
        %4640 = vmatpush1.msra.mxu0 %v1478
        %4641 = vmatprep.subr.mxu0 0.0
        %4642 = vmatpush1.msra.mxu0 0.0
        %4643 = vmatprep.subr.mxu0 0.0
        %4644 = vmatpush1.msra.mxu0 0.0
        %4645 = vmatprep.subr.mxu0 0.0
        %4646 = vmatpush1.msra.mxu0 0.0
        %4647 = vmatprep.subr.mxu0 0.0
        %4648 = vmatpush1.msra.mxu0 0.0
        %4649 = vmatprep.subr.mxu0 0.0
        %4650 = vmatpush1.msra.mxu0 0.0
        %4651 = vmatprep.subr.mxu0 0.0
        %4652 = vmatpush1.msra.mxu0 0.0
        %4653 = vmatprep.subr.mxu0 0.0
        %4654 = vmatpush1.msra.mxu0 0.0
        %4655 = vmatprep.subr.mxu0 0.0
        %4656 = vmatpush1.msra.mxu0 0.0
        %4657 = vmatprep.subr.mxu0 0.0
        %4658 = vmatpush1.msra.mxu0 0.0
        %4659 = vmatprep.subr.mxu0 0.0
        %4660 = vmatpush1.msra.mxu0 0.0
        %4661 = vmatprep.subr.mxu0 0.0
        %4662 = vmatpush1.msra.mxu0 0.0
        %4663 = vmatprep.subr.mxu0 0.0
        %4664 = vmatpush1.msra.mxu0 0.0
        %4665 = vmatprep.subr.mxu0 0.0
        %4666 = vmatpush1.msra.mxu0 0.0
        %4667 = vmatprep.subr.mxu0 0.0
        %4668 = vmatpush1.msra.mxu0 0.0
        %4669 = vmatprep.subr.mxu0 0.0
        %4670 = vmatpush1.msra.mxu0 0.0
        %4671 = vmatprep.subr.mxu0 0.0
        %4672 = vmatpush1.msra.mxu0 0.0
        %4673 = vmatprep.subr.mxu0 0.0
        %4674 = vmatpush1.msra.mxu0 0.0
        %4675 = vmatprep.subr.mxu0 0.0
        %4676 = vmatpush1.msra.mxu0 0.0
        %4677 = vmatprep.subr.mxu0 0.0
        %4678 = vmatpush1.msra.mxu0 0.0
        %4679 = vmatprep.subr.mxu0 0.0
        %4680 = vmatpush1.msra.mxu0 0.0
        %4681 = vmatprep.subr.mxu0 0.0
        %4682 = vmatpush1.msra.mxu0 0.0
        %4683 = vmatprep.subr.mxu0 0.0
        %4684 = vmatpush1.msra.mxu0 0.0
        %4685 = vmatprep.subr.mxu0 0.0
        %4686 = vmatpush1.msra.mxu0 0.0
        %4687 = vmatprep.subr.mxu0 0.0
        %4688 = vmatpush1.msra.mxu0 0.0
        %4689 = vmatprep.subr.mxu0 0.0
        %4690 = vmatpush1.msra.mxu0 0.0
        %4691 = vmatprep.subr.mxu0 0.0
        %4692 = vmatpush1.msra.mxu0 0.0
        %4693 = vmatprep.subr.mxu0 0.0
        %4694 = vmatpush1.msra.mxu0 0.0
        %4695 = vmatprep.subr.mxu0 0.0
        %4696 = vmatpush1.msra.mxu0 0.0
        %4697 = vmatprep.subr.mxu0 0.0
        %4698 = vmatpush1.msra.mxu0 0.0
        %4699 = vmatprep.mubr.f32.mxu0 0.0
        %4700 = vmatmul.mubr.f32.gmra.mrb[0].mxu0 %v1216
        %v4701 = vpop.f32.mrb[0].mxu0
        %v4702 = vadd.f32 %v956, %v4701
        %v4703 = vpop.f32.mrb[0].mxu0
        %v4704 = vadd.f32 %v960, %v4703
        %4705 = vdwg.mxu0
        %4706 = vmatprep.subr.mxu0 %v303
        %4707 = vmatpush1.msra.mxu0 %v302
        %4708 = vmatprep.subr.mxu0 %v424
        %4709 = vmatpush1.msra.mxu0 %v423
        %4710 = vmatprep.subr.mxu0 %v1487
        %4711 = vmatpush1.msra.mxu0 %v1484
        %4712 = vmatprep.subr.mxu0 0.0
        %4713 = vmatpush1.msra.mxu0 0.0
        %4714 = vmatprep.subr.mxu0 0.0
        %4715 = vmatpush1.msra.mxu0 0.0
        %4716 = vmatprep.subr.mxu0 0.0
        %4717 = vmatpush1.msra.mxu0 0.0
        %4718 = vmatprep.subr.mxu0 0.0
        %4719 = vmatpush1.msra.mxu0 0.0
        %4720 = vmatprep.subr.mxu0 0.0
        %4721 = vmatpush1.msra.mxu0 0.0
        %4722 = vmatprep.subr.mxu0 0.0
        %4723 = vmatpush1.msra.mxu0 0.0
        %4724 = vmatprep.subr.mxu0 0.0
        %4725 = vmatpush1.msra.mxu0 0.0
        %4726 = vmatprep.subr.mxu0 0.0
        %4727 = vmatpush1.msra.mxu0 0.0
        %4728 = vmatprep.subr.mxu0 0.0
        %4729 = vmatpush1.msra.mxu0 0.0
        %4730 = vmatprep.subr.mxu0 0.0
        %4731 = vmatpush1.msra.mxu0 0.0
        %4732 = vmatprep.subr.mxu0 0.0
        %4733 = vmatpush1.msra.mxu0 0.0
        %4734 = vmatprep.subr.mxu0 0.0
        %4735 = vmatpush1.msra.mxu0 0.0
        %4736 = vmatprep.subr.mxu0 0.0
        %4737 = vmatpush1.msra.mxu0 0.0
        %4738 = vmatprep.subr.mxu0 0.0
        %4739 = vmatpush1.msra.mxu0 0.0
        %4740 = vmatprep.subr.mxu0 0.0
        %4741 = vmatpush1.msra.mxu0 0.0
        %4742 = vmatprep.subr.mxu0 0.0
        %4743 = vmatpush1.msra.mxu0 0.0
        %4744 = vmatprep.subr.mxu0 0.0
        %4745 = vmatpush1.msra.mxu0 0.0
        %4746 = vmatprep.subr.mxu0 0.0
        %4747 = vmatpush1.msra.mxu0 0.0
        %4748 = vmatprep.subr.mxu0 0.0
        %4749 = vmatpush1.msra.mxu0 0.0
        %4750 = vmatprep.subr.mxu0 0.0
        %4751 = vmatpush1.msra.mxu0 0.0
        %4752 = vmatprep.subr.mxu0 0.0
        %4753 = vmatpush1.msra.mxu0 0.0
        %4754 = vmatprep.subr.mxu0 0.0
        %4755 = vmatpush1.msra.mxu0 0.0
        %4756 = vmatprep.subr.mxu0 0.0
        %4757 = vmatpush1.msra.mxu0 0.0
        %4758 = vmatprep.subr.mxu0 0.0
        %4759 = vmatpush1.msra.mxu0 0.0
        %4760 = vmatprep.subr.mxu0 0.0
        %4761 = vmatpush1.msra.mxu0 0.0
        %4762 = vmatprep.subr.mxu0 0.0
        %4763 = vmatpush1.msra.mxu0 0.0
        %4764 = vmatprep.subr.mxu0 0.0
        %4765 = vmatpush1.msra.mxu0 0.0
        %4766 = vmatprep.subr.mxu0 0.0
        %4767 = vmatpush1.msra.mxu0 0.0
        %4768 = vmatprep.subr.mxu0 0.0
        %4769 = vmatpush1.msra.mxu0 0.0
        %4770 = vmatprep.mubr.f32.mxu0 0.0
        %4771 = vmatmul.mubr.f32.gmra.mrb[0].mxu0 %v1216
        %v4772 = vpop.f32.mrb[0].mxu0
        %v4773 = vadd.f32 %v964, %v4772
        %v4774 = vpop.f32.mrb[0].mxu0
        %v4775 = vadd.f32 %v968, %v4774
        %4776 = vdwg.mxu0
        %4777 = vmatprep.subr.mxu0 %v305
        %4778 = vmatpush1.msra.mxu0 %v304
        %4779 = vmatprep.subr.mxu0 %v426
        %4780 = vmatpush1.msra.mxu0 %v425
        %4781 = vmatprep.subr.mxu0 %v1493
        %4782 = vmatpush1.msra.mxu0 %v1490
        %4783 = vmatprep.subr.mxu0 0.0
        %4784 = vmatpush1.msra.mxu0 0.0
        %4785 = vmatprep.subr.mxu0 0.0
        %4786 = vmatpush1.msra.mxu0 0.0
        %4787 = vmatprep.subr.mxu0 0.0
        %4788 = vmatpush1.msra.mxu0 0.0
        %4789 = vmatprep.subr.mxu0 0.0
        %4790 = vmatpush1.msra.mxu0 0.0
        %4791 = vmatprep.subr.mxu0 0.0
        %4792 = vmatpush1.msra.mxu0 0.0
        %4793 = vmatprep.subr.mxu0 0.0
        %4794 = vmatpush1.msra.mxu0 0.0
        %4795 = vmatprep.subr.mxu0 0.0
        %4796 = vmatpush1.msra.mxu0 0.0
        %4797 = vmatprep.subr.mxu0 0.0
        %4798 = vmatpush1.msra.mxu0 0.0
        %4799 = vmatprep.subr.mxu0 0.0
        %4800 = vmatpush1.msra.mxu0 0.0
        %4801 = vmatprep.subr.mxu0 0.0
        %4802 = vmatpush1.msra.mxu0 0.0
        %4803 = vmatprep.subr.mxu0 0.0
        %4804 = vmatpush1.msra.mxu0 0.0
        %4805 = vmatprep.subr.mxu0 0.0
        %4806 = vmatpush1.msra.mxu0 0.0
        %4807 = vmatprep.subr.mxu0 0.0
        %4808 = vmatpush1.msra.mxu0 0.0
        %4809 = vmatprep.subr.mxu0 0.0
        %4810 = vmatpush1.msra.mxu0 0.0
        %4811 = vmatprep.subr.mxu0 0.0
        %4812 = vmatpush1.msra.mxu0 0.0
        %4813 = vmatprep.subr.mxu0 0.0
        %4814 = vmatpush1.msra.mxu0 0.0
        %4815 = vmatprep.subr.mxu0 0.0
        %4816 = vmatpush1.msra.mxu0 0.0
        %4817 = vmatprep.subr.mxu0 0.0
        %4818 = vmatpush1.msra.mxu0 0.0
        %4819 = vmatprep.subr.mxu0 0.0
        %4820 = vmatpush1.msra.mxu0 0.0
        %4821 = vmatprep.subr.mxu0 0.0
        %4822 = vmatpush1.msra.mxu0 0.0
        %4823 = vmatprep.subr.mxu0 0.0
        %4824 = vmatpush1.msra.mxu0 0.0
        %4825 = vmatprep.subr.mxu0 0.0
        %4826 = vmatpush1.msra.mxu0 0.0
        %4827 = vmatprep.subr.mxu0 0.0
        %4828 = vmatpush1.msra.mxu0 0.0
        %4829 = vmatprep.subr.mxu0 0.0
        %4830 = vmatpush1.msra.mxu0 0.0
        %4831 = vmatprep.subr.mxu0 0.0
        %4832 = vmatpush1.msra.mxu0 0.0
        %4833 = vmatprep.subr.mxu0 0.0
        %4834 = vmatpush1.msra.mxu0 0.0
        %4835 = vmatprep.subr.mxu0 0.0
        %4836 = vmatpush1.msra.mxu0 0.0
        %4837 = vmatprep.subr.mxu0 0.0
        %4838 = vmatpush1.msra.mxu0 0.0
        %4839 = vmatprep.subr.mxu0 0.0
        %4840 = vmatpush1.msra.mxu0 0.0
        %4841 = vmatprep.mubr.f32.mxu0 0.0
        %4842 = vmatmul.mubr.f32.gmra.mrb[0].mxu0 %v1216
        %v4843 = vpop.f32.mrb[0].mxu0
        %v4844 = vadd.f32 %v972, %v4843
        %v4845 = vpop.f32.mrb[0].mxu0
        %v4846 = vadd.f32 %v976, %v4845
        %4847 = vdwg.mxu0
        %4848 = vmatprep.subr.mxu0 %v307
        %4849 = vmatpush1.msra.mxu0 %v306
        %4850 = vmatprep.subr.mxu0 %v428
        %4851 = vmatpush1.msra.mxu0 %v427
        %4852 = vmatprep.subr.mxu0 %v1499
        %4853 = vmatpush1.msra.mxu0 %v1496
        %4854 = vmatprep.subr.mxu0 0.0
        %4855 = vmatpush1.msra.mxu0 0.0
        %4856 = vmatprep.subr.mxu0 0.0
        %4857 = vmatpush1.msra.mxu0 0.0
        %4858 = vmatprep.subr.mxu0 0.0
        %4859 = vmatpush1.msra.mxu0 0.0
        %4860 = vmatprep.subr.mxu0 0.0
        %4861 = vmatpush1.msra.mxu0 0.0
        %4862 = vmatprep.subr.mxu0 0.0
        %4863 = vmatpush1.msra.mxu0 0.0
        %4864 = vmatprep.subr.mxu0 0.0
        %4865 = vmatpush1.msra.mxu0 0.0
        %4866 = vmatprep.subr.mxu0 0.0
        %4867 = vmatpush1.msra.mxu0 0.0
        %4868 = vmatprep.subr.mxu0 0.0
        %4869 = vmatpush1.msra.mxu0 0.0
        %4870 = vmatprep.subr.mxu0 0.0
        %4871 = vmatpush1.msra.mxu0 0.0
        %4872 = vmatprep.subr.mxu0 0.0
        %4873 = vmatpush1.msra.mxu0 0.0
        %4874 = vmatprep.subr.mxu0 0.0
        %4875 = vmatpush1.msra.mxu0 0.0
        %4876 = vmatprep.subr.mxu0 0.0
        %4877 = vmatpush1.msra.mxu0 0.0
        %4878 = vmatprep.subr.mxu0 0.0
        %4879 = vmatpush1.msra.mxu0 0.0
        %4880 = vmatprep.subr.mxu0 0.0
        %4881 = vmatpush1.msra.mxu0 0.0
        %4882 = vmatprep.subr.mxu0 0.0
        %4883 = vmatpush1.msra.mxu0 0.0
        %4884 = vmatprep.subr.mxu0 0.0
        %4885 = vmatpush1.msra.mxu0 0.0
        %4886 = vmatprep.subr.mxu0 0.0
        %4887 = vmatpush1.msra.mxu0 0.0
        %4888 = vmatprep.subr.mxu0 0.0
        %4889 = vmatpush1.msra.mxu0 0.0
        %4890 = vmatprep.subr.mxu0 0.0
        %4891 = vmatpush1.msra.mxu0 0.0
        %4892 = vmatprep.subr.mxu0 0.0
        %4893 = vmatpush1.msra.mxu0 0.0
        %4894 = vmatprep.subr.mxu0 0.0
        %4895 = vmatpush1.msra.mxu0 0.0
        %4896 = vmatprep.subr.mxu0 0.0
        %4897 = vmatpush1.msra.mxu0 0.0
        %4898 = vmatprep.subr.mxu0 0.0
        %4899 = vmatpush1.msra.mxu0 0.0
        %4900 = vmatprep.subr.mxu0 0.0
        %4901 = vmatpush1.msra.mxu0 0.0
        %4902 = vmatprep.subr.mxu0 0.0
        %4903 = vmatpush1.msra.mxu0 0.0
        %4904 = vmatprep.subr.mxu0 0.0
        %4905 = vmatpush1.msra.mxu0 0.0
        %4906 = vmatprep.subr.mxu0 0.0
        %4907 = vmatpush1.msra.mxu0 0.0
        %4908 = vmatprep.subr.mxu0 0.0
        %4909 = vmatpush1.msra.mxu0 0.0
        %4910 = vmatprep.subr.mxu0 0.0
        %4911 = vmatpush1.msra.mxu0 0.0
        %4912 = vmatprep.mubr.f32.mxu0 0.0
        %4913 = vmatmul.mubr.f32.gmra.mrb[0].mxu0 %v1216
        %v4914 = vpop.f32.mrb[0].mxu0
        %v4915 = vadd.f32 %v980, %v4914
        %v4916 = vpop.f32.mrb[0].mxu0
        %v4917 = vadd.f32 %v984, %v4916
        %4918 = vdwg.mxu0
        %4919 = vmatprep.subr.mxu0 %v309
        %4920 = vmatpush1.msra.mxu0 %v308
        %4921 = vmatprep.subr.mxu0 %v430
        %4922 = vmatpush1.msra.mxu0 %v429
        %4923 = vmatprep.subr.mxu0 %v1505
        %4924 = vmatpush1.msra.mxu0 %v1502
        %4925 = vmatprep.subr.mxu0 0.0
        %4926 = vmatpush1.msra.mxu0 0.0
        %4927 = vmatprep.subr.mxu0 0.0
        %4928 = vmatpush1.msra.mxu0 0.0
        %4929 = vmatprep.subr.mxu0 0.0
        %4930 = vmatpush1.msra.mxu0 0.0
        %4931 = vmatprep.subr.mxu0 0.0
        %4932 = vmatpush1.msra.mxu0 0.0
        %4933 = vmatprep.subr.mxu0 0.0
        %4934 = vmatpush1.msra.mxu0 0.0
        %4935 = vmatprep.subr.mxu0 0.0
        %4936 = vmatpush1.msra.mxu0 0.0
        %4937 = vmatprep.subr.mxu0 0.0
        %4938 = vmatpush1.msra.mxu0 0.0
        %4939 = vmatprep.subr.mxu0 0.0
        %4940 = vmatpush1.msra.mxu0 0.0
        %4941 = vmatprep.subr.mxu0 0.0
        %4942 = vmatpush1.msra.mxu0 0.0
        %4943 = vmatprep.subr.mxu0 0.0
        %4944 = vmatpush1.msra.mxu0 0.0
        %4945 = vmatprep.subr.mxu0 0.0
        %4946 = vmatpush1.msra.mxu0 0.0
        %4947 = vmatprep.subr.mxu0 0.0
        %4948 = vmatpush1.msra.mxu0 0.0
        %4949 = vmatprep.subr.mxu0 0.0
        %4950 = vmatpush1.msra.mxu0 0.0
        %4951 = vmatprep.subr.mxu0 0.0
        %4952 = vmatpush1.msra.mxu0 0.0
        %4953 = vmatprep.subr.mxu0 0.0
        %4954 = vmatpush1.msra.mxu0 0.0
        %4955 = vmatprep.subr.mxu0 0.0
        %4956 = vmatpush1.msra.mxu0 0.0
        %4957 = vmatprep.subr.mxu0 0.0
        %4958 = vmatpush1.msra.mxu0 0.0
        %4959 = vmatprep.subr.mxu0 0.0
        %4960 = vmatpush1.msra.mxu0 0.0
        %4961 = vmatprep.subr.mxu0 0.0
        %4962 = vmatpush1.msra.mxu0 0.0
        %4963 = vmatprep.subr.mxu0 0.0
        %4964 = vmatpush1.msra.mxu0 0.0
        %4965 = vmatprep.subr.mxu0 0.0
        %4966 = vmatpush1.msra.mxu0 0.0
        %4967 = vmatprep.subr.mxu0 0.0
        %4968 = vmatpush1.msra.mxu0 0.0
        %4969 = vmatprep.subr.mxu0 0.0
        %4970 = vmatpush1.msra.mxu0 0.0
        %4971 = vmatprep.subr.mxu0 0.0
        %4972 = vmatpush1.msra.mxu0 0.0
        %4973 = vmatprep.subr.mxu0 0.0
        %4974 = vmatpush1.msra.mxu0 0.0
        %4975 = vmatprep.subr.mxu0 0.0
        %4976 = vmatpush1.msra.mxu0 0.0
        %4977 = vmatprep.subr.mxu0 0.0
        %4978 = vmatpush1.msra.mxu0 0.0
        %4979 = vmatprep.subr.mxu0 0.0
        %4980 = vmatpush1.msra.mxu0 0.0
        %4981 = vmatprep.subr.mxu0 0.0
        %4982 = vmatpush1.msra.mxu0 0.0
        %4983 = vmatprep.mubr.f32.mxu0 0.0
        %4984 = vmatmul.mubr.f32.gmra.mrb[0].mxu0 %v1216
        %v4985 = vpop.f32.mrb[0].mxu0
        %v4986 = vadd.f32 %v988, %v4985
        %v4987 = vpop.f32.mrb[0].mxu0
        %v4988 = vadd.f32 %v992, %v4987
        %4989 = vdwg.mxu0
        %4990 = vmatprep.subr.mxu0 %v311
        %4991 = vmatpush1.msra.mxu0 %v310
        %4992 = vmatprep.subr.mxu0 %v432
        %4993 = vmatpush1.msra.mxu0 %v431
        %4994 = vmatprep.subr.mxu0 %v1511
        %4995 = vmatpush1.msra.mxu0 %v1508
        %4996 = vmatprep.subr.mxu0 0.0
        %4997 = vmatpush1.msra.mxu0 0.0
        %4998 = vmatprep.subr.mxu0 0.0
        %4999 = vmatpush1.msra.mxu0 0.0
        %5000 = vmatprep.subr.mxu0 0.0
        %5001 = vmatpush1.msra.mxu0 0.0
        %5002 = vmatprep.subr.mxu0 0.0
        %5003 = vmatpush1.msra.mxu0 0.0
        %5004 = vmatprep.subr.mxu0 0.0
        %5005 = vmatpush1.msra.mxu0 0.0
        %5006 = vmatprep.subr.mxu0 0.0
        %5007 = vmatpush1.msra.mxu0 0.0
        %5008 = vmatprep.subr.mxu0 0.0
        %5009 = vmatpush1.msra.mxu0 0.0
        %5010 = vmatprep.subr.mxu0 0.0
        %5011 = vmatpush1.msra.mxu0 0.0
        %5012 = vmatprep.subr.mxu0 0.0
        %5013 = vmatpush1.msra.mxu0 0.0
        %5014 = vmatprep.subr.mxu0 0.0
        %5015 = vmatpush1.msra.mxu0 0.0
        %5016 = vmatprep.subr.mxu0 0.0
        %5017 = vmatpush1.msra.mxu0 0.0
        %5018 = vmatprep.subr.mxu0 0.0
        %5019 = vmatpush1.msra.mxu0 0.0
        %5020 = vmatprep.subr.mxu0 0.0
        %5021 = vmatpush1.msra.mxu0 0.0
        %5022 = vmatprep.subr.mxu0 0.0
        %5023 = vmatpush1.msra.mxu0 0.0
        %5024 = vmatprep.subr.mxu0 0.0
        %5025 = vmatpush1.msra.mxu0 0.0
        %5026 = vmatprep.subr.mxu0 0.0
        %5027 = vmatpush1.msra.mxu0 0.0
        %5028 = vmatprep.subr.mxu0 0.0
        %5029 = vmatpush1.msra.mxu0 0.0
        %5030 = vmatprep.subr.mxu0 0.0
        %5031 = vmatpush1.msra.mxu0 0.0
        %5032 = vmatprep.subr.mxu0 0.0
        %5033 = vmatpush1.msra.mxu0 0.0
        %5034 = vmatprep.subr.mxu0 0.0
        %5035 = vmatpush1.msra.mxu0 0.0
        %5036 = vmatprep.subr.mxu0 0.0
        %5037 = vmatpush1.msra.mxu0 0.0
        %5038 = vmatprep.subr.mxu0 0.0
        %5039 = vmatpush1.msra.mxu0 0.0
        %5040 = vmatprep.subr.mxu0 0.0
        %5041 = vmatpush1.msra.mxu0 0.0
        %5042 = vmatprep.subr.mxu0 0.0
        %5043 = vmatpush1.msra.mxu0 0.0
        %5044 = vmatprep.subr.mxu0 0.0
        %5045 = vmatpush1.msra.mxu0 0.0
        %5046 = vmatprep.subr.mxu0 0.0
        %5047 = vmatpush1.msra.mxu0 0.0
        %5048 = vmatprep.subr.mxu0 0.0
        %5049 = vmatpush1.msra.mxu0 0.0
        %5050 = vmatprep.subr.mxu0 0.0
        %5051 = vmatpush1.msra.mxu0 0.0
        %5052 = vmatprep.subr.mxu0 0.0
        %5053 = vmatpush1.msra.mxu0 0.0
        %5054 = vmatprep.mubr.f32.mxu0 0.0
        %5055 = vmatmul.mubr.f32.gmra.mrb[0].mxu0 %v1216
        %v5056 = vpop.f32.mrb[0].mxu0
        %v5057 = vadd.f32 %v996, %v5056
        %v5058 = vpop.f32.mrb[0].mxu0
        %v5059 = vadd.f32 %v1000, %v5058
        %5060 = vdwg.mxu0
        %5061 = vmatprep.subr.mxu0 %v313
        %5062 = vmatpush1.msra.mxu0 %v312
        %5063 = vmatprep.subr.mxu0 %v434
        %5064 = vmatpush1.msra.mxu0 %v433
        %5065 = vmatprep.subr.mxu0 %v1517
        %5066 = vmatpush1.msra.mxu0 %v1514
        %5067 = vmatprep.subr.mxu0 0.0
        %5068 = vmatpush1.msra.mxu0 0.0
        %5069 = vmatprep.subr.mxu0 0.0
        %5070 = vmatpush1.msra.mxu0 0.0
        %5071 = vmatprep.subr.mxu0 0.0
        %5072 = vmatpush1.msra.mxu0 0.0
        %5073 = vmatprep.subr.mxu0 0.0
        %5074 = vmatpush1.msra.mxu0 0.0
        %5075 = vmatprep.subr.mxu0 0.0
        %5076 = vmatpush1.msra.mxu0 0.0
        %5077 = vmatprep.subr.mxu0 0.0
        %5078 = vmatpush1.msra.mxu0 0.0
        %5079 = vmatprep.subr.mxu0 0.0
        %5080 = vmatpush1.msra.mxu0 0.0
        %5081 = vmatprep.subr.mxu0 0.0
        %5082 = vmatpush1.msra.mxu0 0.0
        %5083 = vmatprep.subr.mxu0 0.0
        %5084 = vmatpush1.msra.mxu0 0.0
        %5085 = vmatprep.subr.mxu0 0.0
        %5086 = vmatpush1.msra.mxu0 0.0
        %5087 = vmatprep.subr.mxu0 0.0
        %5088 = vmatpush1.msra.mxu0 0.0
        %5089 = vmatprep.subr.mxu0 0.0
        %5090 = vmatpush1.msra.mxu0 0.0
        %5091 = vmatprep.subr.mxu0 0.0
        %5092 = vmatpush1.msra.mxu0 0.0
        %5093 = vmatprep.subr.mxu0 0.0
        %5094 = vmatpush1.msra.mxu0 0.0
        %5095 = vmatprep.subr.mxu0 0.0
        %5096 = vmatpush1.msra.mxu0 0.0
        %5097 = vmatprep.subr.mxu0 0.0
        %5098 = vmatpush1.msra.mxu0 0.0
        %5099 = vmatprep.subr.mxu0 0.0
        %5100 = vmatpush1.msra.mxu0 0.0
        %5101 = vmatprep.subr.mxu0 0.0
        %5102 = vmatpush1.msra.mxu0 0.0
        %5103 = vmatprep.subr.mxu0 0.0
        %5104 = vmatpush1.msra.mxu0 0.0
        %5105 = vmatprep.subr.mxu0 0.0
        %5106 = vmatpush1.msra.mxu0 0.0
        %5107 = vmatprep.subr.mxu0 0.0
        %5108 = vmatpush1.msra.mxu0 0.0
        %5109 = vmatprep.subr.mxu0 0.0
        %5110 = vmatpush1.msra.mxu0 0.0
        %5111 = vmatprep.subr.mxu0 0.0
        %5112 = vmatpush1.msra.mxu0 0.0
        %5113 = vmatprep.subr.mxu0 0.0
        %5114 = vmatpush1.msra.mxu0 0.0
        %5115 = vmatprep.subr.mxu0 0.0
        %5116 = vmatpush1.msra.mxu0 0.0
        %5117 = vmatprep.subr.mxu0 0.0
        %5118 = vmatpush1.msra.mxu0 0.0
        %5119 = vmatprep.subr.mxu0 0.0
        %5120 = vmatpush1.msra.mxu0 0.0
        %5121 = vmatprep.subr.mxu0 0.0
        %5122 = vmatpush1.msra.mxu0 0.0
        %5123 = vmatprep.subr.mxu0 0.0
        %5124 = vmatpush1.msra.mxu0 0.0
        %5125 = vmatprep.mubr.f32.mxu0 0.0
        %5126 = vmatmul.mubr.f32.gmra.mrb[0].mxu0 %v1216
        %v5127 = vpop.f32.mrb[0].mxu0
        %v5128 = vadd.f32 %v1004, %v5127
        %v5129 = vpop.f32.mrb[0].mxu0
        %v5130 = vadd.f32 %v1008, %v5129
        %5131 = vdwg.mxu0
        %5132 = vmatprep.subr.mxu0 %v315
        %5133 = vmatpush1.msra.mxu0 %v314
        %5134 = vmatprep.subr.mxu0 %v436
        %5135 = vmatpush1.msra.mxu0 %v435
        %5136 = vmatprep.subr.mxu0 %v1523
        %5137 = vmatpush1.msra.mxu0 %v1520
        %5138 = vmatprep.subr.mxu0 0.0
        %5139 = vmatpush1.msra.mxu0 0.0
        %5140 = vmatprep.subr.mxu0 0.0
        %5141 = vmatpush1.msra.mxu0 0.0
        %5142 = vmatprep.subr.mxu0 0.0
        %5143 = vmatpush1.msra.mxu0 0.0
        %5144 = vmatprep.subr.mxu0 0.0
        %5145 = vmatpush1.msra.mxu0 0.0
        %5146 = vmatprep.subr.mxu0 0.0
        %5147 = vmatpush1.msra.mxu0 0.0
        %5148 = vmatprep.subr.mxu0 0.0
        %5149 = vmatpush1.msra.mxu0 0.0
        %5150 = vmatprep.subr.mxu0 0.0
        %5151 = vmatpush1.msra.mxu0 0.0
        %5152 = vmatprep.subr.mxu0 0.0
        %5153 = vmatpush1.msra.mxu0 0.0
        %5154 = vmatprep.subr.mxu0 0.0
        %5155 = vmatpush1.msra.mxu0 0.0
        %5156 = vmatprep.subr.mxu0 0.0
        %5157 = vmatpush1.msra.mxu0 0.0
        %5158 = vmatprep.subr.mxu0 0.0
        %5159 = vmatpush1.msra.mxu0 0.0
        %5160 = vmatprep.subr.mxu0 0.0
        %5161 = vmatpush1.msra.mxu0 0.0
        %5162 = vmatprep.subr.mxu0 0.0
        %5163 = vmatpush1.msra.mxu0 0.0
        %5164 = vmatprep.subr.mxu0 0.0
        %5165 = vmatpush1.msra.mxu0 0.0
        %5166 = vmatprep.subr.mxu0 0.0
        %5167 = vmatpush1.msra.mxu0 0.0
        %5168 = vmatprep.subr.mxu0 0.0
        %5169 = vmatpush1.msra.mxu0 0.0
        %5170 = vmatprep.subr.mxu0 0.0
        %5171 = vmatpush1.msra.mxu0 0.0
        %5172 = vmatprep.subr.mxu0 0.0
        %5173 = vmatpush1.msra.mxu0 0.0
        %5174 = vmatprep.subr.mxu0 0.0
        %5175 = vmatpush1.msra.mxu0 0.0
        %5176 = vmatprep.subr.mxu0 0.0
        %5177 = vmatpush1.msra.mxu0 0.0
        %5178 = vmatprep.subr.mxu0 0.0
        %5179 = vmatpush1.msra.mxu0 0.0
        %5180 = vmatprep.subr.mxu0 0.0
        %5181 = vmatpush1.msra.mxu0 0.0
        %5182 = vmatprep.subr.mxu0 0.0
        %5183 = vmatpush1.msra.mxu0 0.0
        %5184 = vmatprep.subr.mxu0 0.0
        %5185 = vmatpush1.msra.mxu0 0.0
        %5186 = vmatprep.subr.mxu0 0.0
        %5187 = vmatpush1.msra.mxu0 0.0
        %5188 = vmatprep.subr.mxu0 0.0
        %5189 = vmatpush1.msra.mxu0 0.0
        %5190 = vmatprep.subr.mxu0 0.0
        %5191 = vmatpush1.msra.mxu0 0.0
        %5192 = vmatprep.subr.mxu0 0.0
        %5193 = vmatpush1.msra.mxu0 0.0
        %5194 = vmatprep.subr.mxu0 0.0
        %5195 = vmatpush1.msra.mxu0 0.0
        %5196 = vmatprep.mubr.f32.mxu0 0.0
        %5197 = vmatmul.mubr.f32.gmra.mrb[0].mxu0 %v1216
        %v5198 = vpop.f32.mrb[0].mxu0
        %v5199 = vadd.f32 %v1012, %v5198
        %v5200 = vpop.f32.mrb[0].mxu0
        %v5201 = vadd.f32 %v1016, %v5200
        %5202 = vdwg.mxu0
        %5203 = vmatprep.subr.mxu0 %v317
        %5204 = vmatpush1.msra.mxu0 %v316
        %5205 = vmatprep.subr.mxu0 %v438
        %5206 = vmatpush1.msra.mxu0 %v437
        %5207 = vmatprep.subr.mxu0 %v1529
        %5208 = vmatpush1.msra.mxu0 %v1526
        %5209 = vmatprep.subr.mxu0 0.0
        %5210 = vmatpush1.msra.mxu0 0.0
        %5211 = vmatprep.subr.mxu0 0.0
        %5212 = vmatpush1.msra.mxu0 0.0
        %5213 = vmatprep.subr.mxu0 0.0
        %5214 = vmatpush1.msra.mxu0 0.0
        %5215 = vmatprep.subr.mxu0 0.0
        %5216 = vmatpush1.msra.mxu0 0.0
        %5217 = vmatprep.subr.mxu0 0.0
        %5218 = vmatpush1.msra.mxu0 0.0
        %5219 = vmatprep.subr.mxu0 0.0
        %5220 = vmatpush1.msra.mxu0 0.0
        %5221 = vmatprep.subr.mxu0 0.0
        %5222 = vmatpush1.msra.mxu0 0.0
        %5223 = vmatprep.subr.mxu0 0.0
        %5224 = vmatpush1.msra.mxu0 0.0
        %5225 = vmatprep.subr.mxu0 0.0
        %5226 = vmatpush1.msra.mxu0 0.0
        %5227 = vmatprep.subr.mxu0 0.0
        %5228 = vmatpush1.msra.mxu0 0.0
        %5229 = vmatprep.subr.mxu0 0.0
        %5230 = vmatpush1.msra.mxu0 0.0
        %5231 = vmatprep.subr.mxu0 0.0
        %5232 = vmatpush1.msra.mxu0 0.0
        %5233 = vmatprep.subr.mxu0 0.0
        %5234 = vmatpush1.msra.mxu0 0.0
        %5235 = vmatprep.subr.mxu0 0.0
        %5236 = vmatpush1.msra.mxu0 0.0
        %5237 = vmatprep.subr.mxu0 0.0
        %5238 = vmatpush1.msra.mxu0 0.0
        %5239 = vmatprep.subr.mxu0 0.0
        %5240 = vmatpush1.msra.mxu0 0.0
        %5241 = vmatprep.subr.mxu0 0.0
        %5242 = vmatpush1.msra.mxu0 0.0
        %5243 = vmatprep.subr.mxu0 0.0
        %5244 = vmatpush1.msra.mxu0 0.0
        %5245 = vmatprep.subr.mxu0 0.0
        %5246 = vmatpush1.msra.mxu0 0.0
        %5247 = vmatprep.subr.mxu0 0.0
        %5248 = vmatpush1.msra.mxu0 0.0
        %5249 = vmatprep.subr.mxu0 0.0
        %5250 = vmatpush1.msra.mxu0 0.0
        %5251 = vmatprep.subr.mxu0 0.0
        %5252 = vmatpush1.msra.mxu0 0.0
        %5253 = vmatprep.subr.mxu0 0.0
        %5254 = vmatpush1.msra.mxu0 0.0
        %5255 = vmatprep.subr.mxu0 0.0
        %5256 = vmatpush1.msra.mxu0 0.0
        %5257 = vmatprep.subr.mxu0 0.0
        %5258 = vmatpush1.msra.mxu0 0.0
        %5259 = vmatprep.subr.mxu0 0.0
        %5260 = vmatpush1.msra.mxu0 0.0
        %5261 = vmatprep.subr.mxu0 0.0
        %5262 = vmatpush1.msra.mxu0 0.0
        %5263 = vmatprep.subr.mxu0 0.0
        %5264 = vmatpush1.msra.mxu0 0.0
        %5265 = vmatprep.subr.mxu0 0.0
        %5266 = vmatpush1.msra.mxu0 0.0
        %5267 = vmatprep.mubr.f32.mxu0 0.0
        %5268 = vmatmul.mubr.f32.gmra.mrb[0].mxu0 %v1216
        %v5269 = vpop.f32.mrb[0].mxu0
        %v5270 = vadd.f32 %v1020, %v5269
        %v5271 = vpop.f32.mrb[0].mxu0
        %v5272 = vadd.f32 %v1024, %v5271
        %5273 = vdwg.mxu0
        %5274 = vmatprep.subr.mxu0 %v319
        %5275 = vmatpush1.msra.mxu0 %v318
        %5276 = vmatprep.subr.mxu0 %v440
        %5277 = vmatpush1.msra.mxu0 %v439
        %5278 = vmatprep.subr.mxu0 %v1535
        %5279 = vmatpush1.msra.mxu0 %v1532
        %5280 = vmatprep.subr.mxu0 0.0
        %5281 = vmatpush1.msra.mxu0 0.0
        %5282 = vmatprep.subr.mxu0 0.0
        %5283 = vmatpush1.msra.mxu0 0.0
        %5284 = vmatprep.subr.mxu0 0.0
        %5285 = vmatpush1.msra.mxu0 0.0
        %5286 = vmatprep.subr.mxu0 0.0
        %5287 = vmatpush1.msra.mxu0 0.0
        %5288 = vmatprep.subr.mxu0 0.0
        %5289 = vmatpush1.msra.mxu0 0.0
        %5290 = vmatprep.subr.mxu0 0.0
        %5291 = vmatpush1.msra.mxu0 0.0
        %5292 = vmatprep.subr.mxu0 0.0
        %5293 = vmatpush1.msra.mxu0 0.0
        %5294 = vmatprep.subr.mxu0 0.0
        %5295 = vmatpush1.msra.mxu0 0.0
        %5296 = vmatprep.subr.mxu0 0.0
        %5297 = vmatpush1.msra.mxu0 0.0
        %5298 = vmatprep.subr.mxu0 0.0
        %5299 = vmatpush1.msra.mxu0 0.0
        %5300 = vmatprep.subr.mxu0 0.0
        %5301 = vmatpush1.msra.mxu0 0.0
        %5302 = vmatprep.subr.mxu0 0.0
        %5303 = vmatpush1.msra.mxu0 0.0
        %5304 = vmatprep.subr.mxu0 0.0
        %5305 = vmatpush1.msra.mxu0 0.0
        %5306 = vmatprep.subr.mxu0 0.0
        %5307 = vmatpush1.msra.mxu0 0.0
        %5308 = vmatprep.subr.mxu0 0.0
        %5309 = vmatpush1.msra.mxu0 0.0
        %5310 = vmatprep.subr.mxu0 0.0
        %5311 = vmatpush1.msra.mxu0 0.0
        %5312 = vmatprep.subr.mxu0 0.0
        %5313 = vmatpush1.msra.mxu0 0.0
        %5314 = vmatprep.subr.mxu0 0.0
        %5315 = vmatpush1.msra.mxu0 0.0
        %5316 = vmatprep.subr.mxu0 0.0
        %5317 = vmatpush1.msra.mxu0 0.0
        %5318 = vmatprep.subr.mxu0 0.0
        %5319 = vmatpush1.msra.mxu0 0.0
        %5320 = vmatprep.subr.mxu0 0.0
        %5321 = vmatpush1.msra.mxu0 0.0
        %5322 = vmatprep.subr.mxu0 0.0
        %5323 = vmatpush1.msra.mxu0 0.0
        %5324 = vmatprep.subr.mxu0 0.0
        %5325 = vmatpush1.msra.mxu0 0.0
        %5326 = vmatprep.subr.mxu0 0.0
        %5327 = vmatpush1.msra.mxu0 0.0
        %5328 = vmatprep.subr.mxu0 0.0
        %5329 = vmatpush1.msra.mxu0 0.0
        %5330 = vmatprep.subr.mxu0 0.0
        %5331 = vmatpush1.msra.mxu0 0.0
        %5332 = vmatprep.subr.mxu0 0.0
        %5333 = vmatpush1.msra.mxu0 0.0
        %5334 = vmatprep.subr.mxu0 0.0
        %5335 = vmatpush1.msra.mxu0 0.0
        %5336 = vmatprep.subr.mxu0 0.0
        %5337 = vmatpush1.msra.mxu0 0.0
        %5338 = vmatprep.mubr.f32.mxu0 0.0
        %5339 = vmatmul.mubr.f32.gmra.mrb[0].mxu0 %v1216
        %v5340 = vpop.f32.mrb[0].mxu0
        %v5341 = vadd.f32 %v1028, %v5340
        %v5342 = vpop.f32.mrb[0].mxu0
        %v5343 = vadd.f32 %v1032, %v5342
        %5344 = vdwg.mxu0
        %5345 = vmatprep.subr.mxu0 %v321
        %5346 = vmatpush1.msra.mxu0 %v320
        %5347 = vmatprep.subr.mxu0 %v442
        %5348 = vmatpush1.msra.mxu0 %v441
        %5349 = vmatprep.subr.mxu0 %v1541
        %5350 = vmatpush1.msra.mxu0 %v1538
        %5351 = vmatprep.subr.mxu0 0.0
        %5352 = vmatpush1.msra.mxu0 0.0
        %5353 = vmatprep.subr.mxu0 0.0
        %5354 = vmatpush1.msra.mxu0 0.0
        %5355 = vmatprep.subr.mxu0 0.0
        %5356 = vmatpush1.msra.mxu0 0.0
        %5357 = vmatprep.subr.mxu0 0.0
        %5358 = vmatpush1.msra.mxu0 0.0
        %5359 = vmatprep.subr.mxu0 0.0
        %5360 = vmatpush1.msra.mxu0 0.0
        %5361 = vmatprep.subr.mxu0 0.0
        %5362 = vmatpush1.msra.mxu0 0.0
        %5363 = vmatprep.subr.mxu0 0.0
        %5364 = vmatpush1.msra.mxu0 0.0
        %5365 = vmatprep.subr.mxu0 0.0
        %5366 = vmatpush1.msra.mxu0 0.0
        %5367 = vmatprep.subr.mxu0 0.0
        %5368 = vmatpush1.msra.mxu0 0.0
        %5369 = vmatprep.subr.mxu0 0.0
        %5370 = vmatpush1.msra.mxu0 0.0
        %5371 = vmatprep.subr.mxu0 0.0
        %5372 = vmatpush1.msra.mxu0 0.0
        %5373 = vmatprep.subr.mxu0 0.0
        %5374 = vmatpush1.msra.mxu0 0.0
        %5375 = vmatprep.subr.mxu0 0.0
        %5376 = vmatpush1.msra.mxu0 0.0
        %5377 = vmatprep.subr.mxu0 0.0
        %5378 = vmatpush1.msra.mxu0 0.0
        %5379 = vmatprep.subr.mxu0 0.0
        %5380 = vmatpush1.msra.mxu0 0.0
        %5381 = vmatprep.subr.mxu0 0.0
        %5382 = vmatpush1.msra.mxu0 0.0
        %5383 = vmatprep.subr.mxu0 0.0
        %5384 = vmatpush1.msra.mxu0 0.0
        %5385 = vmatprep.subr.mxu0 0.0
        %5386 = vmatpush1.msra.mxu0 0.0
        %5387 = vmatprep.subr.mxu0 0.0
        %5388 = vmatpush1.msra.mxu0 0.0
        %5389 = vmatprep.subr.mxu0 0.0
        %5390 = vmatpush1.msra.mxu0 0.0
        %5391 = vmatprep.subr.mxu0 0.0
        %5392 = vmatpush1.msra.mxu0 0.0
        %5393 = vmatprep.subr.mxu0 0.0
        %5394 = vmatpush1.msra.mxu0 0.0
        %5395 = vmatprep.subr.mxu0 0.0
        %5396 = vmatpush1.msra.mxu0 0.0
        %5397 = vmatprep.subr.mxu0 0.0
        %5398 = vmatpush1.msra.mxu0 0.0
        %5399 = vmatprep.subr.mxu0 0.0
        %5400 = vmatpush1.msra.mxu0 0.0
        %5401 = vmatprep.subr.mxu0 0.0
        %5402 = vmatpush1.msra.mxu0 0.0
        %5403 = vmatprep.subr.mxu0 0.0
        %5404 = vmatpush1.msra.mxu0 0.0
        %5405 = vmatprep.subr.mxu0 0.0
        %5406 = vmatpush1.msra.mxu0 0.0
        %5407 = vmatprep.subr.mxu0 0.0
        %5408 = vmatpush1.msra.mxu0 0.0
        %5409 = vmatprep.mubr.f32.mxu0 0.0
        %5410 = vmatmul.mubr.f32.gmra.mrb[0].mxu0 %v1216
        %v5411 = vpop.f32.mrb[0].mxu0
        %v5412 = vadd.f32 %v1036, %v5411
        %v5413 = vpop.f32.mrb[0].mxu0
        %v5414 = vadd.f32 %v1040, %v5413
        %5415 = vdwg.mxu0
        %5416 = vmatprep.subr.mxu0 %v323
        %5417 = vmatpush1.msra.mxu0 %v322
        %5418 = vmatprep.subr.mxu0 %v444
        %5419 = vmatpush1.msra.mxu0 %v443
        %5420 = vmatprep.subr.mxu0 %v1547
        %5421 = vmatpush1.msra.mxu0 %v1544
        %5422 = vmatprep.subr.mxu0 0.0
        %5423 = vmatpush1.msra.mxu0 0.0
        %5424 = vmatprep.subr.mxu0 0.0
        %5425 = vmatpush1.msra.mxu0 0.0
        %5426 = vmatprep.subr.mxu0 0.0
        %5427 = vmatpush1.msra.mxu0 0.0
        %5428 = vmatprep.subr.mxu0 0.0
        %5429 = vmatpush1.msra.mxu0 0.0
        %5430 = vmatprep.subr.mxu0 0.0
        %5431 = vmatpush1.msra.mxu0 0.0
        %5432 = vmatprep.subr.mxu0 0.0
        %5433 = vmatpush1.msra.mxu0 0.0
        %5434 = vmatprep.subr.mxu0 0.0
        %5435 = vmatpush1.msra.mxu0 0.0
        %5436 = vmatprep.subr.mxu0 0.0
        %5437 = vmatpush1.msra.mxu0 0.0
        %5438 = vmatprep.subr.mxu0 0.0
        %5439 = vmatpush1.msra.mxu0 0.0
        %5440 = vmatprep.subr.mxu0 0.0
        %5441 = vmatpush1.msra.mxu0 0.0
        %5442 = vmatprep.subr.mxu0 0.0
        %5443 = vmatpush1.msra.mxu0 0.0
        %5444 = vmatprep.subr.mxu0 0.0
        %5445 = vmatpush1.msra.mxu0 0.0
        %5446 = vmatprep.subr.mxu0 0.0
        %5447 = vmatpush1.msra.mxu0 0.0
        %5448 = vmatprep.subr.mxu0 0.0
        %5449 = vmatpush1.msra.mxu0 0.0
        %5450 = vmatprep.subr.mxu0 0.0
        %5451 = vmatpush1.msra.mxu0 0.0
        %5452 = vmatprep.subr.mxu0 0.0
        %5453 = vmatpush1.msra.mxu0 0.0
        %5454 = vmatprep.subr.mxu0 0.0
        %5455 = vmatpush1.msra.mxu0 0.0
        %5456 = vmatprep.subr.mxu0 0.0
        %5457 = vmatpush1.msra.mxu0 0.0
        %5458 = vmatprep.subr.mxu0 0.0
        %5459 = vmatpush1.msra.mxu0 0.0
        %5460 = vmatprep.subr.mxu0 0.0
        %5461 = vmatpush1.msra.mxu0 0.0
        %5462 = vmatprep.subr.mxu0 0.0
        %5463 = vmatpush1.msra.mxu0 0.0
        %5464 = vmatprep.subr.mxu0 0.0
        %5465 = vmatpush1.msra.mxu0 0.0
        %5466 = vmatprep.subr.mxu0 0.0
        %5467 = vmatpush1.msra.mxu0 0.0
        %5468 = vmatprep.subr.mxu0 0.0
        %5469 = vmatpush1.msra.mxu0 0.0
        %5470 = vmatprep.subr.mxu0 0.0
        %5471 = vmatpush1.msra.mxu0 0.0
        %5472 = vmatprep.subr.mxu0 0.0
        %5473 = vmatpush1.msra.mxu0 0.0
        %5474 = vmatprep.subr.mxu0 0.0
        %5475 = vmatpush1.msra.mxu0 0.0
        %5476 = vmatprep.subr.mxu0 0.0
        %5477 = vmatpush1.msra.mxu0 0.0
        %5478 = vmatprep.subr.mxu0 0.0
        %5479 = vmatpush1.msra.mxu0 0.0
        %5480 = vmatprep.mubr.f32.mxu0 0.0
        %5481 = vmatmul.mubr.f32.gmra.mrb[0].mxu0 %v1216
        %v5482 = vpop.f32.mrb[0].mxu0
        %v5483 = vadd.f32 %v1044, %v5482
        %v5484 = vpop.f32.mrb[0].mxu0
        %v5485 = vadd.f32 %v1048, %v5484
        %5486 = vdwg.mxu0
        %5487 = vmatprep.subr.mxu0 %v325
        %5488 = vmatpush1.msra.mxu0 %v324
        %5489 = vmatprep.subr.mxu0 %v446
        %5490 = vmatpush1.msra.mxu0 %v445
        %5491 = vmatprep.subr.mxu0 %v1553
        %5492 = vmatpush1.msra.mxu0 %v1550
        %5493 = vmatprep.subr.mxu0 0.0
        %5494 = vmatpush1.msra.mxu0 0.0
        %5495 = vmatprep.subr.mxu0 0.0
        %5496 = vmatpush1.msra.mxu0 0.0
        %5497 = vmatprep.subr.mxu0 0.0
        %5498 = vmatpush1.msra.mxu0 0.0
        %5499 = vmatprep.subr.mxu0 0.0
        %5500 = vmatpush1.msra.mxu0 0.0
        %5501 = vmatprep.subr.mxu0 0.0
        %5502 = vmatpush1.msra.mxu0 0.0
        %5503 = vmatprep.subr.mxu0 0.0
        %5504 = vmatpush1.msra.mxu0 0.0
        %5505 = vmatprep.subr.mxu0 0.0
        %5506 = vmatpush1.msra.mxu0 0.0
        %5507 = vmatprep.subr.mxu0 0.0
        %5508 = vmatpush1.msra.mxu0 0.0
        %5509 = vmatprep.subr.mxu0 0.0
        %5510 = vmatpush1.msra.mxu0 0.0
        %5511 = vmatprep.subr.mxu0 0.0
        %5512 = vmatpush1.msra.mxu0 0.0
        %5513 = vmatprep.subr.mxu0 0.0
        %5514 = vmatpush1.msra.mxu0 0.0
        %5515 = vmatprep.subr.mxu0 0.0
        %5516 = vmatpush1.msra.mxu0 0.0
        %5517 = vmatprep.subr.mxu0 0.0
        %5518 = vmatpush1.msra.mxu0 0.0
        %5519 = vmatprep.subr.mxu0 0.0
        %5520 = vmatpush1.msra.mxu0 0.0
        %5521 = vmatprep.subr.mxu0 0.0
        %5522 = vmatpush1.msra.mxu0 0.0
        %5523 = vmatprep.subr.mxu0 0.0
        %5524 = vmatpush1.msra.mxu0 0.0
        %5525 = vmatprep.subr.mxu0 0.0
        %5526 = vmatpush1.msra.mxu0 0.0
        %5527 = vmatprep.subr.mxu0 0.0
        %5528 = vmatpush1.msra.mxu0 0.0
        %5529 = vmatprep.subr.mxu0 0.0
        %5530 = vmatpush1.msra.mxu0 0.0
        %5531 = vmatprep.subr.mxu0 0.0
        %5532 = vmatpush1.msra.mxu0 0.0
        %5533 = vmatprep.subr.mxu0 0.0
        %5534 = vmatpush1.msra.mxu0 0.0
        %5535 = vmatprep.subr.mxu0 0.0
        %5536 = vmatpush1.msra.mxu0 0.0
        %5537 = vmatprep.subr.mxu0 0.0
        %5538 = vmatpush1.msra.mxu0 0.0
        %5539 = vmatprep.subr.mxu0 0.0
        %5540 = vmatpush1.msra.mxu0 0.0
        %5541 = vmatprep.subr.mxu0 0.0
        %5542 = vmatpush1.msra.mxu0 0.0
        %5543 = vmatprep.subr.mxu0 0.0
        %5544 = vmatpush1.msra.mxu0 0.0
        %5545 = vmatprep.subr.mxu0 0.0
        %5546 = vmatpush1.msra.mxu0 0.0
        %5547 = vmatprep.subr.mxu0 0.0
        %5548 = vmatpush1.msra.mxu0 0.0
        %5549 = vmatprep.subr.mxu0 0.0
        %5550 = vmatpush1.msra.mxu0 0.0
        %5551 = vmatprep.mubr.f32.mxu0 0.0
        %5552 = vmatmul.mubr.f32.gmra.mrb[0].mxu0 %v1216
        %v5553 = vpop.f32.mrb[0].mxu0
        %v5554 = vadd.f32 %v1052, %v5553
        %v5555 = vpop.f32.mrb[0].mxu0
        %v5556 = vadd.f32 %v1056, %v5555
        %5557 = vdwg.mxu0
        %5558 = vmatprep.subr.mxu0 %v327
        %5559 = vmatpush1.msra.mxu0 %v326
        %5560 = vmatprep.subr.mxu0 %v448
        %5561 = vmatpush1.msra.mxu0 %v447
        %5562 = vmatprep.subr.mxu0 %v1559
        %5563 = vmatpush1.msra.mxu0 %v1556
        %5564 = vmatprep.subr.mxu0 0.0
        %5565 = vmatpush1.msra.mxu0 0.0
        %5566 = vmatprep.subr.mxu0 0.0
        %5567 = vmatpush1.msra.mxu0 0.0
        %5568 = vmatprep.subr.mxu0 0.0
        %5569 = vmatpush1.msra.mxu0 0.0
        %5570 = vmatprep.subr.mxu0 0.0
        %5571 = vmatpush1.msra.mxu0 0.0
        %5572 = vmatprep.subr.mxu0 0.0
        %5573 = vmatpush1.msra.mxu0 0.0
        %5574 = vmatprep.subr.mxu0 0.0
        %5575 = vmatpush1.msra.mxu0 0.0
        %5576 = vmatprep.subr.mxu0 0.0
        %5577 = vmatpush1.msra.mxu0 0.0
        %5578 = vmatprep.subr.mxu0 0.0
        %5579 = vmatpush1.msra.mxu0 0.0
        %5580 = vmatprep.subr.mxu0 0.0
        %5581 = vmatpush1.msra.mxu0 0.0
        %5582 = vmatprep.subr.mxu0 0.0
        %5583 = vmatpush1.msra.mxu0 0.0
        %5584 = vmatprep.subr.mxu0 0.0
        %5585 = vmatpush1.msra.mxu0 0.0
        %5586 = vmatprep.subr.mxu0 0.0
        %5587 = vmatpush1.msra.mxu0 0.0
        %5588 = vmatprep.subr.mxu0 0.0
        %5589 = vmatpush1.msra.mxu0 0.0
        %5590 = vmatprep.subr.mxu0 0.0
        %5591 = vmatpush1.msra.mxu0 0.0
        %5592 = vmatprep.subr.mxu0 0.0
        %5593 = vmatpush1.msra.mxu0 0.0
        %5594 = vmatprep.subr.mxu0 0.0
        %5595 = vmatpush1.msra.mxu0 0.0
        %5596 = vmatprep.subr.mxu0 0.0
        %5597 = vmatpush1.msra.mxu0 0.0
        %5598 = vmatprep.subr.mxu0 0.0
        %5599 = vmatpush1.msra.mxu0 0.0
        %5600 = vmatprep.subr.mxu0 0.0
        %5601 = vmatpush1.msra.mxu0 0.0
        %5602 = vmatprep.subr.mxu0 0.0
        %5603 = vmatpush1.msra.mxu0 0.0
        %5604 = vmatprep.subr.mxu0 0.0
        %5605 = vmatpush1.msra.mxu0 0.0
        %5606 = vmatprep.subr.mxu0 0.0
        %5607 = vmatpush1.msra.mxu0 0.0
        %5608 = vmatprep.subr.mxu0 0.0
        %5609 = vmatpush1.msra.mxu0 0.0
        %5610 = vmatprep.subr.mxu0 0.0
        %5611 = vmatpush1.msra.mxu0 0.0
        %5612 = vmatprep.subr.mxu0 0.0
        %5613 = vmatpush1.msra.mxu0 0.0
        %5614 = vmatprep.subr.mxu0 0.0
        %5615 = vmatpush1.msra.mxu0 0.0
        %5616 = vmatprep.subr.mxu0 0.0
        %5617 = vmatpush1.msra.mxu0 0.0
        %5618 = vmatprep.subr.mxu0 0.0
        %5619 = vmatpush1.msra.mxu0 0.0
        %5620 = vmatprep.subr.mxu0 0.0
        %5621 = vmatpush1.msra.mxu0 0.0
        %5622 = vmatprep.mubr.f32.mxu0 0.0
        %5623 = vmatmul.mubr.f32.gmra.mrb[0].mxu0 %v1216
        %v5624 = vpop.f32.mrb[0].mxu0
        %v5625 = vadd.f32 %v1060, %v5624
        %v5626 = vpop.f32.mrb[0].mxu0
        %v5627 = vadd.f32 %v1064, %v5626
        %5628 = vdwg.mxu0
        %5629 = vmatprep.subr.mxu0 %v329
        %5630 = vmatpush1.msra.mxu0 %v328
        %5631 = vmatprep.subr.mxu0 %v450
        %5632 = vmatpush1.msra.mxu0 %v449
        %5633 = vmatprep.subr.mxu0 %v1565
        %5634 = vmatpush1.msra.mxu0 %v1562
        %5635 = vmatprep.subr.mxu0 0.0
        %5636 = vmatpush1.msra.mxu0 0.0
        %5637 = vmatprep.subr.mxu0 0.0
        %5638 = vmatpush1.msra.mxu0 0.0
        %5639 = vmatprep.subr.mxu0 0.0
        %5640 = vmatpush1.msra.mxu0 0.0
        %5641 = vmatprep.subr.mxu0 0.0
        %5642 = vmatpush1.msra.mxu0 0.0
        %5643 = vmatprep.subr.mxu0 0.0
        %5644 = vmatpush1.msra.mxu0 0.0
        %5645 = vmatprep.subr.mxu0 0.0
        %5646 = vmatpush1.msra.mxu0 0.0
        %5647 = vmatprep.subr.mxu0 0.0
        %5648 = vmatpush1.msra.mxu0 0.0
        %5649 = vmatprep.subr.mxu0 0.0
        %5650 = vmatpush1.msra.mxu0 0.0
        %5651 = vmatprep.subr.mxu0 0.0
        %5652 = vmatpush1.msra.mxu0 0.0
        %5653 = vmatprep.subr.mxu0 0.0
        %5654 = vmatpush1.msra.mxu0 0.0
        %5655 = vmatprep.subr.mxu0 0.0
        %5656 = vmatpush1.msra.mxu0 0.0
        %5657 = vmatprep.subr.mxu0 0.0
        %5658 = vmatpush1.msra.mxu0 0.0
        %5659 = vmatprep.subr.mxu0 0.0
        %5660 = vmatpush1.msra.mxu0 0.0
        %5661 = vmatprep.subr.mxu0 0.0
        %5662 = vmatpush1.msra.mxu0 0.0
        %5663 = vmatprep.subr.mxu0 0.0
        %5664 = vmatpush1.msra.mxu0 0.0
        %5665 = vmatprep.subr.mxu0 0.0
        %5666 = vmatpush1.msra.mxu0 0.0
        %5667 = vmatprep.subr.mxu0 0.0
        %5668 = vmatpush1.msra.mxu0 0.0
        %5669 = vmatprep.subr.mxu0 0.0
        %5670 = vmatpush1.msra.mxu0 0.0
        %5671 = vmatprep.subr.mxu0 0.0
        %5672 = vmatpush1.msra.mxu0 0.0
        %5673 = vmatprep.subr.mxu0 0.0
        %5674 = vmatpush1.msra.mxu0 0.0
        %5675 = vmatprep.subr.mxu0 0.0
        %5676 = vmatpush1.msra.mxu0 0.0
        %5677 = vmatprep.subr.mxu0 0.0
        %5678 = vmatpush1.msra.mxu0 0.0
        %5679 = vmatprep.subr.mxu0 0.0
        %5680 = vmatpush1.msra.mxu0 0.0
        %5681 = vmatprep.subr.mxu0 0.0
        %5682 = vmatpush1.msra.mxu0 0.0
        %5683 = vmatprep.subr.mxu0 0.0
        %5684 = vmatpush1.msra.mxu0 0.0
        %5685 = vmatprep.subr.mxu0 0.0
        %5686 = vmatpush1.msra.mxu0 0.0
        %5687 = vmatprep.subr.mxu0 0.0
        %5688 = vmatpush1.msra.mxu0 0.0
        %5689 = vmatprep.subr.mxu0 0.0
        %5690 = vmatpush1.msra.mxu0 0.0
        %5691 = vmatprep.subr.mxu0 0.0
        %5692 = vmatpush1.msra.mxu0 0.0
        %5693 = vmatprep.mubr.f32.mxu0 0.0
        %5694 = vmatmul.mubr.f32.gmra.mrb[0].mxu0 %v1216
        %v5695 = vpop.f32.mrb[0].mxu0
        %v5696 = vadd.f32 %v1068, %v5695
        %v5697 = vpop.f32.mrb[0].mxu0
        %v5698 = vadd.f32 %v1072, %v5697
        %5699 = vdwg.mxu0
        %5700 = vmatprep.subr.mxu0 %v331
        %5701 = vmatpush1.msra.mxu0 %v330
        %5702 = vmatprep.subr.mxu0 %v452
        %5703 = vmatpush1.msra.mxu0 %v451
        %5704 = vmatprep.subr.mxu0 %v1571
        %5705 = vmatpush1.msra.mxu0 %v1568
        %5706 = vmatprep.subr.mxu0 0.0
        %5707 = vmatpush1.msra.mxu0 0.0
        %5708 = vmatprep.subr.mxu0 0.0
        %5709 = vmatpush1.msra.mxu0 0.0
        %5710 = vmatprep.subr.mxu0 0.0
        %5711 = vmatpush1.msra.mxu0 0.0
        %5712 = vmatprep.subr.mxu0 0.0
        %5713 = vmatpush1.msra.mxu0 0.0
        %5714 = vmatprep.subr.mxu0 0.0
        %5715 = vmatpush1.msra.mxu0 0.0
        %5716 = vmatprep.subr.mxu0 0.0
        %5717 = vmatpush1.msra.mxu0 0.0
        %5718 = vmatprep.subr.mxu0 0.0
        %5719 = vmatpush1.msra.mxu0 0.0
        %5720 = vmatprep.subr.mxu0 0.0
        %5721 = vmatpush1.msra.mxu0 0.0
        %5722 = vmatprep.subr.mxu0 0.0
        %5723 = vmatpush1.msra.mxu0 0.0
        %5724 = vmatprep.subr.mxu0 0.0
        %5725 = vmatpush1.msra.mxu0 0.0
        %5726 = vmatprep.subr.mxu0 0.0
        %5727 = vmatpush1.msra.mxu0 0.0
        %5728 = vmatprep.subr.mxu0 0.0
        %5729 = vmatpush1.msra.mxu0 0.0
        %5730 = vmatprep.subr.mxu0 0.0
        %5731 = vmatpush1.msra.mxu0 0.0
        %5732 = vmatprep.subr.mxu0 0.0
        %5733 = vmatpush1.msra.mxu0 0.0
        %5734 = vmatprep.subr.mxu0 0.0
        %5735 = vmatpush1.msra.mxu0 0.0
        %5736 = vmatprep.subr.mxu0 0.0
        %5737 = vmatpush1.msra.mxu0 0.0
        %5738 = vmatprep.subr.mxu0 0.0
        %5739 = vmatpush1.msra.mxu0 0.0
        %5740 = vmatprep.subr.mxu0 0.0
        %5741 = vmatpush1.msra.mxu0 0.0
        %5742 = vmatprep.subr.mxu0 0.0
        %5743 = vmatpush1.msra.mxu0 0.0
        %5744 = vmatprep.subr.mxu0 0.0
        %5745 = vmatpush1.msra.mxu0 0.0
        %5746 = vmatprep.subr.mxu0 0.0
        %5747 = vmatpush1.msra.mxu0 0.0
        %5748 = vmatprep.subr.mxu0 0.0
        %5749 = vmatpush1.msra.mxu0 0.0
        %5750 = vmatprep.subr.mxu0 0.0
        %5751 = vmatpush1.msra.mxu0 0.0
        %5752 = vmatprep.subr.mxu0 0.0
        %5753 = vmatpush1.msra.mxu0 0.0
        %5754 = vmatprep.subr.mxu0 0.0
        %5755 = vmatpush1.msra.mxu0 0.0
        %5756 = vmatprep.subr.mxu0 0.0
        %5757 = vmatpush1.msra.mxu0 0.0
        %5758 = vmatprep.subr.mxu0 0.0
        %5759 = vmatpush1.msra.mxu0 0.0
        %5760 = vmatprep.subr.mxu0 0.0
        %5761 = vmatpush1.msra.mxu0 0.0
        %5762 = vmatprep.subr.mxu0 0.0
        %5763 = vmatpush1.msra.mxu0 0.0
        %5764 = vmatprep.mubr.f32.mxu0 0.0
        %5765 = vmatmul.mubr.f32.gmra.mrb[0].mxu0 %v1216
        %v5766 = vpop.f32.mrb[0].mxu0
        %v5767 = vadd.f32 %v1076, %v5766
        %v5768 = vpop.f32.mrb[0].mxu0
        %v5769 = vadd.f32 %v1080, %v5768
        %5770 = vdwg.mxu0
        %5771 = vmatprep.subr.mxu0 %v333
        %5772 = vmatpush1.msra.mxu0 %v332
        %5773 = vmatprep.subr.mxu0 %v454
        %5774 = vmatpush1.msra.mxu0 %v453
        %5775 = vmatprep.subr.mxu0 %v1577
        %5776 = vmatpush1.msra.mxu0 %v1574
        %5777 = vmatprep.subr.mxu0 0.0
        %5778 = vmatpush1.msra.mxu0 0.0
        %5779 = vmatprep.subr.mxu0 0.0
        %5780 = vmatpush1.msra.mxu0 0.0
        %5781 = vmatprep.subr.mxu0 0.0
        %5782 = vmatpush1.msra.mxu0 0.0
        %5783 = vmatprep.subr.mxu0 0.0
        %5784 = vmatpush1.msra.mxu0 0.0
        %5785 = vmatprep.subr.mxu0 0.0
        %5786 = vmatpush1.msra.mxu0 0.0
        %5787 = vmatprep.subr.mxu0 0.0
        %5788 = vmatpush1.msra.mxu0 0.0
        %5789 = vmatprep.subr.mxu0 0.0
        %5790 = vmatpush1.msra.mxu0 0.0
        %5791 = vmatprep.subr.mxu0 0.0
        %5792 = vmatpush1.msra.mxu0 0.0
        %5793 = vmatprep.subr.mxu0 0.0
        %5794 = vmatpush1.msra.mxu0 0.0
        %5795 = vmatprep.subr.mxu0 0.0
        %5796 = vmatpush1.msra.mxu0 0.0
        %5797 = vmatprep.subr.mxu0 0.0
        %5798 = vmatpush1.msra.mxu0 0.0
        %5799 = vmatprep.subr.mxu0 0.0
        %5800 = vmatpush1.msra.mxu0 0.0
        %5801 = vmatprep.subr.mxu0 0.0
        %5802 = vmatpush1.msra.mxu0 0.0
        %5803 = vmatprep.subr.mxu0 0.0
        %5804 = vmatpush1.msra.mxu0 0.0
        %5805 = vmatprep.subr.mxu0 0.0
        %5806 = vmatpush1.msra.mxu0 0.0
        %5807 = vmatprep.subr.mxu0 0.0
        %5808 = vmatpush1.msra.mxu0 0.0
        %5809 = vmatprep.subr.mxu0 0.0
        %5810 = vmatpush1.msra.mxu0 0.0
        %5811 = vmatprep.subr.mxu0 0.0
        %5812 = vmatpush1.msra.mxu0 0.0
        %5813 = vmatprep.subr.mxu0 0.0
        %5814 = vmatpush1.msra.mxu0 0.0
        %5815 = vmatprep.subr.mxu0 0.0
        %5816 = vmatpush1.msra.mxu0 0.0
        %5817 = vmatprep.subr.mxu0 0.0
        %5818 = vmatpush1.msra.mxu0 0.0
        %5819 = vmatprep.subr.mxu0 0.0
        %5820 = vmatpush1.msra.mxu0 0.0
        %5821 = vmatprep.subr.mxu0 0.0
        %5822 = vmatpush1.msra.mxu0 0.0
        %5823 = vmatprep.subr.mxu0 0.0
        %5824 = vmatpush1.msra.mxu0 0.0
        %5825 = vmatprep.subr.mxu0 0.0
        %5826 = vmatpush1.msra.mxu0 0.0
        %5827 = vmatprep.subr.mxu0 0.0
        %5828 = vmatpush1.msra.mxu0 0.0
        %5829 = vmatprep.subr.mxu0 0.0
        %5830 = vmatpush1.msra.mxu0 0.0
        %5831 = vmatprep.subr.mxu0 0.0
        %5832 = vmatpush1.msra.mxu0 0.0
        %5833 = vmatprep.subr.mxu0 0.0
        %5834 = vmatpush1.msra.mxu0 0.0
        %5835 = vmatprep.mubr.f32.mxu0 0.0
        %5836 = vmatmul.mubr.f32.gmra.mrb[0].mxu0 %v1216
        %v5837 = vpop.f32.mrb[0].mxu0
        %v5838 = vadd.f32 %v1084, %v5837
        %v5839 = vpop.f32.mrb[0].mxu0
        %v5840 = vadd.f32 %v1088, %v5839
        %5841 = vdwg.mxu0
        %5842 = vmatprep.subr.mxu0 0.0
        %5843 = vmatpush1.msra.mxu0 %v334
        %5844 = vmatprep.subr.mxu0 0.0
        %5845 = vmatpush1.msra.mxu0 %v455
        %5846 = vmatprep.subr.mxu0 0.0
        %5847 = vmatpush1.msra.mxu0 %v1580
        %5848 = vmatprep.subr.mxu0 0.0
        %5849 = vmatpush1.msra.mxu0 0.0
        %5850 = vmatprep.subr.mxu0 0.0
        %5851 = vmatpush1.msra.mxu0 0.0
        %5852 = vmatprep.subr.mxu0 0.0
        %5853 = vmatpush1.msra.mxu0 0.0
        %5854 = vmatprep.subr.mxu0 0.0
        %5855 = vmatpush1.msra.mxu0 0.0
        %5856 = vmatprep.subr.mxu0 0.0
        %5857 = vmatpush1.msra.mxu0 0.0
        %5858 = vmatprep.subr.mxu0 0.0
        %5859 = vmatpush1.msra.mxu0 0.0
        %5860 = vmatprep.subr.mxu0 0.0
        %5861 = vmatpush1.msra.mxu0 0.0
        %5862 = vmatprep.subr.mxu0 0.0
        %5863 = vmatpush1.msra.mxu0 0.0
        %5864 = vmatprep.subr.mxu0 0.0
        %5865 = vmatpush1.msra.mxu0 0.0
        %5866 = vmatprep.subr.mxu0 0.0
        %5867 = vmatpush1.msra.mxu0 0.0
        %5868 = vmatprep.subr.mxu0 0.0
        %5869 = vmatpush1.msra.mxu0 0.0
        %5870 = vmatprep.subr.mxu0 0.0
        %5871 = vmatpush1.msra.mxu0 0.0
        %5872 = vmatprep.subr.mxu0 0.0
        %5873 = vmatpush1.msra.mxu0 0.0
        %5874 = vmatprep.subr.mxu0 0.0
        %5875 = vmatpush1.msra.mxu0 0.0
        %5876 = vmatprep.subr.mxu0 0.0
        %5877 = vmatpush1.msra.mxu0 0.0
        %5878 = vmatprep.subr.mxu0 0.0
        %5879 = vmatpush1.msra.mxu0 0.0
        %5880 = vmatprep.subr.mxu0 0.0
        %5881 = vmatpush1.msra.mxu0 0.0
        %5882 = vmatprep.subr.mxu0 0.0
        %5883 = vmatpush1.msra.mxu0 0.0
        %5884 = vmatprep.subr.mxu0 0.0
        %5885 = vmatpush1.msra.mxu0 0.0
        %5886 = vmatprep.subr.mxu0 0.0
        %5887 = vmatpush1.msra.mxu0 0.0
        %5888 = vmatprep.subr.mxu0 0.0
        %5889 = vmatpush1.msra.mxu0 0.0
        %5890 = vmatprep.subr.mxu0 0.0
        %5891 = vmatpush1.msra.mxu0 0.0
        %5892 = vmatprep.subr.mxu0 0.0
        %5893 = vmatpush1.msra.mxu0 0.0
        %5894 = vmatprep.subr.mxu0 0.0
        %5895 = vmatpush1.msra.mxu0 0.0
        %5896 = vmatprep.subr.mxu0 0.0
        %5897 = vmatpush1.msra.mxu0 0.0
        %5898 = vmatprep.subr.mxu0 0.0
        %5899 = vmatpush1.msra.mxu0 0.0
        %5900 = vmatprep.subr.mxu0 0.0
        %5901 = vmatpush1.msra.mxu0 0.0
        %5902 = vmatprep.subr.mxu0 0.0
        %5903 = vmatpush1.msra.mxu0 0.0
        %5904 = vmatprep.subr.mxu0 0.0
        %5905 = vmatpush1.msra.mxu0 0.0
        %5906 = vmatprep.mubr.f32.mxu0 0.0
        %5907 = vmatmul.mubr.f32.gmra.mrb[0].mxu0 %v1216
        %v5908 = vpop.f32.mrb[0].mxu0
        %v5909 = vadd.f32 %v1092, %v5908
        %v5910 = vpop.f32.mrb[0].mxu0
        %5911 = vdwg.mxu0
        %5912 = vst [vmem:[%s212] sm:$0xff] %v1649
        %5913 = vst [vmem:[%s212 + $0x8] sm:$0xff] %v1651
        %5914 = vst [vmem:[%s212 + $0x10] sm:$0xff] %v1720
        %5915 = vst [vmem:[%s212 + $0x18] sm:$0xff] %v1722
        %5916 = vst [vmem:[%s212 + $0x20] sm:$0xff] %v1791
        %5917 = vst [vmem:[%s212 + $0x28] sm:$0xff] %v1793
        %5918 = vst [vmem:[%s212 + $0x30] sm:$0xff] %v1862
        %5919 = vst [vmem:[%s212 + $0x38] sm:$0xff] %v1864
        %5920 = vst [vmem:[%s212 + $0x40] sm:$0xff] %v1933
        %5921 = vst [vmem:[%s212 + $0x48] sm:$0xff] %v1935
        %5922 = vst [vmem:[%s212 + $0x50] sm:$0xff] %v2004
        %5923 = vst [vmem:[%s212 + $0x58] sm:$0xff] %v2006
        %5924 = vst [vmem:[%s212 + $0x60] sm:$0xff] %v2075
        %5925 = vst [vmem:[%s212 + $0x68] sm:$0xff] %v2077
        %5926 = vst [vmem:[%s212 + $0x70] sm:$0xff] %v2146
        %5927 = vst [vmem:[%s212 + $0x78] sm:$0xff] %v2148
        %5928 = vst [vmem:[%s212 + $0x80] sm:$0xff] %v2217
        %5929 = vst [vmem:[%s212 + $0x88] sm:$0xff] %v2219
        %5930 = vst [vmem:[%s212 + $0x90] sm:$0xff] %v2288
        %5931 = vst [vmem:[%s212 + $0x98] sm:$0xff] %v2290
        %5932 = vst [vmem:[%s212 + $0xa0] sm:$0xff] %v2359
        %5933 = vst [vmem:[%s212 + $0xa8] sm:$0xff] %v2361
        %5934 = vst [vmem:[%s212 + $0xb0] sm:$0xff] %v2430
        %5935 = vst [vmem:[%s212 + $0xb8] sm:$0xff] %v2432
        %5936 = vst [vmem:[%s212 + $0xc0] sm:$0xff] %v2501
        %5937 = vst [vmem:[%s212 + $0xc8] sm:$0xff] %v2503
        %5938 = vst [vmem:[%s212 + $0xd0] sm:$0xff] %v2572
        %5939 = vst [vmem:[%s212 + $0xd8] sm:$0xff] %v2574
        %5940 = vst [vmem:[%s212 + $0xe0] sm:$0xff] %v2643
        %5941 = vst [vmem:[%s212 + $0xe8] sm:$0xff] %v2645
        %5942 = vst [vmem:[%s212 + $0xf0] sm:$0xff] %v2714
        %5943 = vst [vmem:[%s212 + $0xf8] sm:$0xff] %v2716
        %5944 = vst [vmem:[%s212 + $0x100] sm:$0xff] %v2785
        %5945 = vst [vmem:[%s212 + $0x108] sm:$0xff] %v2787
        %5946 = vst [vmem:[%s212 + $0x110] sm:$0xff] %v2856
        %5947 = vst [vmem:[%s212 + $0x118] sm:$0xff] %v2858
        %5948 = vst [vmem:[%s212 + $0x120] sm:$0xff] %v2927
        %5949 = vst [vmem:[%s212 + $0x128] sm:$0xff] %v2929
        %5950 = vst [vmem:[%s212 + $0x130] sm:$0xff] %v2998
        %5951 = vst [vmem:[%s212 + $0x138] sm:$0xff] %v3000
        %5952 = vst [vmem:[%s212 + $0x140] sm:$0xff] %v3069
        %5953 = vst [vmem:[%s212 + $0x148] sm:$0xff] %v3071
        %5954 = vst [vmem:[%s212 + $0x150] sm:$0xff] %v3140
        %5955 = vst [vmem:[%s212 + $0x158] sm:$0xff] %v3142
        %5956 = vst [vmem:[%s212 + $0x160] sm:$0xff] %v3211
        %5957 = vst [vmem:[%s212 + $0x168] sm:$0xff] %v3213
        %5958 = vst [vmem:[%s212 + $0x170] sm:$0xff] %v3282
        %5959 = vst [vmem:[%s212 + $0x178] sm:$0xff] %v3284
        %5960 = vst [vmem:[%s212 + $0x180] sm:$0xff] %v3353
        %5961 = vst [vmem:[%s212 + $0x188] sm:$0xff] %v3355
        %5962 = vst [vmem:[%s212 + $0x190] sm:$0xff] %v3424
        %5963 = vst [vmem:[%s212 + $0x198] sm:$0xff] %v3426
        %5964 = vst [vmem:[%s212 + $0x1a0] sm:$0xff] %v3495
        %5965 = vst [vmem:[%s212 + $0x1a8] sm:$0xff] %v3497
        %5966 = vst [vmem:[%s212 + $0x1b0] sm:$0xff] %v3566
        %5967 = vst [vmem:[%s212 + $0x1b8] sm:$0xff] %v3568
        %5968 = vst [vmem:[%s212 + $0x1c0] sm:$0xff] %v3637
        %5969 = vst [vmem:[%s212 + $0x1c8] sm:$0xff] %v3639
        %5970 = vst [vmem:[%s212 + $0x1d0] sm:$0xff] %v3708
        %5971 = vst [vmem:[%s212 + $0x1d8] sm:$0xff] %v3710
        %5972 = vst [vmem:[%s212 + $0x1e0] sm:$0xff] %v3779
        %5973 = vst [vmem:[%s212 + $0x1e8] sm:$0xff] %v3781
        %5974 = vst [vmem:[%s212 + $0x1f0] sm:$0xff] %v3850
        %5975 = vst [vmem:[%s212 + $0x1f8] sm:$0xff] %v3852
        %5976 = vst [vmem:[%s212 + $0x200] sm:$0xff] %v3921
        %5977 = vst [vmem:[%s212 + $0x208] sm:$0xff] %v3923
        %5978 = vst [vmem:[%s212 + $0x210] sm:$0xff] %v3992
        %5979 = vst [vmem:[%s212 + $0x218] sm:$0xff] %v3994
        %5980 = vst [vmem:[%s212 + $0x220] sm:$0xff] %v4063
        %5981 = vst [vmem:[%s212 + $0x228] sm:$0xff] %v4065
        %5982 = vst [vmem:[%s212 + $0x230] sm:$0xff] %v4134
        %5983 = vst [vmem:[%s212 + $0x238] sm:$0xff] %v4136
        %5984 = vst [vmem:[%s212 + $0x240] sm:$0xff] %v4205
        %5985 = vst [vmem:[%s212 + $0x248] sm:$0xff] %v4207
        %5986 = vst [vmem:[%s212 + $0x250] sm:$0xff] %v4276
        %5987 = vst [vmem:[%s212 + $0x258] sm:$0xff] %v4278
        %5988 = vst [vmem:[%s212 + $0x260] sm:$0xff] %v4347
        %5989 = vst [vmem:[%s212 + $0x268] sm:$0xff] %v4349
        %5990 = vst [vmem:[%s212 + $0x270] sm:$0xff] %v4418
        %5991 = vst [vmem:[%s212 + $0x278] sm:$0xff] %v4420
        %5992 = vst [vmem:[%s212 + $0x280] sm:$0xff] %v4489
        %5993 = vst [vmem:[%s212 + $0x288] sm:$0xff] %v4491
        %5994 = vst [vmem:[%s212 + $0x290] sm:$0xff] %v4560
        %5995 = vst [vmem:[%s212 + $0x298] sm:$0xff] %v4562
        %5996 = vst [vmem:[%s212 + $0x2a0] sm:$0xff] %v4631
        %5997 = vst [vmem:[%s212 + $0x2a8] sm:$0xff] %v4633
        %5998 = vst [vmem:[%s212 + $0x2b0] sm:$0xff] %v4702
        %5999 = vst [vmem:[%s212 + $0x2b8] sm:$0xff] %v4704
        %6000 = vst [vmem:[%s212 + $0x2c0] sm:$0xff] %v4773
        %6001 = vst [vmem:[%s212 + $0x2c8] sm:$0xff] %v4775
        %6002 = vst [vmem:[%s212 + $0x2d0] sm:$0xff] %v4844
        %6003 = vst [vmem:[%s212 + $0x2d8] sm:$0xff] %v4846
        %6004 = vst [vmem:[%s212 + $0x2e0] sm:$0xff] %v4915
        %6005 = vst [vmem:[%s212 + $0x2e8] sm:$0xff] %v4917
        %6006 = vst [vmem:[%s212 + $0x2f0] sm:$0xff] %v4986
        %6007 = vst [vmem:[%s212 + $0x2f8] sm:$0xff] %v4988
        %6008 = vst [vmem:[%s212 + $0x300] sm:$0xff] %v5057
        %6009 = vst [vmem:[%s212 + $0x308] sm:$0xff] %v5059
        %6010 = vst [vmem:[%s212 + $0x310] sm:$0xff] %v5128
        %6011 = vst [vmem:[%s212 + $0x318] sm:$0xff] %v5130
        %6012 = vst [vmem:[%s212 + $0x320] sm:$0xff] %v5199
        %6013 = vst [vmem:[%s212 + $0x328] sm:$0xff] %v5201
        %6014 = vst [vmem:[%s212 + $0x330] sm:$0xff] %v5270
        %6015 = vst [vmem:[%s212 + $0x338] sm:$0xff] %v5272
        %6016 = vst [vmem:[%s212 + $0x340] sm:$0xff] %v5341
        %6017 = vst [vmem:[%s212 + $0x348] sm:$0xff] %v5343
        %6018 = vst [vmem:[%s212 + $0x350] sm:$0xff] %v5412
        %6019 = vst [vmem:[%s212 + $0x358] sm:$0xff] %v5414
        %6020 = vst [vmem:[%s212 + $0x360] sm:$0xff] %v5483
        %6021 = vst [vmem:[%s212 + $0x368] sm:$0xff] %v5485
        %6022 = vst [vmem:[%s212 + $0x370] sm:$0xff] %v5554
        %6023 = vst [vmem:[%s212 + $0x378] sm:$0xff] %v5556
        %6024 = vst [vmem:[%s212 + $0x380] sm:$0xff] %v5625
        %6025 = vst [vmem:[%s212 + $0x388] sm:$0xff] %v5627
        %6026 = vst [vmem:[%s212 + $0x390] sm:$0xff] %v5696
        %6027 = vst [vmem:[%s212 + $0x398] sm:$0xff] %v5698
        %6028 = vst [vmem:[%s212 + $0x3a0] sm:$0xff] %v5767
        %6029 = vst [vmem:[%s212 + $0x3a8] sm:$0xff] %v5769
        %6030 = vst [vmem:[%s212 + $0x3b0] sm:$0xff] %v5838
        %6031 = vst [vmem:[%s212 + $0x3b8] sm:$0xff] %v5840
        %6032 = vst [vmem:[%s212 + $0x3c0] sm:$0xff] %v5909
        %s6033 = sand.u32 %s97, 1
        %s6034 = scalar_lea.sflag [#allocation4], %s6033
        %s6035 = sand.u32 %s97, 1
        %s6036 = smul.addr %s6035, 968
        %s6037 = scalar_lea.vmem [#allocation8], %s6036
        // Predicated region
        $region45: #{tpu_custom_call.1} parent=31 // pred_check
          %p6038 = pneg %p107
        $region46: #{tpu_custom_call.1} parent=31 // pred_check_branch
          %6040 = sbr.rel (%p6038) target = $region48
        $region47: #{tpu_custom_call.1} parent=31 // pred_region
          %s6042 = ssub.s32 15488, 15488
          %6043 = vsyncadd %s6034, %s6042
          %s6044 = smul.addr %s21, 121
          %s6045 = smul.addr %s6044, 128
          %s6046 = scalar_lea.hbm %s3, %s6045
          %s6048 = sshll.u32 %s6037, 4
          %s6049 = int_to_ptr.vmem [resolvable:$true] %s6048
          %6051 = dma.vmem_to_hbm [thread:$0]  %s6049, 15488, %s6046, %s6034
        $region48: #{tpu_custom_call.1} parent=31 // pred_fallthru
          _
      $region32: #{tpu_custom_call.1} parent=5 // pred_fallthru
        _
      %p6052 = scmp.le.s32.totalorder 2, %s16
      // Predicated region
      $region49: #{tpu_custom_call.1} parent=5 // pred_check
        %p6053 = pneg %p6052
      $region50: #{tpu_custom_call.1} parent=5 // pred_check_branch
        %6055 = sbr.rel (%p6053) target = $region52
      $region51: #{tpu_custom_call.1} parent=5 // pred_region
        %s6056 = ssub.s32 %s16, 2
        // Predicated region
        $region53: #{tpu_custom_call.1} parent=51 // pred_check
          %p6057 = pneg %p113
        $region54: #{tpu_custom_call.1} parent=51 // pred_check_branch
          %6059 = sbr.rel (%p6057) target = $region56
        $region55: #{tpu_custom_call.1} parent=51 // pred_region
          %s6060 = sand.u32 %s98, 1
          %s6061 = scalar_lea.sflag [#allocation4], %s6060
          %s6062 = sand.u32 %s98, 1
          %s6063 = smul.addr %s6062, 968
          %s6064 = scalar_lea.vmem [#allocation8], %s6063
          %6065 = dma.done %s6061, 15488
        $region56: #{tpu_custom_call.1} parent=51 // pred_fallthru
          _
      $region52: #{tpu_custom_call.1} parent=5 // pred_fallthru
        _
    $region6: #{tpu_custom_call.1} parent=1 // loop_footer
      %s20 = sadd.s32 1, %s16
    $region7: #{tpu_custom_call.1} parent=1 // loop_footer_branch
      %15 = sbr.rel target = $region3
    $region8: #{tpu_custom_call.1} parent=1 // loop_exit
      _
    %6066 = vsyncpa [#allocation3], 1
    %s6067 = scalar_lea.sflag [#allocation3], 1
    %6068 = vsyncpa %s6067, 1
    %6069 = vsyncpa [#allocation6], 1
    %6070 = vsyncpa [#allocation4], 1
    %s6071 = scalar_lea.sflag [#allocation4], 1
    %6072 = vsyncpa %s6071, 1

</llo_original>
